<compile_context>
chip_gen: v7x
topology: tpu7x:2x2x1
jax: 0.10.0
libtpu: 0.0.40
codegen_flags: <defaults>
</compile_context>

<pallas_src>
import functools

import jax
import jax.numpy as jnp
from jax.experimental import pallas as pl
from jax.experimental.pallas import tpu as pltpu

EPS = 1e-5          # nn.BatchNorm2d default eps
NEG_SLOPE = 0.01    # F.leaky_relu default negative_slope


def _fs(shape):
    # one block == whole array (grid=(1,)), resident in VMEM
    return pl.BlockSpec(shape, lambda i: (0,) * len(shape))


# --------------------------- in-kernel helpers ----------------------------- #

def _bn_lrelu(y, g, beta):
    """Per-column BatchNorm (training batch stats, biased var, two-pass) + leaky_relu."""
    m = y.shape[0]
    mean = jnp.sum(y, axis=0, keepdims=True) * (1.0 / m)
    d = y - mean
    var = jnp.sum(d * d, axis=0, keepdims=True) * (1.0 / m)
    yn = d * (jax.lax.rsqrt(var + EPS) * g) + beta
    return jnp.where(yn >= 0, yn, NEG_SLOPE * yn)


def _bn_lrelu_grouped(blocks, c, g, beta, n_rows):
    """BatchNorm + leaky_relu for deconv outputs.

    Each block has 4*c columns laid out as (kernel-position, channel) with the
    channel fastest. Per-channel stats pool every row of every block and the 4
    kernel-position column groups. Two-pass variance; all math in f32.
    """
    total = 4.0 * n_rows
    colsum = None
    for y in blocks:
        s = jnp.sum(y, axis=0, keepdims=True)                  # (1, 4c)
        colsum = s if colsum is None else colsum + s
    s_c = (colsum[:, 0:c] + colsum[:, c:2 * c]
           + colsum[:, 2 * c:3 * c] + colsum[:, 3 * c:4 * c])   # (1, c)
    mean = s_c * (1.0 / total)
    mean_t = jnp.concatenate([mean] * 4, axis=1)                # (1, 4c)
    d_blocks = [y - mean_t for y in blocks]
    sqsum = None
    for d in d_blocks:
        s = jnp.sum(d * d, axis=0, keepdims=True)
        sqsum = s if sqsum is None else sqsum + s
    v_c = (sqsum[:, 0:c] + sqsum[:, c:2 * c]
           + sqsum[:, 2 * c:3 * c] + sqsum[:, 3 * c:4 * c]) * (1.0 / total)
    scale_t = jnp.concatenate([jax.lax.rsqrt(v_c + EPS) * g] * 4, axis=1)
    beta_t = jnp.concatenate([beta] * 4, axis=1)
    out = []
    for d in d_blocks:
        yn = d * scale_t + beta_t
        out.append(jnp.where(yn >= 0, yn, NEG_SLOPE * yn))
    return out


# ------------------------------- kernel ------------------------------------ #

def _fused_generator_kernel(x1_ref, w1_ref, g1_ref, bt1_ref,
                            w2_ref, g2_ref, bt2_ref,
                            w3_ref, g3_ref, bt3_ref,
                            w4_ref, g4_ref, bt4_ref,
                            w5_ref, g5_ref, bt5_ref,
                            w6_ref, b6_ref, o_ref, *, m3):
    """Whole generator. Row counts: conv1 out 16*m3, conv2 out 4*m3, conv3 out m3."""
    m2 = 4 * m3

    # ---------------- encoder ----------------
    # conv1: (16*m3, 4*C0) @ (4*C0, 64)   (pre-BN bias dropped: cancelled by BN)
    y1 = jnp.dot(x1_ref[...], w1_ref[...], preferred_element_type=jnp.float32)
    h1 = _bn_lrelu(y1, g1_ref[...], bt1_ref[...])                       # (16*m3, 64) f32

    # conv2: the 4 kernel positions are 4 contiguous row blocks of h1.
    w2 = w2_ref[...]
    y2 = jnp.dot(h1[0:m2, :].astype(jnp.bfloat16), w2[0:64, :],
                 preferred_element_type=jnp.float32)
    for q in range(1, 4):
        y2 = y2 + jnp.dot(h1[q * m2:(q + 1) * m2, :].astype(jnp.bfloat16),
                          w2[q * 64:(q + 1) * 64, :],
                          preferred_element_type=jnp.float32)
    h2 = _bn_lrelu(y2, g2_ref[...], bt2_ref[...])                       # (4*m3, 128) f32

    # conv3
    w3 = w3_ref[...]
    y3 = jnp.dot(h2[0:m3, :].astype(jnp.bfloat16), w3[0:128, :],
                 preferred_element_type=jnp.float32)
    for q in range(1, 4):
        y3 = y3 + jnp.dot(h2[q * m3:(q + 1) * m3, :].astype(jnp.bfloat16),
                          w3[q * 128:(q + 1) * 128, :],
                          preferred_element_type=jnp.float32)
    h3 = _bn_lrelu(y3, g3_ref[...], bt3_ref[...]).astype(jnp.bfloat16)  # (m3, 256) bf16

    # ---------------- decoder ----------------
    # deconv4: (m3, 256) @ (256, 512); columns = (kpos, channel), 128 channels.
    y4 = jnp.dot(h3, w4_ref[...], preferred_element_type=jnp.float32)
    h4 = _bn_lrelu_grouped([y4], 128, g4_ref[...], bt4_ref[...], m3)[0]  # (m3, 512) f32

    # deconv5: output row-block q4 = h4[:, q4*128:(q4+1)*128] @ (128, 256)
    w5 = w5_ref[...]
    y5_blocks = [jnp.dot(h4[:, q * 128:(q + 1) * 128].astype(jnp.bfloat16), w5,
                         preferred_element_type=jnp.float32) for q in range(4)]
    h5_blocks = _bn_lrelu_grouped(y5_blocks, 64, g5_ref[...], bt5_ref[...], m2)

    # deconv6 + bias + sigmoid, stored straight into the lane-dense (padded) output.
    w6 = w6_ref[...]
    b6 = b6_ref[...]
    for q5 in range(4):
        for q4 in range(4):
            xb = h5_blocks[q4][:, q5 * 64:(q5 + 1) * 64].astype(jnp.bfloat16)
            yb = jnp.dot(xb, w6, preferred_element_type=jnp.float32) + b6
            r0 = (q5 * 4 + q4) * m3
            o_ref[r0:r0 + m3, :] = jax.nn.sigmoid(yb)


# ----------------------------- wrapper -------------------------------------- #

def _prep_conv_w(w):
    # (Cout, Cin, 2, 2) -> (4*Cin, Cout), row = (kh*2+kw)*Cin + cin
    cout = w.shape[0]
    return w.transpose(2, 3, 1, 0).reshape(-1, cout).astype(jnp.bfloat16)


def _prep_deconv_w(w):
    # (Cin, Cout, 2, 2) -> (Cin, 4*Cout), col = (kh*2+kw)*Cout + cout
    cin = w.shape[0]
    return w.transpose(0, 2, 3, 1).reshape(cin, -1).astype(jnp.bfloat16)


def _row(v):
    return v.reshape(1, -1).astype(jnp.float32)


@jax.jit
def large_generator_forward(x, p):
    N, C0, H, W = x.shape
    assert H % 8 == 0 and W % 8 == 0
    H3, W3 = H // 8, W // 8
    m3 = N * H3 * W3
    m1 = 16 * m3

    # Input NCHW -> stage-1 patch matrix. Rows are in hierarchical (quadtree)
    # order: r = (kh2,kw2)*4*m3 + (kh3,kw3)*m3 + (n,h3,w3); columns (kh1,kw1,c).
    xr = x.reshape(N, C0, H3, 2, 2, 2, W3, 2, 2, 2)
    # dims: 0 n, 1 c, 2 h3, 3 kh3, 4 kh2, 5 kh1, 6 w3, 7 kw3, 8 kw2, 9 kw1
    x1 = xr.transpose(4, 8, 3, 7, 0, 2, 6, 5, 9, 1).reshape(m1, 4 * C0)
    x1 = x1.astype(jnp.bfloat16)

    w1 = _prep_conv_w(p["conv1_w"])
    w2 = _prep_conv_w(p["conv2_w"])
    w3 = _prep_conv_w(p["conv3_w"])
    w4 = _prep_deconv_w(p["deconv4_w"])
    w5 = _prep_deconv_w(p["deconv5_w"])
    w6 = _prep_deconv_w(p["deconv6_w"])                          # (64, 4*C0)
    npad = max(128, ((4 * C0 + 127) // 128) * 128)               # lane-dense output
    w6p = jnp.zeros((64, npad), jnp.bfloat16).at[:, :4 * C0].set(w6)
    b6p = jnp.zeros((1, npad), jnp.float32).at[0, :4 * C0].set(
        jnp.tile(p["deconv6_b"].astype(jnp.float32), 4))

    kernel = functools.partial(_fused_generator_kernel, m3=m3)
    out = pl.pallas_call(
        kernel,
        out_shape=jax.ShapeDtypeStruct((m1, npad), jnp.float32),
        grid=(1,),
        in_specs=[_fs((m1, 4 * C0)), _fs((4 * C0, 64)), _fs((1, 64)), _fs((1, 64)),
                  _fs((256, 128)), _fs((1, 128)), _fs((1, 128)),
                  _fs((512, 256)), _fs((1, 256)), _fs((1, 256)),
                  _fs((256, 512)), _fs((1, 128)), _fs((1, 128)),
                  _fs((128, 256)), _fs((1, 64)), _fs((1, 64)),
                  _fs((64, npad)), _fs((1, npad))],
        out_specs=_fs((m1, npad)),
        compiler_params=pltpu.CompilerParams(dimension_semantics=("arbitrary",)),
    )(x1, w1, _row(p["bn1_g"]), _row(p["bn1_b"]),
      w2, _row(p["bn2_g"]), _row(p["bn2_b"]),
      w3, _row(p["bn3_g"]), _row(p["bn3_b"]),
      w4, _row(p["bn4_g"]), _row(p["bn4_b"]),
      w5, _row(p["bn5_g"]), _row(p["bn5_b"]),
      w6p, b6p)

    # Output: rows (kh5,kw5,kh4,kw4,n,h3,w3), columns (kh6,kw6,c) -> NCHW.
    y = out[:, :4 * C0]
    yr = y.reshape(2, 2, 2, 2, N, H3, W3, 2, 2, C0)
    # dims: 0 kh5, 1 kw5, 2 kh4, 3 kw4, 4 n, 5 h3, 6 w3, 7 kh6, 8 kw6, 9 c
    return yr.transpose(4, 9, 5, 2, 0, 7, 6, 3, 1, 8).reshape(N, C0, H, W)


# ----------------------------- params / reference --------------------------- #

def init_params(key, in_ch):
    ks = jax.random.split(key, 12)

    def conv_w(k, cout, cin):
        return 0.1 * jax.random.normal(k, (cout, cin, 2, 2), jnp.float32)

    def deconv_w(k, cin, cout):
        return 0.1 * jax.random.normal(k, (cin, cout, 2, 2), jnp.float32)

    def bias(k, c):
        return 0.05 * jax.random.normal(k, (c,), jnp.float32)

    def bn(c):
        return jnp.ones((c,), jnp.float32), jnp.zeros((c,), jnp.float32)

    p = {}
    p["conv1_w"], p["conv1_b"] = conv_w(ks[0], 64, in_ch), bias(ks[1], 64)
    p["bn1_g"], p["bn1_b"] = bn(64)
    p["conv2_w"], p["conv2_b"] = conv_w(ks[2], 128, 64), bias(ks[3], 128)
    p["bn2_g"], p["bn2_b"] = bn(128)
    p["conv3_w"], p["conv3_b"] = conv_w(ks[4], 256, 128), bias(ks[5], 256)
    p["bn3_g"], p["bn3_b"] = bn(256)
    p["deconv4_w"], p["deconv4_b"] = deconv_w(ks[6], 256, 128), bias(ks[7], 128)
    p["bn4_g"], p["bn4_b"] = bn(128)
    p["deconv5_w"], p["deconv5_b"] = deconv_w(ks[8], 128, 64), bias(ks[9], 64)
    p["bn5_g"], p["bn5_b"] = bn(64)
    p["deconv6_w"], p["deconv6_b"] = deconv_w(ks[10], 64, in_ch), bias(ks[11], in_ch)
    return p


def _ref_forward(x, p):
    """Pure-JAX reference (im2col per stage, same bf16 matmul precision),
    including the pre-BN biases that the kernel drops (they cancel exactly)."""
    def conv_bn_lrelu(x, w, b, g, beta):
        N, Cin, H, W = x.shape
        Cout = w.shape[0]
        Ho, Wo = H // 2, W // 2
        patches = (x.reshape(N, Cin, Ho, 2, Wo, 2).transpose(0, 2, 4, 1, 3, 5)
                   .reshape(N * Ho * Wo, Cin * 4))
        w2 = w.reshape(Cout, Cin * 4).T
        y = jnp.dot(patches.astype(jnp.bfloat16), w2.astype(jnp.bfloat16),
                    preferred_element_type=jnp.float32) + b
        mean = y.mean(0)
        var = ((y - mean) ** 2).mean(0)
        yn = (y - mean) * jax.lax.rsqrt(var + EPS) * g + beta
        yn = jnp.where(yn >= 0, yn, NEG_SLOPE * yn)
        return yn.reshape(N, Ho, Wo, Cout).transpose(0, 3, 1, 2)

    def deconv(x, w, b):
        N, Cin, H, W = x.shape
        Cout = w.shape[1]
        xm = x.transpose(0, 2, 3, 1).reshape(N * H * W, Cin)
        w2 = w.transpose(0, 2, 3, 1).reshape(Cin, 4 * Cout)
        y = jnp.dot(xm.astype(jnp.bfloat16), w2.astype(jnp.bfloat16),
                    preferred_element_type=jnp.float32) + jnp.tile(b, 4)
        return y, (N, H, W, Cout)

    def assemble(y, dims):
        N, H, W, Cout = dims
        return (y.reshape(N, H, W, 2, 2, Cout).transpose(0, 5, 1, 3, 2, 4)
                .reshape(N, Cout, 2 * H, 2 * W))

    def deconv_bn_lrelu(x, w, b, g, beta):
        y, dims = deconv(x, w, b)
        Cout = dims[3]
        yv = y.reshape(-1, 4, Cout)
        mean = yv.mean((0, 1))
        var = ((yv - mean) ** 2).mean((0, 1))
        yn = (yv - mean) * jax.lax.rsqrt(var + EPS) * g + beta
        yn = jnp.where(yn >= 0, yn, NEG_SLOPE * yn)
        return assemble(yn.reshape(-1, 4 * Cout), dims)

    h = conv_bn_lrelu(x, p["conv1_w"], p["conv1_b"], p["bn1_g"], p["bn1_b"])
    h = conv_bn_lrelu(h, p["conv2_w"], p["conv2_b"], p["bn2_g"], p["bn2_b"])
    h = conv_bn_lrelu(h, p["conv3_w"], p["conv3_b"], p["bn3_g"], p["bn3_b"])
    h = deconv_bn_lrelu(h, p["deconv4_w"], p["deconv4_b"], p["bn4_g"], p["bn4_b"])
    h = deconv_bn_lrelu(h, p["deconv5_w"], p["deconv5_b"], p["bn5_g"], p["bn5_b"])
    y, dims = deconv(h, p["deconv6_w"], p["deconv6_b"])
    return assemble(jax.nn.sigmoid(y), dims)


if __name__ == "__main__":
    in_ch = 4
    kx, kp = jax.random.split(jax.random.PRNGKey(0))
    x = jax.random.normal(kx, (2, in_ch, 16, 16), jnp.float32)
    params = init_params(kp, in_ch)

    y = large_generator_forward(x, params)
    jax.block_until_ready(y)

    assert y.shape == (2, in_ch, 16, 16)
    assert bool(jnp.all(jnp.isfinite(y)))

    y_ref = _ref_forward(x, params)
    err = float(jnp.max(jnp.abs(y - y_ref)))
    assert err < 5e-3, f"mismatch vs reference: {err}"
    print("KERNEL_OK")
</pallas_src>

<mosaic_0001>
module attributes {stable_mosaic.version = 11 : i64} {
  func.func @_fused_generator_kernel(%arg0: i32, %arg1: memref<128x16xbf16, #tpu.memory_space<vmem>>, %arg2: memref<16x64xbf16, #tpu.memory_space<vmem>>, %arg3: memref<1x64xf32, #tpu.memory_space<vmem>>, %arg4: memref<1x64xf32, #tpu.memory_space<vmem>>, %arg5: memref<256x128xbf16, #tpu.memory_space<vmem>>, %arg6: memref<1x128xf32, #tpu.memory_space<vmem>>, %arg7: memref<1x128xf32, #tpu.memory_space<vmem>>, %arg8: memref<512x256xbf16, #tpu.memory_space<vmem>>, %arg9: memref<1x256xf32, #tpu.memory_space<vmem>>, %arg10: memref<1x256xf32, #tpu.memory_space<vmem>>, %arg11: memref<256x512xbf16, #tpu.memory_space<vmem>>, %arg12: memref<1x128xf32, #tpu.memory_space<vmem>>, %arg13: memref<1x128xf32, #tpu.memory_space<vmem>>, %arg14: memref<128x256xbf16, #tpu.memory_space<vmem>>, %arg15: memref<1x64xf32, #tpu.memory_space<vmem>>, %arg16: memref<1x64xf32, #tpu.memory_space<vmem>>, %arg17: memref<64x128xbf16, #tpu.memory_space<vmem>>, %arg18: memref<1x128xf32, #tpu.memory_space<vmem>>, %arg19: memref<128x128xf32, #tpu.memory_space<vmem>>) attributes {dimension_semantics = [#tpu.dimension_semantics<arbitrary>], iteration_bounds = array<i64: 1>, scalar_prefetch = 0 : i64, scratch_operands = 0 : i64, tpu.core_type = #tpu.core_type<tc>, window_params = [{pipeline_mode = #tpu.pipeline_mode<synchronous>, transform_indices = @transform_0, window_bounds = array<i64: 128, 16>}, {pipeline_mode = #tpu.pipeline_mode<synchronous>, transform_indices = @transform_1, window_bounds = array<i64: 16, 64>}, {pipeline_mode = #tpu.pipeline_mode<synchronous>, transform_indices = @transform_2, window_bounds = array<i64: 1, 64>}, {pipeline_mode = #tpu.pipeline_mode<synchronous>, transform_indices = @transform_3, window_bounds = array<i64: 1, 64>}, {pipeline_mode = #tpu.pipeline_mode<synchronous>, transform_indices = @transform_4, window_bounds = array<i64: 256, 128>}, {pipeline_mode = #tpu.pipeline_mode<synchronous>, transform_indices = @transform_5, window_bounds = array<i64: 1, 128>}, {pipeline_mode = #tpu.pipeline_mode<synchronous>, transform_indices = @transform_6, window_bounds = array<i64: 1, 128>}, {pipeline_mode = #tpu.pipeline_mode<synchronous>, transform_indices = @transform_7, window_bounds = array<i64: 512, 256>}, {pipeline_mode = #tpu.pipeline_mode<synchronous>, transform_indices = @transform_8, window_bounds = array<i64: 1, 256>}, {pipeline_mode = #tpu.pipeline_mode<synchronous>, transform_indices = @transform_9, window_bounds = array<i64: 1, 256>}, {pipeline_mode = #tpu.pipeline_mode<synchronous>, transform_indices = @transform_10, window_bounds = array<i64: 256, 512>}, {pipeline_mode = #tpu.pipeline_mode<synchronous>, transform_indices = @transform_11, window_bounds = array<i64: 1, 128>}, {pipeline_mode = #tpu.pipeline_mode<synchronous>, transform_indices = @transform_12, window_bounds = array<i64: 1, 128>}, {pipeline_mode = #tpu.pipeline_mode<synchronous>, transform_indices = @transform_13, window_bounds = array<i64: 128, 256>}, {pipeline_mode = #tpu.pipeline_mode<synchronous>, transform_indices = @transform_14, window_bounds = array<i64: 1, 64>}, {pipeline_mode = #tpu.pipeline_mode<synchronous>, transform_indices = @transform_15, window_bounds = array<i64: 1, 64>}, {pipeline_mode = #tpu.pipeline_mode<synchronous>, transform_indices = @transform_16, window_bounds = array<i64: 64, 128>}, {pipeline_mode = #tpu.pipeline_mode<synchronous>, transform_indices = @transform_17, window_bounds = array<i64: 1, 128>}, {pipeline_mode = #tpu.pipeline_mode<synchronous>, transform_indices = @transform_18, window_bounds = array<i64: 128, 128>}]} {
    %c0 = arith.constant 0 : index
    %c0_0 = arith.constant 0 : index
    %0 = vector.load %arg1[%c0, %c0_0] : memref<128x16xbf16, #tpu.memory_space<vmem>>, vector<128x16xbf16>
    %c0_1 = arith.constant 0 : index
    %c0_2 = arith.constant 0 : index
    %1 = vector.load %arg2[%c0_1, %c0_2] : memref<16x64xbf16, #tpu.memory_space<vmem>>, vector<16x64xbf16>
    %cst = arith.constant dense<0.000000e+00> : vector<128x64xf32>
    %2 = tpu.matmul %0, %1, %cst {dimension_numbers = #tpu.dot_dimension_numbers<[1], [0], [0], [1], [0, 0, 1, 1], [], []>} : vector<128x16xbf16>, vector<16x64xbf16>, vector<128x64xf32> -> vector<128x64xf32>
    %c0_3 = arith.constant 0 : index
    %c0_4 = arith.constant 0 : index
    %3 = vector.load %arg3[%c0_3, %c0_4] : memref<1x64xf32, #tpu.memory_space<vmem>>, vector<1x64xf32>
    %c0_5 = arith.constant 0 : index
    %c0_6 = arith.constant 0 : index
    %4 = vector.load %arg4[%c0_5, %c0_6] : memref<1x64xf32, #tpu.memory_space<vmem>>, vector<1x64xf32>
    %cst_7 = arith.constant dense<0.000000e+00> : vector<64xf32>
    %5 = vector.multi_reduction <add>, %2, %cst_7 [0] : vector<128x64xf32> to vector<64xf32>
    %6 = vector.shape_cast %5 : vector<64xf32> to vector<1x64xf32>
    %cst_8 = arith.constant 7.812500e-03 : f32
    %7 = vector.broadcast %cst_8 : f32 to vector<1x64xf32>
    %8 = arith.mulf %6, %7 : vector<1x64xf32>
    %9 = vector.broadcast %8 : vector<1x64xf32> to vector<128x64xf32>
    %10 = arith.subf %2, %9 : vector<128x64xf32>
    %11 = arith.mulf %10, %10 : vector<128x64xf32>
    %cst_9 = arith.constant dense<0.000000e+00> : vector<64xf32>
    %12 = vector.multi_reduction <add>, %11, %cst_9 [0] : vector<128x64xf32> to vector<64xf32>
    %13 = vector.shape_cast %12 : vector<64xf32> to vector<1x64xf32>
    %cst_10 = arith.constant 7.812500e-03 : f32
    %14 = vector.broadcast %cst_10 : f32 to vector<1x64xf32>
    %15 = arith.mulf %13, %14 : vector<1x64xf32>
    %cst_11 = arith.constant 9.99999974E-6 : f32
    %16 = vector.broadcast %cst_11 : f32 to vector<1x64xf32>
    %17 = arith.addf %15, %16 : vector<1x64xf32>
    %18 = math.rsqrt %17 : vector<1x64xf32>
    %19 = arith.mulf %18, %3 : vector<1x64xf32>
    %20 = vector.broadcast %19 : vector<1x64xf32> to vector<128x64xf32>
    %21 = arith.mulf %10, %20 : vector<128x64xf32>
    %22 = vector.broadcast %4 : vector<1x64xf32> to vector<128x64xf32>
    %23 = arith.addf %21, %22 : vector<128x64xf32>
    %cst_12 = arith.constant 0.000000e+00 : f32
    %24 = vector.broadcast %cst_12 : f32 to vector<128x64xf32>
    %25 = arith.cmpf oge, %23, %24 : vector<128x64xf32>
    %cst_13 = arith.constant 0.00999999977 : f32
    %26 = vector.broadcast %cst_13 : f32 to vector<128x64xf32>
    %27 = arith.mulf %26, %23 : vector<128x64xf32>
    %28 = arith.select %25, %23, %27 : vector<128x64xi1>, vector<128x64xf32>
    %c0_14 = arith.constant 0 : index
    %c0_15 = arith.constant 0 : index
    %29 = vector.load %arg5[%c0_14, %c0_15] : memref<256x128xbf16, #tpu.memory_space<vmem>>, vector<256x128xbf16>
    %30 = vector.extract_strided_slice %28 {offsets = [0, 0], sizes = [32, 64], strides = [1, 1]} : vector<128x64xf32> to vector<32x64xf32>
    %31 = arith.truncf %30 : vector<32x64xf32> to vector<32x64xbf16>
    %32 = vector.extract_strided_slice %29 {offsets = [0, 0], sizes = [64, 128], strides = [1, 1]} : vector<256x128xbf16> to vector<64x128xbf16>
    %cst_16 = arith.constant dense<0.000000e+00> : vector<32x128xf32>
    %33 = tpu.matmul %31, %32, %cst_16 {dimension_numbers = #tpu.dot_dimension_numbers<[1], [0], [0], [1], [0, 0, 1, 1], [], []>} : vector<32x64xbf16>, vector<64x128xbf16>, vector<32x128xf32> -> vector<32x128xf32>
    %34 = vector.extract_strided_slice %28 {offsets = [32, 0], sizes = [32, 64], strides = [1, 1]} : vector<128x64xf32> to vector<32x64xf32>
    %35 = arith.truncf %34 : vector<32x64xf32> to vector<32x64xbf16>
    %36 = vector.extract_strided_slice %29 {offsets = [64, 0], sizes = [64, 128], strides = [1, 1]} : vector<256x128xbf16> to vector<64x128xbf16>
    %cst_17 = arith.constant dense<0.000000e+00> : vector<32x128xf32>
    %37 = tpu.matmul %35, %36, %cst_17 {dimension_numbers = #tpu.dot_dimension_numbers<[1], [0], [0], [1], [0, 0, 1, 1], [], []>} : vector<32x64xbf16>, vector<64x128xbf16>, vector<32x128xf32> -> vector<32x128xf32>
    %38 = arith.addf %33, %37 : vector<32x128xf32>
    %39 = vector.extract_strided_slice %28 {offsets = [64, 0], sizes = [32, 64], strides = [1, 1]} : vector<128x64xf32> to vector<32x64xf32>
    %40 = arith.truncf %39 : vector<32x64xf32> to vector<32x64xbf16>
    %41 = vector.extract_strided_slice %29 {offsets = [128, 0], sizes = [64, 128], strides = [1, 1]} : vector<256x128xbf16> to vector<64x128xbf16>
    %cst_18 = arith.constant dense<0.000000e+00> : vector<32x128xf32>
    %42 = tpu.matmul %40, %41, %cst_18 {dimension_numbers = #tpu.dot_dimension_numbers<[1], [0], [0], [1], [0, 0, 1, 1], [], []>} : vector<32x64xbf16>, vector<64x128xbf16>, vector<32x128xf32> -> vector<32x128xf32>
    %43 = arith.addf %38, %42 : vector<32x128xf32>
    %44 = vector.extract_strided_slice %28 {offsets = [96, 0], sizes = [32, 64], strides = [1, 1]} : vector<128x64xf32> to vector<32x64xf32>
    %45 = arith.truncf %44 : vector<32x64xf32> to vector<32x64xbf16>
    %46 = vector.extract_strided_slice %29 {offsets = [192, 0], sizes = [64, 128], strides = [1, 1]} : vector<256x128xbf16> to vector<64x128xbf16>
    %cst_19 = arith.constant dense<0.000000e+00> : vector<32x128xf32>
    %47 = tpu.matmul %45, %46, %cst_19 {dimension_numbers = #tpu.dot_dimension_numbers<[1], [0], [0], [1], [0, 0, 1, 1], [], []>} : vector<32x64xbf16>, vector<64x128xbf16>, vector<32x128xf32> -> vector<32x128xf32>
    %48 = arith.addf %43, %47 : vector<32x128xf32>
    %c0_20 = arith.constant 0 : index
    %c0_21 = arith.constant 0 : index
    %49 = vector.load %arg6[%c0_20, %c0_21] : memref<1x128xf32, #tpu.memory_space<vmem>>, vector<1x128xf32>
    %c0_22 = arith.constant 0 : index
    %c0_23 = arith.constant 0 : index
    %50 = vector.load %arg7[%c0_22, %c0_23] : memref<1x128xf32, #tpu.memory_space<vmem>>, vector<1x128xf32>
    %cst_24 = arith.constant dense<0.000000e+00> : vector<128xf32>
    %51 = vector.multi_reduction <add>, %48, %cst_24 [0] : vector<32x128xf32> to vector<128xf32>
    %52 = vector.shape_cast %51 : vector<128xf32> to vector<1x128xf32>
    %cst_25 = arith.constant 3.125000e-02 : f32
    %53 = vector.broadcast %cst_25 : f32 to vector<1x128xf32>
    %54 = arith.mulf %52, %53 : vector<1x128xf32>
    %55 = vector.broadcast %54 : vector<1x128xf32> to vector<32x128xf32>
    %56 = arith.subf %48, %55 : vector<32x128xf32>
    %57 = arith.mulf %56, %56 : vector<32x128xf32>
    %cst_26 = arith.constant dense<0.000000e+00> : vector<128xf32>
    %58 = vector.multi_reduction <add>, %57, %cst_26 [0] : vector<32x128xf32> to vector<128xf32>
    %59 = vector.shape_cast %58 : vector<128xf32> to vector<1x128xf32>
    %cst_27 = arith.constant 3.125000e-02 : f32
    %60 = vector.broadcast %cst_27 : f32 to vector<1x128xf32>
    %61 = arith.mulf %59, %60 : vector<1x128xf32>
    %cst_28 = arith.constant 9.99999974E-6 : f32
    %62 = vector.broadcast %cst_28 : f32 to vector<1x128xf32>
    %63 = arith.addf %61, %62 : vector<1x128xf32>
    %64 = math.rsqrt %63 : vector<1x128xf32>
    %65 = arith.mulf %64, %49 : vector<1x128xf32>
    %66 = vector.broadcast %65 : vector<1x128xf32> to vector<32x128xf32>
    %67 = arith.mulf %56, %66 : vector<32x128xf32>
    %68 = vector.broadcast %50 : vector<1x128xf32> to vector<32x128xf32>
    %69 = arith.addf %67, %68 : vector<32x128xf32>
    %cst_29 = arith.constant 0.000000e+00 : f32
    %70 = vector.broadcast %cst_29 : f32 to vector<32x128xf32>
    %71 = arith.cmpf oge, %69, %70 : vector<32x128xf32>
    %cst_30 = arith.constant 0.00999999977 : f32
    %72 = vector.broadcast %cst_30 : f32 to vector<32x128xf32>
    %73 = arith.mulf %72, %69 : vector<32x128xf32>
    %74 = arith.select %71, %69, %73 : vector<32x128xi1>, vector<32x128xf32>
    %c0_31 = arith.constant 0 : index
    %c0_32 = arith.constant 0 : index
    %75 = vector.load %arg8[%c0_31, %c0_32] : memref<512x256xbf16, #tpu.memory_space<vmem>>, vector<512x256xbf16>
    %76 = vector.extract_strided_slice %74 {offsets = [0, 0], sizes = [8, 128], strides = [1, 1]} : vector<32x128xf32> to vector<8x128xf32>
    %77 = arith.truncf %76 : vector<8x128xf32> to vector<8x128xbf16>
    %78 = vector.extract_strided_slice %75 {offsets = [0, 0], sizes = [128, 256], strides = [1, 1]} : vector<512x256xbf16> to vector<128x256xbf16>
    %cst_33 = arith.constant dense<0.000000e+00> : vector<8x256xf32>
    %79 = tpu.matmul %77, %78, %cst_33 {dimension_numbers = #tpu.dot_dimension_numbers<[1], [0], [0], [1], [0, 0, 1, 1], [], []>} : vector<8x128xbf16>, vector<128x256xbf16>, vector<8x256xf32> -> vector<8x256xf32>
    %80 = vector.extract_strided_slice %74 {offsets = [8, 0], sizes = [8, 128], strides = [1, 1]} : vector<32x128xf32> to vector<8x128xf32>
    %81 = arith.truncf %80 : vector<8x128xf32> to vector<8x128xbf16>
    %82 = vector.extract_strided_slice %75 {offsets = [128, 0], sizes = [128, 256], strides = [1, 1]} : vector<512x256xbf16> to vector<128x256xbf16>
    %cst_34 = arith.constant dense<0.000000e+00> : vector<8x256xf32>
    %83 = tpu.matmul %81, %82, %cst_34 {dimension_numbers = #tpu.dot_dimension_numbers<[1], [0], [0], [1], [0, 0, 1, 1], [], []>} : vector<8x128xbf16>, vector<128x256xbf16>, vector<8x256xf32> -> vector<8x256xf32>
    %84 = arith.addf %79, %83 : vector<8x256xf32>
    %85 = vector.extract_strided_slice %74 {offsets = [16, 0], sizes = [8, 128], strides = [1, 1]} : vector<32x128xf32> to vector<8x128xf32>
    %86 = arith.truncf %85 : vector<8x128xf32> to vector<8x128xbf16>
    %87 = vector.extract_strided_slice %75 {offsets = [256, 0], sizes = [128, 256], strides = [1, 1]} : vector<512x256xbf16> to vector<128x256xbf16>
    %cst_35 = arith.constant dense<0.000000e+00> : vector<8x256xf32>
    %88 = tpu.matmul %86, %87, %cst_35 {dimension_numbers = #tpu.dot_dimension_numbers<[1], [0], [0], [1], [0, 0, 1, 1], [], []>} : vector<8x128xbf16>, vector<128x256xbf16>, vector<8x256xf32> -> vector<8x256xf32>
    %89 = arith.addf %84, %88 : vector<8x256xf32>
    %90 = vector.extract_strided_slice %74 {offsets = [24, 0], sizes = [8, 128], strides = [1, 1]} : vector<32x128xf32> to vector<8x128xf32>
    %91 = arith.truncf %90 : vector<8x128xf32> to vector<8x128xbf16>
    %92 = vector.extract_strided_slice %75 {offsets = [384, 0], sizes = [128, 256], strides = [1, 1]} : vector<512x256xbf16> to vector<128x256xbf16>
    %cst_36 = arith.constant dense<0.000000e+00> : vector<8x256xf32>
    %93 = tpu.matmul %91, %92, %cst_36 {dimension_numbers = #tpu.dot_dimension_numbers<[1], [0], [0], [1], [0, 0, 1, 1], [], []>} : vector<8x128xbf16>, vector<128x256xbf16>, vector<8x256xf32> -> vector<8x256xf32>
    %94 = arith.addf %89, %93 : vector<8x256xf32>
    %c0_37 = arith.constant 0 : index
    %c0_38 = arith.constant 0 : index
    %95 = vector.load %arg9[%c0_37, %c0_38] : memref<1x256xf32, #tpu.memory_space<vmem>>, vector<1x256xf32>
    %c0_39 = arith.constant 0 : index
    %c0_40 = arith.constant 0 : index
    %96 = vector.load %arg10[%c0_39, %c0_40] : memref<1x256xf32, #tpu.memory_space<vmem>>, vector<1x256xf32>
    %cst_41 = arith.constant dense<0.000000e+00> : vector<256xf32>
    %97 = vector.multi_reduction <add>, %94, %cst_41 [0] : vector<8x256xf32> to vector<256xf32>
    %98 = vector.shape_cast %97 : vector<256xf32> to vector<1x256xf32>
    %cst_42 = arith.constant 1.250000e-01 : f32
    %99 = vector.broadcast %cst_42 : f32 to vector<1x256xf32>
    %100 = arith.mulf %98, %99 : vector<1x256xf32>
    %101 = vector.broadcast %100 : vector<1x256xf32> to vector<8x256xf32>
    %102 = arith.subf %94, %101 : vector<8x256xf32>
    %103 = arith.mulf %102, %102 : vector<8x256xf32>
    %cst_43 = arith.constant dense<0.000000e+00> : vector<256xf32>
    %104 = vector.multi_reduction <add>, %103, %cst_43 [0] : vector<8x256xf32> to vector<256xf32>
    %105 = vector.shape_cast %104 : vector<256xf32> to vector<1x256xf32>
    %cst_44 = arith.constant 1.250000e-01 : f32
    %106 = vector.broadcast %cst_44 : f32 to vector<1x256xf32>
    %107 = arith.mulf %105, %106 : vector<1x256xf32>
    %cst_45 = arith.constant 9.99999974E-6 : f32
    %108 = vector.broadcast %cst_45 : f32 to vector<1x256xf32>
    %109 = arith.addf %107, %108 : vector<1x256xf32>
    %110 = math.rsqrt %109 : vector<1x256xf32>
    %111 = arith.mulf %110, %95 : vector<1x256xf32>
    %112 = vector.broadcast %111 : vector<1x256xf32> to vector<8x256xf32>
    %113 = arith.mulf %102, %112 : vector<8x256xf32>
    %114 = vector.broadcast %96 : vector<1x256xf32> to vector<8x256xf32>
    %115 = arith.addf %113, %114 : vector<8x256xf32>
    %cst_46 = arith.constant 0.000000e+00 : f32
    %116 = vector.broadcast %cst_46 : f32 to vector<8x256xf32>
    %117 = arith.cmpf oge, %115, %116 : vector<8x256xf32>
    %cst_47 = arith.constant 0.00999999977 : f32
    %118 = vector.broadcast %cst_47 : f32 to vector<8x256xf32>
    %119 = arith.mulf %118, %115 : vector<8x256xf32>
    %120 = arith.select %117, %115, %119 : vector<8x256xi1>, vector<8x256xf32>
    %121 = arith.truncf %120 : vector<8x256xf32> to vector<8x256xbf16>
    %c0_48 = arith.constant 0 : index
    %c0_49 = arith.constant 0 : index
    %122 = vector.load %arg11[%c0_48, %c0_49] : memref<256x512xbf16, #tpu.memory_space<vmem>>, vector<256x512xbf16>
    %cst_50 = arith.constant dense<0.000000e+00> : vector<8x512xf32>
    %123 = tpu.matmul %121, %122, %cst_50 {dimension_numbers = #tpu.dot_dimension_numbers<[1], [0], [0], [1], [0, 0, 1, 1], [], []>} : vector<8x256xbf16>, vector<256x512xbf16>, vector<8x512xf32> -> vector<8x512xf32>
    %c0_51 = arith.constant 0 : index
    %c0_52 = arith.constant 0 : index
    %124 = vector.load %arg12[%c0_51, %c0_52] : memref<1x128xf32, #tpu.memory_space<vmem>>, vector<1x128xf32>
    %c0_53 = arith.constant 0 : index
    %c0_54 = arith.constant 0 : index
    %125 = vector.load %arg13[%c0_53, %c0_54] : memref<1x128xf32, #tpu.memory_space<vmem>>, vector<1x128xf32>
    %cst_55 = arith.constant dense<0.000000e+00> : vector<512xf32>
    %126 = vector.multi_reduction <add>, %123, %cst_55 [0] : vector<8x512xf32> to vector<512xf32>
    %127 = vector.shape_cast %126 : vector<512xf32> to vector<1x512xf32>
    %128 = vector.extract_strided_slice %127 {offsets = [0, 0], sizes = [1, 128], strides = [1, 1]} : vector<1x512xf32> to vector<1x128xf32>
    %129 = vector.extract_strided_slice %127 {offsets = [0, 128], sizes = [1, 128], strides = [1, 1]} : vector<1x512xf32> to vector<1x128xf32>
    %130 = arith.addf %128, %129 : vector<1x128xf32>
    %131 = vector.extract_strided_slice %127 {offsets = [0, 256], sizes = [1, 128], strides = [1, 1]} : vector<1x512xf32> to vector<1x128xf32>
    %132 = arith.addf %130, %131 : vector<1x128xf32>
    %133 = vector.extract_strided_slice %127 {offsets = [0, 384], sizes = [1, 128], strides = [1, 1]} : vector<1x512xf32> to vector<1x128xf32>
    %134 = arith.addf %132, %133 : vector<1x128xf32>
    %cst_56 = arith.constant 3.125000e-02 : f32
    %135 = vector.broadcast %cst_56 : f32 to vector<1x128xf32>
    %136 = arith.mulf %134, %135 : vector<1x128xf32>
    %137 = tpu.concatenate %136, %136, %136, %136 in 1 : vector<1x128xf32>, vector<1x128xf32>, vector<1x128xf32>, vector<1x128xf32> -> vector<1x512xf32>
    %138 = vector.broadcast %137 : vector<1x512xf32> to vector<8x512xf32>
    %139 = arith.subf %123, %138 : vector<8x512xf32>
    %140 = arith.mulf %139, %139 : vector<8x512xf32>
    %cst_57 = arith.constant dense<0.000000e+00> : vector<512xf32>
    %141 = vector.multi_reduction <add>, %140, %cst_57 [0] : vector<8x512xf32> to vector<512xf32>
    %142 = vector.shape_cast %141 : vector<512xf32> to vector<1x512xf32>
    %143 = vector.extract_strided_slice %142 {offsets = [0, 0], sizes = [1, 128], strides = [1, 1]} : vector<1x512xf32> to vector<1x128xf32>
    %144 = vector.extract_strided_slice %142 {offsets = [0, 128], sizes = [1, 128], strides = [1, 1]} : vector<1x512xf32> to vector<1x128xf32>
    %145 = arith.addf %143, %144 : vector<1x128xf32>
    %146 = vector.extract_strided_slice %142 {offsets = [0, 256], sizes = [1, 128], strides = [1, 1]} : vector<1x512xf32> to vector<1x128xf32>
    %147 = arith.addf %145, %146 : vector<1x128xf32>
    %148 = vector.extract_strided_slice %142 {offsets = [0, 384], sizes = [1, 128], strides = [1, 1]} : vector<1x512xf32> to vector<1x128xf32>
    %149 = arith.addf %147, %148 : vector<1x128xf32>
    %cst_58 = arith.constant 3.125000e-02 : f32
    %150 = vector.broadcast %cst_58 : f32 to vector<1x128xf32>
    %151 = arith.mulf %149, %150 : vector<1x128xf32>
    %cst_59 = arith.constant 9.99999974E-6 : f32
    %152 = vector.broadcast %cst_59 : f32 to vector<1x128xf32>
    %153 = arith.addf %151, %152 : vector<1x128xf32>
    %154 = math.rsqrt %153 : vector<1x128xf32>
    %155 = arith.mulf %154, %124 : vector<1x128xf32>
    %156 = tpu.concatenate %155, %155, %155, %155 in 1 : vector<1x128xf32>, vector<1x128xf32>, vector<1x128xf32>, vector<1x128xf32> -> vector<1x512xf32>
    %157 = tpu.concatenate %125, %125, %125, %125 in 1 : vector<1x128xf32>, vector<1x128xf32>, vector<1x128xf32>, vector<1x128xf32> -> vector<1x512xf32>
    %158 = vector.broadcast %156 : vector<1x512xf32> to vector<8x512xf32>
    %159 = arith.mulf %139, %158 : vector<8x512xf32>
    %160 = vector.broadcast %157 : vector<1x512xf32> to vector<8x512xf32>
    %161 = arith.addf %159, %160 : vector<8x512xf32>
    %cst_60 = arith.constant 0.000000e+00 : f32
    %162 = vector.broadcast %cst_60 : f32 to vector<8x512xf32>
    %163 = arith.cmpf oge, %161, %162 : vector<8x512xf32>
    %cst_61 = arith.constant 0.00999999977 : f32
    %164 = vector.broadcast %cst_61 : f32 to vector<8x512xf32>
    %165 = arith.mulf %164, %161 : vector<8x512xf32>
    %166 = arith.select %163, %161, %165 : vector<8x512xi1>, vector<8x512xf32>
    %c0_62 = arith.constant 0 : index
    %c0_63 = arith.constant 0 : index
    %167 = vector.load %arg14[%c0_62, %c0_63] : memref<128x256xbf16, #tpu.memory_space<vmem>>, vector<128x256xbf16>
    %168 = vector.extract_strided_slice %166 {offsets = [0, 0], sizes = [8, 128], strides = [1, 1]} : vector<8x512xf32> to vector<8x128xf32>
    %169 = arith.truncf %168 : vector<8x128xf32> to vector<8x128xbf16>
    %cst_64 = arith.constant dense<0.000000e+00> : vector<8x256xf32>
    %170 = tpu.matmul %169, %167, %cst_64 {dimension_numbers = #tpu.dot_dimension_numbers<[1], [0], [0], [1], [0, 0, 1, 1], [], []>} : vector<8x128xbf16>, vector<128x256xbf16>, vector<8x256xf32> -> vector<8x256xf32>
    %171 = vector.extract_strided_slice %166 {offsets = [0, 128], sizes = [8, 128], strides = [1, 1]} : vector<8x512xf32> to vector<8x128xf32>
    %172 = arith.truncf %171 : vector<8x128xf32> to vector<8x128xbf16>
    %cst_65 = arith.constant dense<0.000000e+00> : vector<8x256xf32>
    %173 = tpu.matmul %172, %167, %cst_65 {dimension_numbers = #tpu.dot_dimension_numbers<[1], [0], [0], [1], [0, 0, 1, 1], [], []>} : vector<8x128xbf16>, vector<128x256xbf16>, vector<8x256xf32> -> vector<8x256xf32>
    %174 = vector.extract_strided_slice %166 {offsets = [0, 256], sizes = [8, 128], strides = [1, 1]} : vector<8x512xf32> to vector<8x128xf32>
    %175 = arith.truncf %174 : vector<8x128xf32> to vector<8x128xbf16>
    %cst_66 = arith.constant dense<0.000000e+00> : vector<8x256xf32>
    %176 = tpu.matmul %175, %167, %cst_66 {dimension_numbers = #tpu.dot_dimension_numbers<[1], [0], [0], [1], [0, 0, 1, 1], [], []>} : vector<8x128xbf16>, vector<128x256xbf16>, vector<8x256xf32> -> vector<8x256xf32>
    %177 = vector.extract_strided_slice %166 {offsets = [0, 384], sizes = [8, 128], strides = [1, 1]} : vector<8x512xf32> to vector<8x128xf32>
    %178 = arith.truncf %177 : vector<8x128xf32> to vector<8x128xbf16>
    %cst_67 = arith.constant dense<0.000000e+00> : vector<8x256xf32>
    %179 = tpu.matmul %178, %167, %cst_67 {dimension_numbers = #tpu.dot_dimension_numbers<[1], [0], [0], [1], [0, 0, 1, 1], [], []>} : vector<8x128xbf16>, vector<128x256xbf16>, vector<8x256xf32> -> vector<8x256xf32>
    %c0_68 = arith.constant 0 : index
    %c0_69 = arith.constant 0 : index
    %180 = vector.load %arg15[%c0_68, %c0_69] : memref<1x64xf32, #tpu.memory_space<vmem>>, vector<1x64xf32>
    %c0_70 = arith.constant 0 : index
    %c0_71 = arith.constant 0 : index
    %181 = vector.load %arg16[%c0_70, %c0_71] : memref<1x64xf32, #tpu.memory_space<vmem>>, vector<1x64xf32>
    %cst_72 = arith.constant dense<0.000000e+00> : vector<256xf32>
    %182 = vector.multi_reduction <add>, %170, %cst_72 [0] : vector<8x256xf32> to vector<256xf32>
    %183 = vector.shape_cast %182 : vector<256xf32> to vector<1x256xf32>
    %cst_73 = arith.constant dense<0.000000e+00> : vector<256xf32>
    %184 = vector.multi_reduction <add>, %173, %cst_73 [0] : vector<8x256xf32> to vector<256xf32>
    %185 = vector.shape_cast %184 : vector<256xf32> to vector<1x256xf32>
    %186 = arith.addf %183, %185 : vector<1x256xf32>
    %cst_74 = arith.constant dense<0.000000e+00> : vector<256xf32>
    %187 = vector.multi_reduction <add>, %176, %cst_74 [0] : vector<8x256xf32> to vector<256xf32>
    %188 = vector.shape_cast %187 : vector<256xf32> to vector<1x256xf32>
    %189 = arith.addf %186, %188 : vector<1x256xf32>
    %cst_75 = arith.constant dense<0.000000e+00> : vector<256xf32>
    %190 = vector.multi_reduction <add>, %179, %cst_75 [0] : vector<8x256xf32> to vector<256xf32>
    %191 = vector.shape_cast %190 : vector<256xf32> to vector<1x256xf32>
    %192 = arith.addf %189, %191 : vector<1x256xf32>
    %193 = vector.extract_strided_slice %192 {offsets = [0, 0], sizes = [1, 64], strides = [1, 1]} : vector<1x256xf32> to vector<1x64xf32>
    %194 = vector.extract_strided_slice %192 {offsets = [0, 64], sizes = [1, 64], strides = [1, 1]} : vector<1x256xf32> to vector<1x64xf32>
    %195 = arith.addf %193, %194 : vector<1x64xf32>
    %196 = vector.extract_strided_slice %192 {offsets = [0, 128], sizes = [1, 64], strides = [1, 1]} : vector<1x256xf32> to vector<1x64xf32>
    %197 = arith.addf %195, %196 : vector<1x64xf32>
    %198 = vector.extract_strided_slice %192 {offsets = [0, 192], sizes = [1, 64], strides = [1, 1]} : vector<1x256xf32> to vector<1x64xf32>
    %199 = arith.addf %197, %198 : vector<1x64xf32>
    %cst_76 = arith.constant 7.812500e-03 : f32
    %200 = vector.broadcast %cst_76 : f32 to vector<1x64xf32>
    %201 = arith.mulf %199, %200 : vector<1x64xf32>
    %202 = tpu.concatenate %201, %201, %201, %201 in 1 : vector<1x64xf32>, vector<1x64xf32>, vector<1x64xf32>, vector<1x64xf32> -> vector<1x256xf32>
    %203 = vector.broadcast %202 : vector<1x256xf32> to vector<8x256xf32>
    %204 = arith.subf %170, %203 : vector<8x256xf32>
    %205 = vector.broadcast %202 : vector<1x256xf32> to vector<8x256xf32>
    %206 = arith.subf %173, %205 : vector<8x256xf32>
    %207 = vector.broadcast %202 : vector<1x256xf32> to vector<8x256xf32>
    %208 = arith.subf %176, %207 : vector<8x256xf32>
    %209 = vector.broadcast %202 : vector<1x256xf32> to vector<8x256xf32>
    %210 = arith.subf %179, %209 : vector<8x256xf32>
    %211 = arith.mulf %204, %204 : vector<8x256xf32>
    %cst_77 = arith.constant dense<0.000000e+00> : vector<256xf32>
    %212 = vector.multi_reduction <add>, %211, %cst_77 [0] : vector<8x256xf32> to vector<256xf32>
    %213 = vector.shape_cast %212 : vector<256xf32> to vector<1x256xf32>
    %214 = arith.mulf %206, %206 : vector<8x256xf32>
    %cst_78 = arith.constant dense<0.000000e+00> : vector<256xf32>
    %215 = vector.multi_reduction <add>, %214, %cst_78 [0] : vector<8x256xf32> to vector<256xf32>
    %216 = vector.shape_cast %215 : vector<256xf32> to vector<1x256xf32>
    %217 = arith.addf %213, %216 : vector<1x256xf32>
    %218 = arith.mulf %208, %208 : vector<8x256xf32>
    %cst_79 = arith.constant dense<0.000000e+00> : vector<256xf32>
    %219 = vector.multi_reduction <add>, %218, %cst_79 [0] : vector<8x256xf32> to vector<256xf32>
    %220 = vector.shape_cast %219 : vector<256xf32> to vector<1x256xf32>
    %221 = arith.addf %217, %220 : vector<1x256xf32>
    %222 = arith.mulf %210, %210 : vector<8x256xf32>
    %cst_80 = arith.constant dense<0.000000e+00> : vector<256xf32>
    %223 = vector.multi_reduction <add>, %222, %cst_80 [0] : vector<8x256xf32> to vector<256xf32>
    %224 = vector.shape_cast %223 : vector<256xf32> to vector<1x256xf32>
    %225 = arith.addf %221, %224 : vector<1x256xf32>
    %226 = vector.extract_strided_slice %225 {offsets = [0, 0], sizes = [1, 64], strides = [1, 1]} : vector<1x256xf32> to vector<1x64xf32>
    %227 = vector.extract_strided_slice %225 {offsets = [0, 64], sizes = [1, 64], strides = [1, 1]} : vector<1x256xf32> to vector<1x64xf32>
    %228 = arith.addf %226, %227 : vector<1x64xf32>
    %229 = vector.extract_strided_slice %225 {offsets = [0, 128], sizes = [1, 64], strides = [1, 1]} : vector<1x256xf32> to vector<1x64xf32>
    %230 = arith.addf %228, %229 : vector<1x64xf32>
    %231 = vector.extract_strided_slice %225 {offsets = [0, 192], sizes = [1, 64], strides = [1, 1]} : vector<1x256xf32> to vector<1x64xf32>
    %232 = arith.addf %230, %231 : vector<1x64xf32>
    %cst_81 = arith.constant 7.812500e-03 : f32
    %233 = vector.broadcast %cst_81 : f32 to vector<1x64xf32>
    %234 = arith.mulf %232, %233 : vector<1x64xf32>
    %cst_82 = arith.constant 9.99999974E-6 : f32
    %235 = vector.broadcast %cst_82 : f32 to vector<1x64xf32>
    %236 = arith.addf %234, %235 : vector<1x64xf32>
    %237 = math.rsqrt %236 : vector<1x64xf32>
    %238 = arith.mulf %237, %180 : vector<1x64xf32>
    %239 = tpu.concatenate %238, %238, %238, %238 in 1 : vector<1x64xf32>, vector<1x64xf32>, vector<1x64xf32>, vector<1x64xf32> -> vector<1x256xf32>
    %240 = tpu.concatenate %181, %181, %181, %181 in 1 : vector<1x64xf32>, vector<1x64xf32>, vector<1x64xf32>, vector<1x64xf32> -> vector<1x256xf32>
    %241 = vector.broadcast %239 : vector<1x256xf32> to vector<8x256xf32>
    %242 = arith.mulf %204, %241 : vector<8x256xf32>
    %243 = vector.broadcast %240 : vector<1x256xf32> to vector<8x256xf32>
    %244 = arith.addf %242, %243 : vector<8x256xf32>
    %cst_83 = arith.constant 0.000000e+00 : f32
    %245 = vector.broadcast %cst_83 : f32 to vector<8x256xf32>
    %246 = arith.cmpf oge, %244, %245 : vector<8x256xf32>
    %cst_84 = arith.constant 0.00999999977 : f32
    %247 = vector.broadcast %cst_84 : f32 to vector<8x256xf32>
    %248 = arith.mulf %247, %244 : vector<8x256xf32>
    %249 = arith.select %246, %244, %248 : vector<8x256xi1>, vector<8x256xf32>
    %250 = vector.broadcast %239 : vector<1x256xf32> to vector<8x256xf32>
    %251 = arith.mulf %206, %250 : vector<8x256xf32>
    %252 = vector.broadcast %240 : vector<1x256xf32> to vector<8x256xf32>
    %253 = arith.addf %251, %252 : vector<8x256xf32>
    %cst_85 = arith.constant 0.000000e+00 : f32
    %254 = vector.broadcast %cst_85 : f32 to vector<8x256xf32>
    %255 = arith.cmpf oge, %253, %254 : vector<8x256xf32>
    %cst_86 = arith.constant 0.00999999977 : f32
    %256 = vector.broadcast %cst_86 : f32 to vector<8x256xf32>
    %257 = arith.mulf %256, %253 : vector<8x256xf32>
    %258 = arith.select %255, %253, %257 : vector<8x256xi1>, vector<8x256xf32>
    %259 = vector.broadcast %239 : vector<1x256xf32> to vector<8x256xf32>
    %260 = arith.mulf %208, %259 : vector<8x256xf32>
    %261 = vector.broadcast %240 : vector<1x256xf32> to vector<8x256xf32>
    %262 = arith.addf %260, %261 : vector<8x256xf32>
    %cst_87 = arith.constant 0.000000e+00 : f32
    %263 = vector.broadcast %cst_87 : f32 to vector<8x256xf32>
    %264 = arith.cmpf oge, %262, %263 : vector<8x256xf32>
    %cst_88 = arith.constant 0.00999999977 : f32
    %265 = vector.broadcast %cst_88 : f32 to vector<8x256xf32>
    %266 = arith.mulf %265, %262 : vector<8x256xf32>
    %267 = arith.select %264, %262, %266 : vector<8x256xi1>, vector<8x256xf32>
    %268 = vector.broadcast %239 : vector<1x256xf32> to vector<8x256xf32>
    %269 = arith.mulf %210, %268 : vector<8x256xf32>
    %270 = vector.broadcast %240 : vector<1x256xf32> to vector<8x256xf32>
    %271 = arith.addf %269, %270 : vector<8x256xf32>
    %cst_89 = arith.constant 0.000000e+00 : f32
    %272 = vector.broadcast %cst_89 : f32 to vector<8x256xf32>
    %273 = arith.cmpf oge, %271, %272 : vector<8x256xf32>
    %cst_90 = arith.constant 0.00999999977 : f32
    %274 = vector.broadcast %cst_90 : f32 to vector<8x256xf32>
    %275 = arith.mulf %274, %271 : vector<8x256xf32>
    %276 = arith.select %273, %271, %275 : vector<8x256xi1>, vector<8x256xf32>
    %c0_91 = arith.constant 0 : index
    %c0_92 = arith.constant 0 : index
    %277 = vector.load %arg17[%c0_91, %c0_92] : memref<64x128xbf16, #tpu.memory_space<vmem>>, vector<64x128xbf16>
    %c0_93 = arith.constant 0 : index
    %c0_94 = arith.constant 0 : index
    %278 = vector.load %arg18[%c0_93, %c0_94] : memref<1x128xf32, #tpu.memory_space<vmem>>, vector<1x128xf32>
    %279 = vector.extract_strided_slice %249 {offsets = [0, 0], sizes = [8, 64], strides = [1, 1]} : vector<8x256xf32> to vector<8x64xf32>
    %280 = arith.truncf %279 : vector<8x64xf32> to vector<8x64xbf16>
    %cst_95 = arith.constant dense<0.000000e+00> : vector<8x128xf32>
    %281 = tpu.matmul %280, %277, %cst_95 {dimension_numbers = #tpu.dot_dimension_numbers<[1], [0], [0], [1], [0, 0, 1, 1], [], []>} : vector<8x64xbf16>, vector<64x128xbf16>, vector<8x128xf32> -> vector<8x128xf32>
    %282 = vector.broadcast %278 : vector<1x128xf32> to vector<8x128xf32>
    %283 = arith.addf %281, %282 : vector<8x128xf32>
    %284 = arith.negf %283 : vector<8x128xf32>
    %285 = math.exp %284 : vector<8x128xf32>
    %cst_96 = arith.constant 1.000000e+00 : f32
    %286 = vector.broadcast %cst_96 : f32 to vector<8x128xf32>
    %287 = arith.addf %286, %285 : vector<8x128xf32>
    %288 = arith.divf %286, %287 : vector<8x128xf32>
    %c0_97 = arith.constant 0 : index
    %c0_98 = arith.constant 0 : index
    %289 = vector.load %arg19[%c0_97, %c0_98] : memref<128x128xf32, #tpu.memory_space<vmem>>, vector<8x128xf32>
    tpu.vector_store %arg19[%c0_97, %c0_98], %288 {strides = array<i32>} : memref<128x128xf32, #tpu.memory_space<vmem>>, vector<8x128xf32>,
    %290 = vector.extract_strided_slice %258 {offsets = [0, 0], sizes = [8, 64], strides = [1, 1]} : vector<8x256xf32> to vector<8x64xf32>
    %291 = arith.truncf %290 : vector<8x64xf32> to vector<8x64xbf16>
    %cst_99 = arith.constant dense<0.000000e+00> : vector<8x128xf32>
    %292 = tpu.matmul %291, %277, %cst_99 {dimension_numbers = #tpu.dot_dimension_numbers<[1], [0], [0], [1], [0, 0, 1, 1], [], []>} : vector<8x64xbf16>, vector<64x128xbf16>, vector<8x128xf32> -> vector<8x128xf32>
    %293 = vector.broadcast %278 : vector<1x128xf32> to vector<8x128xf32>
    %294 = arith.addf %292, %293 : vector<8x128xf32>
    %295 = arith.negf %294 : vector<8x128xf32>
    %296 = math.exp %295 : vector<8x128xf32>
    %cst_100 = arith.constant 1.000000e+00 : f32
    %297 = vector.broadcast %cst_100 : f32 to vector<8x128xf32>
    %298 = arith.addf %297, %296 : vector<8x128xf32>
    %299 = arith.divf %297, %298 : vector<8x128xf32>
    %c8 = arith.constant 8 : index
    %c0_101 = arith.constant 0 : index
    %300 = vector.load %arg19[%c8, %c0_101] : memref<128x128xf32, #tpu.memory_space<vmem>>, vector<8x128xf32>
    tpu.vector_store %arg19[%c8, %c0_101], %299 {strides = array<i32>} : memref<128x128xf32, #tpu.memory_space<vmem>>, vector<8x128xf32>,
    %301 = vector.extract_strided_slice %267 {offsets = [0, 0], sizes = [8, 64], strides = [1, 1]} : vector<8x256xf32> to vector<8x64xf32>
    %302 = arith.truncf %301 : vector<8x64xf32> to vector<8x64xbf16>
    %cst_102 = arith.constant dense<0.000000e+00> : vector<8x128xf32>
    %303 = tpu.matmul %302, %277, %cst_102 {dimension_numbers = #tpu.dot_dimension_numbers<[1], [0], [0], [1], [0, 0, 1, 1], [], []>} : vector<8x64xbf16>, vector<64x128xbf16>, vector<8x128xf32> -> vector<8x128xf32>
    %304 = vector.broadcast %278 : vector<1x128xf32> to vector<8x128xf32>
    %305 = arith.addf %303, %304 : vector<8x128xf32>
    %306 = arith.negf %305 : vector<8x128xf32>
    %307 = math.exp %306 : vector<8x128xf32>
    %cst_103 = arith.constant 1.000000e+00 : f32
    %308 = vector.broadcast %cst_103 : f32 to vector<8x128xf32>
    %309 = arith.addf %308, %307 : vector<8x128xf32>
    %310 = arith.divf %308, %309 : vector<8x128xf32>
    %c16 = arith.constant 16 : index
    %c0_104 = arith.constant 0 : index
    %311 = vector.load %arg19[%c16, %c0_104] : memref<128x128xf32, #tpu.memory_space<vmem>>, vector<8x128xf32>
    tpu.vector_store %arg19[%c16, %c0_104], %310 {strides = array<i32>} : memref<128x128xf32, #tpu.memory_space<vmem>>, vector<8x128xf32>,
    %312 = vector.extract_strided_slice %276 {offsets = [0, 0], sizes = [8, 64], strides = [1, 1]} : vector<8x256xf32> to vector<8x64xf32>
    %313 = arith.truncf %312 : vector<8x64xf32> to vector<8x64xbf16>
    %cst_105 = arith.constant dense<0.000000e+00> : vector<8x128xf32>
    %314 = tpu.matmul %313, %277, %cst_105 {dimension_numbers = #tpu.dot_dimension_numbers<[1], [0], [0], [1], [0, 0, 1, 1], [], []>} : vector<8x64xbf16>, vector<64x128xbf16>, vector<8x128xf32> -> vector<8x128xf32>
    %315 = vector.broadcast %278 : vector<1x128xf32> to vector<8x128xf32>
    %316 = arith.addf %314, %315 : vector<8x128xf32>
    %317 = arith.negf %316 : vector<8x128xf32>
    %318 = math.exp %317 : vector<8x128xf32>
    %cst_106 = arith.constant 1.000000e+00 : f32
    %319 = vector.broadcast %cst_106 : f32 to vector<8x128xf32>
    %320 = arith.addf %319, %318 : vector<8x128xf32>
    %321 = arith.divf %319, %320 : vector<8x128xf32>
    %c24 = arith.constant 24 : index
    %c0_107 = arith.constant 0 : index
    %322 = vector.load %arg19[%c24, %c0_107] : memref<128x128xf32, #tpu.memory_space<vmem>>, vector<8x128xf32>
    tpu.vector_store %arg19[%c24, %c0_107], %321 {strides = array<i32>} : memref<128x128xf32, #tpu.memory_space<vmem>>, vector<8x128xf32>,
    %323 = vector.extract_strided_slice %249 {offsets = [0, 64], sizes = [8, 64], strides = [1, 1]} : vector<8x256xf32> to vector<8x64xf32>
    %324 = arith.truncf %323 : vector<8x64xf32> to vector<8x64xbf16>
    %cst_108 = arith.constant dense<0.000000e+00> : vector<8x128xf32>
    %325 = tpu.matmul %324, %277, %cst_108 {dimension_numbers = #tpu.dot_dimension_numbers<[1], [0], [0], [1], [0, 0, 1, 1], [], []>} : vector<8x64xbf16>, vector<64x128xbf16>, vector<8x128xf32> -> vector<8x128xf32>
    %326 = vector.broadcast %278 : vector<1x128xf32> to vector<8x128xf32>
    %327 = arith.addf %325, %326 : vector<8x128xf32>
    %328 = arith.negf %327 : vector<8x128xf32>
    %329 = math.exp %328 : vector<8x128xf32>
    %cst_109 = arith.constant 1.000000e+00 : f32
    %330 = vector.broadcast %cst_109 : f32 to vector<8x128xf32>
    %331 = arith.addf %330, %329 : vector<8x128xf32>
    %332 = arith.divf %330, %331 : vector<8x128xf32>
    %c32 = arith.constant 32 : index
    %c0_110 = arith.constant 0 : index
    %333 = vector.load %arg19[%c32, %c0_110] : memref<128x128xf32, #tpu.memory_space<vmem>>, vector<8x128xf32>
    tpu.vector_store %arg19[%c32, %c0_110], %332 {strides = array<i32>} : memref<128x128xf32, #tpu.memory_space<vmem>>, vector<8x128xf32>,
    %334 = vector.extract_strided_slice %258 {offsets = [0, 64], sizes = [8, 64], strides = [1, 1]} : vector<8x256xf32> to vector<8x64xf32>
    %335 = arith.truncf %334 : vector<8x64xf32> to vector<8x64xbf16>
    %cst_111 = arith.constant dense<0.000000e+00> : vector<8x128xf32>
    %336 = tpu.matmul %335, %277, %cst_111 {dimension_numbers = #tpu.dot_dimension_numbers<[1], [0], [0], [1], [0, 0, 1, 1], [], []>} : vector<8x64xbf16>, vector<64x128xbf16>, vector<8x128xf32> -> vector<8x128xf32>
    %337 = vector.broadcast %278 : vector<1x128xf32> to vector<8x128xf32>
    %338 = arith.addf %336, %337 : vector<8x128xf32>
    %339 = arith.negf %338 : vector<8x128xf32>
    %340 = math.exp %339 : vector<8x128xf32>
    %cst_112 = arith.constant 1.000000e+00 : f32
    %341 = vector.broadcast %cst_112 : f32 to vector<8x128xf32>
    %342 = arith.addf %341, %340 : vector<8x128xf32>
    %343 = arith.divf %341, %342 : vector<8x128xf32>
    %c40 = arith.constant 40 : index
    %c0_113 = arith.constant 0 : index
    %344 = vector.load %arg19[%c40, %c0_113] : memref<128x128xf32, #tpu.memory_space<vmem>>, vector<8x128xf32>
    tpu.vector_store %arg19[%c40, %c0_113], %343 {strides = array<i32>} : memref<128x128xf32, #tpu.memory_space<vmem>>, vector<8x128xf32>,
    %345 = vector.extract_strided_slice %267 {offsets = [0, 64], sizes = [8, 64], strides = [1, 1]} : vector<8x256xf32> to vector<8x64xf32>
    %346 = arith.truncf %345 : vector<8x64xf32> to vector<8x64xbf16>
    %cst_114 = arith.constant dense<0.000000e+00> : vector<8x128xf32>
    %347 = tpu.matmul %346, %277, %cst_114 {dimension_numbers = #tpu.dot_dimension_numbers<[1], [0], [0], [1], [0, 0, 1, 1], [], []>} : vector<8x64xbf16>, vector<64x128xbf16>, vector<8x128xf32> -> vector<8x128xf32>
    %348 = vector.broadcast %278 : vector<1x128xf32> to vector<8x128xf32>
    %349 = arith.addf %347, %348 : vector<8x128xf32>
    %350 = arith.negf %349 : vector<8x128xf32>
    %351 = math.exp %350 : vector<8x128xf32>
    %cst_115 = arith.constant 1.000000e+00 : f32
    %352 = vector.broadcast %cst_115 : f32 to vector<8x128xf32>
    %353 = arith.addf %352, %351 : vector<8x128xf32>
    %354 = arith.divf %352, %353 : vector<8x128xf32>
    %c48 = arith.constant 48 : index
    %c0_116 = arith.constant 0 : index
    %355 = vector.load %arg19[%c48, %c0_116] : memref<128x128xf32, #tpu.memory_space<vmem>>, vector<8x128xf32>
    tpu.vector_store %arg19[%c48, %c0_116], %354 {strides = array<i32>} : memref<128x128xf32, #tpu.memory_space<vmem>>, vector<8x128xf32>,
    %356 = vector.extract_strided_slice %276 {offsets = [0, 64], sizes = [8, 64], strides = [1, 1]} : vector<8x256xf32> to vector<8x64xf32>
    %357 = arith.truncf %356 : vector<8x64xf32> to vector<8x64xbf16>
    %cst_117 = arith.constant dense<0.000000e+00> : vector<8x128xf32>
    %358 = tpu.matmul %357, %277, %cst_117 {dimension_numbers = #tpu.dot_dimension_numbers<[1], [0], [0], [1], [0, 0, 1, 1], [], []>} : vector<8x64xbf16>, vector<64x128xbf16>, vector<8x128xf32> -> vector<8x128xf32>
    %359 = vector.broadcast %278 : vector<1x128xf32> to vector<8x128xf32>
    %360 = arith.addf %358, %359 : vector<8x128xf32>
    %361 = arith.negf %360 : vector<8x128xf32>
    %362 = math.exp %361 : vector<8x128xf32>
    %cst_118 = arith.constant 1.000000e+00 : f32
    %363 = vector.broadcast %cst_118 : f32 to vector<8x128xf32>
    %364 = arith.addf %363, %362 : vector<8x128xf32>
    %365 = arith.divf %363, %364 : vector<8x128xf32>
    %c56 = arith.constant 56 : index
    %c0_119 = arith.constant 0 : index
    %366 = vector.load %arg19[%c56, %c0_119] : memref<128x128xf32, #tpu.memory_space<vmem>>, vector<8x128xf32>
    tpu.vector_store %arg19[%c56, %c0_119], %365 {strides = array<i32>} : memref<128x128xf32, #tpu.memory_space<vmem>>, vector<8x128xf32>,
    %367 = vector.extract_strided_slice %249 {offsets = [0, 128], sizes = [8, 64], strides = [1, 1]} : vector<8x256xf32> to vector<8x64xf32>
    %368 = arith.truncf %367 : vector<8x64xf32> to vector<8x64xbf16>
    %cst_120 = arith.constant dense<0.000000e+00> : vector<8x128xf32>
    %369 = tpu.matmul %368, %277, %cst_120 {dimension_numbers = #tpu.dot_dimension_numbers<[1], [0], [0], [1], [0, 0, 1, 1], [], []>} : vector<8x64xbf16>, vector<64x128xbf16>, vector<8x128xf32> -> vector<8x128xf32>
    %370 = vector.broadcast %278 : vector<1x128xf32> to vector<8x128xf32>
    %371 = arith.addf %369, %370 : vector<8x128xf32>
    %372 = arith.negf %371 : vector<8x128xf32>
    %373 = math.exp %372 : vector<8x128xf32>
    %cst_121 = arith.constant 1.000000e+00 : f32
    %374 = vector.broadcast %cst_121 : f32 to vector<8x128xf32>
    %375 = arith.addf %374, %373 : vector<8x128xf32>
    %376 = arith.divf %374, %375 : vector<8x128xf32>
    %c64 = arith.constant 64 : index
    %c0_122 = arith.constant 0 : index
    %377 = vector.load %arg19[%c64, %c0_122] : memref<128x128xf32, #tpu.memory_space<vmem>>, vector<8x128xf32>
    tpu.vector_store %arg19[%c64, %c0_122], %376 {strides = array<i32>} : memref<128x128xf32, #tpu.memory_space<vmem>>, vector<8x128xf32>,
    %378 = vector.extract_strided_slice %258 {offsets = [0, 128], sizes = [8, 64], strides = [1, 1]} : vector<8x256xf32> to vector<8x64xf32>
    %379 = arith.truncf %378 : vector<8x64xf32> to vector<8x64xbf16>
    %cst_123 = arith.constant dense<0.000000e+00> : vector<8x128xf32>
    %380 = tpu.matmul %379, %277, %cst_123 {dimension_numbers = #tpu.dot_dimension_numbers<[1], [0], [0], [1], [0, 0, 1, 1], [], []>} : vector<8x64xbf16>, vector<64x128xbf16>, vector<8x128xf32> -> vector<8x128xf32>
    %381 = vector.broadcast %278 : vector<1x128xf32> to vector<8x128xf32>
    %382 = arith.addf %380, %381 : vector<8x128xf32>
    %383 = arith.negf %382 : vector<8x128xf32>
    %384 = math.exp %383 : vector<8x128xf32>
    %cst_124 = arith.constant 1.000000e+00 : f32
    %385 = vector.broadcast %cst_124 : f32 to vector<8x128xf32>
    %386 = arith.addf %385, %384 : vector<8x128xf32>
    %387 = arith.divf %385, %386 : vector<8x128xf32>
    %c72 = arith.constant 72 : index
    %c0_125 = arith.constant 0 : index
    %388 = vector.load %arg19[%c72, %c0_125] : memref<128x128xf32, #tpu.memory_space<vmem>>, vector<8x128xf32>
    tpu.vector_store %arg19[%c72, %c0_125], %387 {strides = array<i32>} : memref<128x128xf32, #tpu.memory_space<vmem>>, vector<8x128xf32>,
    %389 = vector.extract_strided_slice %267 {offsets = [0, 128], sizes = [8, 64], strides = [1, 1]} : vector<8x256xf32> to vector<8x64xf32>
    %390 = arith.truncf %389 : vector<8x64xf32> to vector<8x64xbf16>
    %cst_126 = arith.constant dense<0.000000e+00> : vector<8x128xf32>
    %391 = tpu.matmul %390, %277, %cst_126 {dimension_numbers = #tpu.dot_dimension_numbers<[1], [0], [0], [1], [0, 0, 1, 1], [], []>} : vector<8x64xbf16>, vector<64x128xbf16>, vector<8x128xf32> -> vector<8x128xf32>
    %392 = vector.broadcast %278 : vector<1x128xf32> to vector<8x128xf32>
    %393 = arith.addf %391, %392 : vector<8x128xf32>
    %394 = arith.negf %393 : vector<8x128xf32>
    %395 = math.exp %394 : vector<8x128xf32>
    %cst_127 = arith.constant 1.000000e+00 : f32
    %396 = vector.broadcast %cst_127 : f32 to vector<8x128xf32>
    %397 = arith.addf %396, %395 : vector<8x128xf32>
    %398 = arith.divf %396, %397 : vector<8x128xf32>
    %c80 = arith.constant 80 : index
    %c0_128 = arith.constant 0 : index
    %399 = vector.load %arg19[%c80, %c0_128] : memref<128x128xf32, #tpu.memory_space<vmem>>, vector<8x128xf32>
    tpu.vector_store %arg19[%c80, %c0_128], %398 {strides = array<i32>} : memref<128x128xf32, #tpu.memory_space<vmem>>, vector<8x128xf32>,
    %400 = vector.extract_strided_slice %276 {offsets = [0, 128], sizes = [8, 64], strides = [1, 1]} : vector<8x256xf32> to vector<8x64xf32>
    %401 = arith.truncf %400 : vector<8x64xf32> to vector<8x64xbf16>
    %cst_129 = arith.constant dense<0.000000e+00> : vector<8x128xf32>
    %402 = tpu.matmul %401, %277, %cst_129 {dimension_numbers = #tpu.dot_dimension_numbers<[1], [0], [0], [1], [0, 0, 1, 1], [], []>} : vector<8x64xbf16>, vector<64x128xbf16>, vector<8x128xf32> -> vector<8x128xf32>
    %403 = vector.broadcast %278 : vector<1x128xf32> to vector<8x128xf32>
    %404 = arith.addf %402, %403 : vector<8x128xf32>
    %405 = arith.negf %404 : vector<8x128xf32>
    %406 = math.exp %405 : vector<8x128xf32>
    %cst_130 = arith.constant 1.000000e+00 : f32
    %407 = vector.broadcast %cst_130 : f32 to vector<8x128xf32>
    %408 = arith.addf %407, %406 : vector<8x128xf32>
    %409 = arith.divf %407, %408 : vector<8x128xf32>
    %c88 = arith.constant 88 : index
    %c0_131 = arith.constant 0 : index
    %410 = vector.load %arg19[%c88, %c0_131] : memref<128x128xf32, #tpu.memory_space<vmem>>, vector<8x128xf32>
    tpu.vector_store %arg19[%c88, %c0_131], %409 {strides = array<i32>} : memref<128x128xf32, #tpu.memory_space<vmem>>, vector<8x128xf32>,
    %411 = vector.extract_strided_slice %249 {offsets = [0, 192], sizes = [8, 64], strides = [1, 1]} : vector<8x256xf32> to vector<8x64xf32>
    %412 = arith.truncf %411 : vector<8x64xf32> to vector<8x64xbf16>
    %cst_132 = arith.constant dense<0.000000e+00> : vector<8x128xf32>
    %413 = tpu.matmul %412, %277, %cst_132 {dimension_numbers = #tpu.dot_dimension_numbers<[1], [0], [0], [1], [0, 0, 1, 1], [], []>} : vector<8x64xbf16>, vector<64x128xbf16>, vector<8x128xf32> -> vector<8x128xf32>
    %414 = vector.broadcast %278 : vector<1x128xf32> to vector<8x128xf32>
    %415 = arith.addf %413, %414 : vector<8x128xf32>
    %416 = arith.negf %415 : vector<8x128xf32>
    %417 = math.exp %416 : vector<8x128xf32>
    %cst_133 = arith.constant 1.000000e+00 : f32
    %418 = vector.broadcast %cst_133 : f32 to vector<8x128xf32>
    %419 = arith.addf %418, %417 : vector<8x128xf32>
    %420 = arith.divf %418, %419 : vector<8x128xf32>
    %c96 = arith.constant 96 : index
    %c0_134 = arith.constant 0 : index
    %421 = vector.load %arg19[%c96, %c0_134] : memref<128x128xf32, #tpu.memory_space<vmem>>, vector<8x128xf32>
    tpu.vector_store %arg19[%c96, %c0_134], %420 {strides = array<i32>} : memref<128x128xf32, #tpu.memory_space<vmem>>, vector<8x128xf32>,
    %422 = vector.extract_strided_slice %258 {offsets = [0, 192], sizes = [8, 64], strides = [1, 1]} : vector<8x256xf32> to vector<8x64xf32>
    %423 = arith.truncf %422 : vector<8x64xf32> to vector<8x64xbf16>
    %cst_135 = arith.constant dense<0.000000e+00> : vector<8x128xf32>
    %424 = tpu.matmul %423, %277, %cst_135 {dimension_numbers = #tpu.dot_dimension_numbers<[1], [0], [0], [1], [0, 0, 1, 1], [], []>} : vector<8x64xbf16>, vector<64x128xbf16>, vector<8x128xf32> -> vector<8x128xf32>
    %425 = vector.broadcast %278 : vector<1x128xf32> to vector<8x128xf32>
    %426 = arith.addf %424, %425 : vector<8x128xf32>
    %427 = arith.negf %426 : vector<8x128xf32>
    %428 = math.exp %427 : vector<8x128xf32>
    %cst_136 = arith.constant 1.000000e+00 : f32
    %429 = vector.broadcast %cst_136 : f32 to vector<8x128xf32>
    %430 = arith.addf %429, %428 : vector<8x128xf32>
    %431 = arith.divf %429, %430 : vector<8x128xf32>
    %c104 = arith.constant 104 : index
    %c0_137 = arith.constant 0 : index
    %432 = vector.load %arg19[%c104, %c0_137] : memref<128x128xf32, #tpu.memory_space<vmem>>, vector<8x128xf32>
    tpu.vector_store %arg19[%c104, %c0_137], %431 {strides = array<i32>} : memref<128x128xf32, #tpu.memory_space<vmem>>, vector<8x128xf32>,
    %433 = vector.extract_strided_slice %267 {offsets = [0, 192], sizes = [8, 64], strides = [1, 1]} : vector<8x256xf32> to vector<8x64xf32>
    %434 = arith.truncf %433 : vector<8x64xf32> to vector<8x64xbf16>
    %cst_138 = arith.constant dense<0.000000e+00> : vector<8x128xf32>
    %435 = tpu.matmul %434, %277, %cst_138 {dimension_numbers = #tpu.dot_dimension_numbers<[1], [0], [0], [1], [0, 0, 1, 1], [], []>} : vector<8x64xbf16>, vector<64x128xbf16>, vector<8x128xf32> -> vector<8x128xf32>
    %436 = vector.broadcast %278 : vector<1x128xf32> to vector<8x128xf32>
    %437 = arith.addf %435, %436 : vector<8x128xf32>
    %438 = arith.negf %437 : vector<8x128xf32>
    %439 = math.exp %438 : vector<8x128xf32>
    %cst_139 = arith.constant 1.000000e+00 : f32
    %440 = vector.broadcast %cst_139 : f32 to vector<8x128xf32>
    %441 = arith.addf %440, %439 : vector<8x128xf32>
    %442 = arith.divf %440, %441 : vector<8x128xf32>
    %c112 = arith.constant 112 : index
    %c0_140 = arith.constant 0 : index
    %443 = vector.load %arg19[%c112, %c0_140] : memref<128x128xf32, #tpu.memory_space<vmem>>, vector<8x128xf32>
    tpu.vector_store %arg19[%c112, %c0_140], %442 {strides = array<i32>} : memref<128x128xf32, #tpu.memory_space<vmem>>, vector<8x128xf32>,
    %444 = vector.extract_strided_slice %276 {offsets = [0, 192], sizes = [8, 64], strides = [1, 1]} : vector<8x256xf32> to vector<8x64xf32>
    %445 = arith.truncf %444 : vector<8x64xf32> to vector<8x64xbf16>
    %cst_141 = arith.constant dense<0.000000e+00> : vector<8x128xf32>
    %446 = tpu.matmul %445, %277, %cst_141 {dimension_numbers = #tpu.dot_dimension_numbers<[1], [0], [0], [1], [0, 0, 1, 1], [], []>} : vector<8x64xbf16>, vector<64x128xbf16>, vector<8x128xf32> -> vector<8x128xf32>
    %447 = vector.broadcast %278 : vector<1x128xf32> to vector<8x128xf32>
    %448 = arith.addf %446, %447 : vector<8x128xf32>
    %449 = arith.negf %448 : vector<8x128xf32>
    %450 = math.exp %449 : vector<8x128xf32>
    %cst_142 = arith.constant 1.000000e+00 : f32
    %451 = vector.broadcast %cst_142 : f32 to vector<8x128xf32>
    %452 = arith.addf %451, %450 : vector<8x128xf32>
    %453 = arith.divf %451, %452 : vector<8x128xf32>
    %c120 = arith.constant 120 : index
    %c0_143 = arith.constant 0 : index
    %454 = vector.load %arg19[%c120, %c0_143] : memref<128x128xf32, #tpu.memory_space<vmem>>, vector<8x128xf32>
    tpu.vector_store %arg19[%c120, %c0_143], %453 {strides = array<i32>} : memref<128x128xf32, #tpu.memory_space<vmem>>, vector<8x128xf32>,
    return
  }
  func.func @transform_0(%arg0: i32) -> (i32, i32) {
    %c0_i32 = arith.constant 0 : i32
    %c0_i32_0 = arith.constant 0 : i32
    %c0_i32_1 = arith.constant 0 : i32
    return %c0_i32, %c0_i32_0 : i32, i32
  }
  func.func @transform_1(%arg0: i32) -> (i32, i32) {
    %c0_i32 = arith.constant 0 : i32
    %c0_i32_0 = arith.constant 0 : i32
    %c0_i32_1 = arith.constant 0 : i32
    return %c0_i32, %c0_i32_0 : i32, i32
  }
  func.func @transform_2(%arg0: i32) -> (i32, i32) {
    %c0_i32 = arith.constant 0 : i32
    %c0_i32_0 = arith.constant 0 : i32
    %c0_i32_1 = arith.constant 0 : i32
    return %c0_i32, %c0_i32_0 : i32, i32
  }
  func.func @transform_3(%arg0: i32) -> (i32, i32) {
    %c0_i32 = arith.constant 0 : i32
    %c0_i32_0 = arith.constant 0 : i32
    %c0_i32_1 = arith.constant 0 : i32
    return %c0_i32, %c0_i32_0 : i32, i32
  }
  func.func @transform_4(%arg0: i32) -> (i32, i32) {
    %c0_i32 = arith.constant 0 : i32
    %c0_i32_0 = arith.constant 0 : i32
    %c0_i32_1 = arith.constant 0 : i32
    return %c0_i32, %c0_i32_0 : i32, i32
  }
  func.func @transform_5(%arg0: i32) -> (i32, i32) {
    %c0_i32 = arith.constant 0 : i32
    %c0_i32_0 = arith.constant 0 : i32
    %c0_i32_1 = arith.constant 0 : i32
    return %c0_i32, %c0_i32_0 : i32, i32
  }
  func.func @transform_6(%arg0: i32) -> (i32, i32) {
    %c0_i32 = arith.constant 0 : i32
    %c0_i32_0 = arith.constant 0 : i32
    %c0_i32_1 = arith.constant 0 : i32
    return %c0_i32, %c0_i32_0 : i32, i32
  }
  func.func @transform_7(%arg0: i32) -> (i32, i32) {
    %c0_i32 = arith.constant 0 : i32
    %c0_i32_0 = arith.constant 0 : i32
    %c0_i32_1 = arith.constant 0 : i32
    return %c0_i32, %c0_i32_0 : i32, i32
  }
  func.func @transform_8(%arg0: i32) -> (i32, i32) {
    %c0_i32 = arith.constant 0 : i32
    %c0_i32_0 = arith.constant 0 : i32
    %c0_i32_1 = arith.constant 0 : i32
    return %c0_i32, %c0_i32_0 : i32, i32
  }
  func.func @transform_9(%arg0: i32) -> (i32, i32) {
    %c0_i32 = arith.constant 0 : i32
    %c0_i32_0 = arith.constant 0 : i32
    %c0_i32_1 = arith.constant 0 : i32
    return %c0_i32, %c0_i32_0 : i32, i32
  }
  func.func @transform_10(%arg0: i32) -> (i32, i32) {
    %c0_i32 = arith.constant 0 : i32
    %c0_i32_0 = arith.constant 0 : i32
    %c0_i32_1 = arith.constant 0 : i32
    return %c0_i32, %c0_i32_0 : i32, i32
  }
  func.func @transform_11(%arg0: i32) -> (i32, i32) {
    %c0_i32 = arith.constant 0 : i32
    %c0_i32_0 = arith.constant 0 : i32
    %c0_i32_1 = arith.constant 0 : i32
    return %c0_i32, %c0_i32_0 : i32, i32
  }
  func.func @transform_12(%arg0: i32) -> (i32, i32) {
    %c0_i32 = arith.constant 0 : i32
    %c0_i32_0 = arith.constant 0 : i32
    %c0_i32_1 = arith.constant 0 : i32
    return %c0_i32, %c0_i32_0 : i32, i32
  }
  func.func @transform_13(%arg0: i32) -> (i32, i32) {
    %c0_i32 = arith.constant 0 : i32
    %c0_i32_0 = arith.constant 0 : i32
    %c0_i32_1 = arith.constant 0 : i32
    return %c0_i32, %c0_i32_0 : i32, i32
  }
  func.func @transform_14(%arg0: i32) -> (i32, i32) {
    %c0_i32 = arith.constant 0 : i32
    %c0_i32_0 = arith.constant 0 : i32
    %c0_i32_1 = arith.constant 0 : i32
    return %c0_i32, %c0_i32_0 : i32, i32
  }
  func.func @transform_15(%arg0: i32) -> (i32, i32) {
    %c0_i32 = arith.constant 0 : i32
    %c0_i32_0 = arith.constant 0 : i32
    %c0_i32_1 = arith.constant 0 : i32
    return %c0_i32, %c0_i32_0 : i32, i32
  }
  func.func @transform_16(%arg0: i32) -> (i32, i32) {
    %c0_i32 = arith.constant 0 : i32
    %c0_i32_0 = arith.constant 0 : i32
    %c0_i32_1 = arith.constant 0 : i32
    return %c0_i32, %c0_i32_0 : i32, i32
  }
  func.func @transform_17(%arg0: i32) -> (i32, i32) {
    %c0_i32 = arith.constant 0 : i32
    %c0_i32_0 = arith.constant 0 : i32
    %c0_i32_1 = arith.constant 0 : i32
    return %c0_i32, %c0_i32_0 : i32, i32
  }
  func.func @transform_18(%arg0: i32) -> (i32, i32) {
    %c0_i32 = arith.constant 0 : i32
    %c0_i32_0 = arith.constant 0 : i32
    %c0_i32_1 = arith.constant 0 : i32
    return %c0_i32, %c0_i32_0 : i32, i32
  }
}

</mosaic_0001>

<llo_original>
// kernel: large_generator_forward.1
$region0: #{large_generator_forward.1}
  #allocation0 [shape = 'u32[]', space=smem, size = 0x4, offset = 0x4, fixed_abs, tag = 'smem constant byte address 0x4 - core index']
  #allocation1 [shape = 'u32[144,128]{1,0:T(1,128)}', space=vmem, size = 0x12000, scoped, tag = 'internal scratch']
  %s0 = inlined_call_operand.vmem [shape: bf16[128,16], index: 0, kind: input, shape index: {}]
  %s1 = inlined_call_operand.vmem [shape: bf16[16,64], index: 1, kind: input, shape index: {}]
  %s2 = inlined_call_operand.vmem [shape: f32[1,64], index: 2, kind: input, shape index: {}]
  %s3 = inlined_call_operand.vmem [shape: f32[1,64], index: 3, kind: input, shape index: {}]
  %s4 = inlined_call_operand.vmem [shape: bf16[256,128], index: 4, kind: input, shape index: {}]
  %s5 = inlined_call_operand.vmem [shape: f32[1,128], index: 5, kind: input, shape index: {}]
  %s6 = inlined_call_operand.vmem [shape: f32[1,128], index: 6, kind: input, shape index: {}]
  %s7 = inlined_call_operand.vmem [shape: bf16[512,256], index: 7, kind: input, shape index: {}]
  %s8 = inlined_call_operand.vmem [shape: f32[1,256], index: 8, kind: input, shape index: {}]
  %s9 = inlined_call_operand.vmem [shape: f32[1,256], index: 9, kind: input, shape index: {}]
  %s10 = inlined_call_operand.vmem [shape: bf16[256,512], index: 10, kind: input, shape index: {}]
  %s11 = inlined_call_operand.vmem [shape: f32[1,128], index: 11, kind: input, shape index: {}]
  %s12 = inlined_call_operand.vmem [shape: f32[1,128], index: 12, kind: input, shape index: {}]
  %s13 = inlined_call_operand.vmem [shape: bf16[128,256], index: 13, kind: input, shape index: {}]
  %s14 = inlined_call_operand.vmem [shape: f32[1,64], index: 14, kind: input, shape index: {}]
  %s15 = inlined_call_operand.vmem [shape: f32[1,64], index: 15, kind: input, shape index: {}]
  %s16 = inlined_call_operand.vmem [shape: bf16[64,128], index: 16, kind: input, shape index: {}]
  %s17 = inlined_call_operand.vmem [shape: f32[1,128], index: 17, kind: input, shape index: {}]
  %s18 = inlined_call_operand.vmem [shape: f32[128,128], index: 18, kind: output, shape index: {}]
  %s19 = sld [smem:[#allocation0]]
  $region82: #{large_generator_forward.1} parent=0
    _
  %s21 = ssub.s32 1, %s19
  %s22 = scalar_select 0, %s21, %s19
  // Predicated region
  $region2: #{large_generator_forward.1} parent=0 // pred_check
    _
  $region3: #{large_generator_forward.1} parent=0 // pred_check_branch
    %24 = sbr.rel (0) target = $region5
  $region4: #{large_generator_forward.1} parent=0 // pred_region
    _
  $region5: #{large_generator_forward.1} parent=0 // pred_fallthru
    _
  // Predicated region
  $region6: #{large_generator_forward.1} parent=0 // pred_check
    _
  $region7: #{large_generator_forward.1} parent=0 // pred_check_branch
    %26 = sbr.rel (0) target = $region9
  $region8: #{large_generator_forward.1} parent=0 // pred_region
    _
  $region9: #{large_generator_forward.1} parent=0 // pred_fallthru
    _
  // Predicated region
  $region10: #{large_generator_forward.1} parent=0 // pred_check
    _
  $region11: #{large_generator_forward.1} parent=0 // pred_check_branch
    %28 = sbr.rel (0) target = $region13
  $region12: #{large_generator_forward.1} parent=0 // pred_region
    _
  $region13: #{large_generator_forward.1} parent=0 // pred_fallthru
    _
  // Predicated region
  $region14: #{large_generator_forward.1} parent=0 // pred_check
    _
  $region15: #{large_generator_forward.1} parent=0 // pred_check_branch
    %30 = sbr.rel (0) target = $region17
  $region16: #{large_generator_forward.1} parent=0 // pred_region
    _
  $region17: #{large_generator_forward.1} parent=0 // pred_fallthru
    _
  // Predicated region
  $region18: #{large_generator_forward.1} parent=0 // pred_check
    _
  $region19: #{large_generator_forward.1} parent=0 // pred_check_branch
    %32 = sbr.rel (0) target = $region21
  $region20: #{large_generator_forward.1} parent=0 // pred_region
    _
  $region21: #{large_generator_forward.1} parent=0 // pred_fallthru
    _
  // Predicated region
  $region22: #{large_generator_forward.1} parent=0 // pred_check
    _
  $region23: #{large_generator_forward.1} parent=0 // pred_check_branch
    %34 = sbr.rel (0) target = $region25
  $region24: #{large_generator_forward.1} parent=0 // pred_region
    _
  $region25: #{large_generator_forward.1} parent=0 // pred_fallthru
    _
  // Predicated region
  $region26: #{large_generator_forward.1} parent=0 // pred_check
    _
  $region27: #{large_generator_forward.1} parent=0 // pred_check_branch
    %36 = sbr.rel (0) target = $region29
  $region28: #{large_generator_forward.1} parent=0 // pred_region
    _
  $region29: #{large_generator_forward.1} parent=0 // pred_fallthru
    _
  // Predicated region
  $region30: #{large_generator_forward.1} parent=0 // pred_check
    _
  $region31: #{large_generator_forward.1} parent=0 // pred_check_branch
    %38 = sbr.rel (0) target = $region33
  $region32: #{large_generator_forward.1} parent=0 // pred_region
    _
  $region33: #{large_generator_forward.1} parent=0 // pred_fallthru
    _
  // Predicated region
  $region34: #{large_generator_forward.1} parent=0 // pred_check
    _
  $region35: #{large_generator_forward.1} parent=0 // pred_check_branch
    %40 = sbr.rel (0) target = $region37
  $region36: #{large_generator_forward.1} parent=0 // pred_region
    _
  $region37: #{large_generator_forward.1} parent=0 // pred_fallthru
    _
  // Predicated region
  $region38: #{large_generator_forward.1} parent=0 // pred_check
    _
  $region39: #{large_generator_forward.1} parent=0 // pred_check_branch
    %42 = sbr.rel (0) target = $region41
  $region40: #{large_generator_forward.1} parent=0 // pred_region
    _
  $region41: #{large_generator_forward.1} parent=0 // pred_fallthru
    _
  // Predicated region
  $region42: #{large_generator_forward.1} parent=0 // pred_check
    _
  $region43: #{large_generator_forward.1} parent=0 // pred_check_branch
    %44 = sbr.rel (0) target = $region45
  $region44: #{large_generator_forward.1} parent=0 // pred_region
    _
  $region45: #{large_generator_forward.1} parent=0 // pred_fallthru
    _
  // Predicated region
  $region46: #{large_generator_forward.1} parent=0 // pred_check
    _
  $region47: #{large_generator_forward.1} parent=0 // pred_check_branch
    %46 = sbr.rel (0) target = $region49
  $region48: #{large_generator_forward.1} parent=0 // pred_region
    _
  $region49: #{large_generator_forward.1} parent=0 // pred_fallthru
    _
  // Predicated region
  $region50: #{large_generator_forward.1} parent=0 // pred_check
    _
  $region51: #{large_generator_forward.1} parent=0 // pred_check_branch
    %48 = sbr.rel (0) target = $region53
  $region52: #{large_generator_forward.1} parent=0 // pred_region
    _
  $region53: #{large_generator_forward.1} parent=0 // pred_fallthru
    _
  // Predicated region
  $region54: #{large_generator_forward.1} parent=0 // pred_check
    _
  $region55: #{large_generator_forward.1} parent=0 // pred_check_branch
    %50 = sbr.rel (0) target = $region57
  $region56: #{large_generator_forward.1} parent=0 // pred_region
    _
  $region57: #{large_generator_forward.1} parent=0 // pred_fallthru
    _
  // Predicated region
  $region58: #{large_generator_forward.1} parent=0 // pred_check
    _
  $region59: #{large_generator_forward.1} parent=0 // pred_check_branch
    %52 = sbr.rel (0) target = $region61
  $region60: #{large_generator_forward.1} parent=0 // pred_region
    _
  $region61: #{large_generator_forward.1} parent=0 // pred_fallthru
    _
  // Predicated region
  $region62: #{large_generator_forward.1} parent=0 // pred_check
    _
  $region63: #{large_generator_forward.1} parent=0 // pred_check_branch
    %54 = sbr.rel (0) target = $region65
  $region64: #{large_generator_forward.1} parent=0 // pred_region
    _
  $region65: #{large_generator_forward.1} parent=0 // pred_fallthru
    _
  // Predicated region
  $region66: #{large_generator_forward.1} parent=0 // pred_check
    _
  $region67: #{large_generator_forward.1} parent=0 // pred_check_branch
    %56 = sbr.rel (0) target = $region69
  $region68: #{large_generator_forward.1} parent=0 // pred_region
    _
  $region69: #{large_generator_forward.1} parent=0 // pred_fallthru
    _
  // Predicated region
  $region70: #{large_generator_forward.1} parent=0 // pred_check
    _
  $region71: #{large_generator_forward.1} parent=0 // pred_check_branch
    %58 = sbr.rel (0) target = $region73
  $region72: #{large_generator_forward.1} parent=0 // pred_region
    _
  $region73: #{large_generator_forward.1} parent=0 // pred_fallthru
    _
  %v60 = vld [vmem:[%s0] sm:$0xf]
  %v61 = vld [vmem:[%s0 + $0x4] sm:$0xf]
  %v62 = vld [vmem:[%s0 + $0x8] sm:$0xf]
  %v63 = vld [vmem:[%s0 + $0xc] sm:$0xf]
  %v64 = vld [vmem:[%s0 + $0x10] sm:$0xf]
  %v65 = vld [vmem:[%s0 + $0x14] sm:$0xf]
  %v66 = vld [vmem:[%s0 + $0x18] sm:$0xf]
  %v67 = vld [vmem:[%s0 + $0x1c] sm:$0xf]
  %v68 = vld [vmem:[%s0 + $0x20] sm:$0xf]
  %v69 = vld [vmem:[%s0 + $0x24] sm:$0xf]
  %v70 = vld [vmem:[%s0 + $0x28] sm:$0xf]
  %v71 = vld [vmem:[%s0 + $0x2c] sm:$0xf]
  %v72 = vld [vmem:[%s0 + $0x30] sm:$0xf]
  %v73 = vld [vmem:[%s0 + $0x34] sm:$0xf]
  %v74 = vld [vmem:[%s0 + $0x38] sm:$0xf]
  %v75 = vld [vmem:[%s0 + $0x3c] sm:$0xf]
  %v76 = vld [vmem:[%s1] sm:$0xf]
  %v77 = vld [vmem:[%s1 + $0x4] sm:$0xf]
  %v94 = vunpack.c.l.b16 %v60
  %v95 = vunpack.c.l.b16 %v61
  %v96 = vunpack.c.l.b16 %v62
  %v97 = vunpack.c.l.b16 %v63
  %v98 = vunpack.c.l.b16 %v64
  %v99 = vunpack.c.l.b16 %v65
  %v100 = vunpack.c.l.b16 %v66
  %v101 = vunpack.c.l.b16 %v67
  %v102 = vunpack.c.l.b16 %v68
  %v103 = vunpack.c.l.b16 %v69
  %v104 = vunpack.c.l.b16 %v70
  %v105 = vunpack.c.l.b16 %v71
  %v106 = vunpack.c.l.b16 %v72
  %v107 = vunpack.c.l.b16 %v73
  %v108 = vunpack.c.l.b16 %v74
  %v109 = vunpack.c.l.b16 %v75
  %v110 = vpack.c.b16 %v95, %v94
  %v111 = vpack.c.b16 %v97, %v96
  %v112 = vpack.c.b16 %v99, %v98
  %v113 = vpack.c.b16 %v101, %v100
  %v114 = vpack.c.b16 %v103, %v102
  %v115 = vpack.c.b16 %v105, %v104
  %v116 = vpack.c.b16 %v107, %v106
  %v117 = vpack.c.b16 %v109, %v108
  %v120 = vunpack.c.l.b16 %v76
  %v121 = vunpack.c.l.b16 %v77
  %v122 = vpack.c.b16 %v121, %v120
  %vm124 = vcmask 130048
  %v126 = vsel %vm124, %v110, 0
  %v129 = vsel %vm124, %v111, 0
  %v132 = vsel %vm124, %v112, 0
  %v135 = vsel %vm124, %v113, 0
  %v138 = vsel %vm124, %v114, 0
  %v141 = vsel %vm124, %v115, 0
  %v144 = vsel %vm124, %v116, 0
  %v147 = vsel %vm124, %v117, 0
  %149 = vmatprep.subr.bf16.mxu0 0
  %150 = vmatpush1.bf16.msra.mxu0 %v122
  %151 = vmatprep.subr.bf16.mxu0 0
  %152 = vmatpush1.bf16.msra.mxu0 0
  %153 = vmatprep.subr.bf16.mxu0 0
  %154 = vmatpush1.bf16.msra.mxu0 0
  %155 = vmatprep.subr.bf16.mxu0 0
  %156 = vmatpush1.bf16.msra.mxu0 0
  %157 = vmatprep.subr.bf16.mxu0 0
  %158 = vmatpush1.bf16.msra.mxu0 0
  %159 = vmatprep.subr.bf16.mxu0 0
  %160 = vmatpush1.bf16.msra.mxu0 0
  %161 = vmatprep.subr.bf16.mxu0 0
  %162 = vmatpush1.bf16.msra.mxu0 0
  %163 = vmatprep.subr.bf16.mxu0 0
  %164 = vmatpush1.bf16.msra.mxu0 0
  %165 = vmatprep.subr.bf16.mxu0 0
  %166 = vmatpush1.bf16.msra.mxu0 0
  %167 = vmatprep.subr.bf16.mxu0 0
  %168 = vmatpush1.bf16.msra.mxu0 0
  %169 = vmatprep.subr.bf16.mxu0 0
  %170 = vmatpush1.bf16.msra.mxu0 0
  %171 = vmatprep.subr.bf16.mxu0 0
  %172 = vmatpush1.bf16.msra.mxu0 0
  %173 = vmatprep.subr.bf16.mxu0 0
  %174 = vmatpush1.bf16.msra.mxu0 0
  %175 = vmatprep.subr.bf16.mxu0 0
  %176 = vmatpush1.bf16.msra.mxu0 0
  %177 = vmatprep.subr.bf16.mxu0 0
  %178 = vmatpush1.bf16.msra.mxu0 0
  %179 = vmatprep.subr.bf16.mxu0 0
  %180 = vmatpush1.bf16.msra.mxu0 0
  %181 = vmatprep.mubr.bf16.mxu0 0
  %182 = vmatmul.mubr.bf16.gmra.mrb[0].mxu0 %v126
  %v183 = vpop.f32.mrb[0].mxu0
  %v184 = vadd.f32 0.0, %v183
  %v185 = vpop.f32.mrb[0].mxu0
  %v186 = vpop.f32.mrb[0].mxu0
  %v187 = vadd.f32 0.0, %v186
  %v188 = vpop.f32.mrb[0].mxu0
  %189 = vmatprep.mubr.bf16.mxu0 0
  %190 = vmatmul.mubr.bf16.gmra.mrb[0].mxu0 %v129
  %v191 = vpop.f32.mrb[0].mxu0
  %v192 = vadd.f32 0.0, %v191
  %v193 = vpop.f32.mrb[0].mxu0
  %v194 = vpop.f32.mrb[0].mxu0
  %v195 = vadd.f32 0.0, %v194
  %v196 = vpop.f32.mrb[0].mxu0
  %197 = vmatprep.mubr.bf16.mxu0 0
  %198 = vmatmul.mubr.bf16.gmra.mrb[0].mxu0 %v132
  %v199 = vpop.f32.mrb[0].mxu0
  %v200 = vadd.f32 0.0, %v199
  %v201 = vpop.f32.mrb[0].mxu0
  %v202 = vpop.f32.mrb[0].mxu0
  %v203 = vadd.f32 0.0, %v202
  %v204 = vpop.f32.mrb[0].mxu0
  %205 = vmatprep.mubr.bf16.mxu0 0
  %206 = vmatmul.mubr.bf16.gmra.mrb[0].mxu0 %v135
  %v207 = vpop.f32.mrb[0].mxu0
  %v208 = vadd.f32 0.0, %v207
  %v209 = vpop.f32.mrb[0].mxu0
  %v210 = vpop.f32.mrb[0].mxu0
  %v211 = vadd.f32 0.0, %v210
  %v212 = vpop.f32.mrb[0].mxu0
  %213 = vmatprep.mubr.bf16.mxu0 0
  %214 = vmatmul.mubr.bf16.gmra.mrb[0].mxu0 %v138
  %v215 = vpop.f32.mrb[0].mxu0
  %v216 = vadd.f32 0.0, %v215
  %v217 = vpop.f32.mrb[0].mxu0
  %v218 = vpop.f32.mrb[0].mxu0
  %v219 = vadd.f32 0.0, %v218
  %v220 = vpop.f32.mrb[0].mxu0
  %221 = vmatprep.mubr.bf16.mxu0 0
  %222 = vmatmul.mubr.bf16.gmra.mrb[0].mxu0 %v141
  %v223 = vpop.f32.mrb[0].mxu0
  %v224 = vadd.f32 0.0, %v223
  %v225 = vpop.f32.mrb[0].mxu0
  %v226 = vpop.f32.mrb[0].mxu0
  %v227 = vadd.f32 0.0, %v226
  %v228 = vpop.f32.mrb[0].mxu0
  %229 = vmatprep.mubr.bf16.mxu0 0
  %230 = vmatmul.mubr.bf16.gmra.mrb[0].mxu0 %v144
  %v231 = vpop.f32.mrb[0].mxu0
  %v232 = vadd.f32 0.0, %v231
  %v233 = vpop.f32.mrb[0].mxu0
  %v234 = vpop.f32.mrb[0].mxu0
  %v235 = vadd.f32 0.0, %v234
  %v236 = vpop.f32.mrb[0].mxu0
  %237 = vmatprep.mubr.bf16.mxu0 0
  %238 = vmatmul.mubr.bf16.gmra.mrb[0].mxu0 %v147
  %v239 = vpop.f32.mrb[0].mxu0
  %v240 = vadd.f32 0.0, %v239
  %v241 = vpop.f32.mrb[0].mxu0
  %v242 = vpop.f32.mrb[0].mxu0
  %v243 = vadd.f32 0.0, %v242
  %v244 = vpop.f32.mrb[0].mxu0
  %245 = vdwg.mxu0
  %v246 = vld [vmem:[%s2] sm:$0x1]
  %v247 = vld [vmem:[%s3] sm:$0x1]
  %vm248 = vcmask 523264
  %v249 = vsel %vm248, %v184, 0.0
  %v250 = vsel %vm248, %v187, 0.0
  %v251 = vadd.f32 %v249, %v250
  %v252 = vsel %vm248, %v192, 0.0
  %v253 = vadd.f32 %v251, %v252
  %v254 = vsel %vm248, %v195, 0.0
  %v255 = vadd.f32 %v253, %v254
  %v256 = vsel %vm248, %v200, 0.0
  %v257 = vadd.f32 %v255, %v256
  %v258 = vsel %vm248, %v203, 0.0
  %v259 = vadd.f32 %v257, %v258
  %v260 = vsel %vm248, %v208, 0.0
  %v261 = vadd.f32 %v259, %v260
  %v262 = vsel %vm248, %v211, 0.0
  %v263 = vadd.f32 %v261, %v262
  %v264 = vsel %vm248, %v216, 0.0
  %v265 = vadd.f32 %v263, %v264
  %v266 = vsel %vm248, %v219, 0.0
  %v267 = vadd.f32 %v265, %v266
  %v268 = vsel %vm248, %v224, 0.0
  %v269 = vadd.f32 %v267, %v268
  %v270 = vsel %vm248, %v227, 0.0
  %v271 = vadd.f32 %v269, %v270
  %v272 = vsel %vm248, %v232, 0.0
  %v273 = vadd.f32 %v271, %v272
  %v274 = vsel %vm248, %v235, 0.0
  %v275 = vadd.f32 %v273, %v274
  %v276 = vsel %vm248, %v240, 0.0
  %v277 = vadd.f32 %v275, %v276
  %v278 = vsel %vm248, %v243, 0.0
  %v279 = vadd.f32 %v277, %v278
  %v280 = vrot.slane %v279, 4
  %v281 = vadd.f32 %v279, %v280
  %v282 = vrot.slane %v281, 2
  %v283 = vadd.f32 %v281, %v282
  %v284 = vrot.slane %v283, 1
  %v285 = vadd.f32 %v283, %v284
  %v286 = vmul.f32 %v285, 0.0078125
  %v287 = vsub.f32 %v184, %v286
  %v288 = vsub.f32 %v187, %v286
  %v289 = vsub.f32 %v192, %v286
  %v290 = vsub.f32 %v195, %v286
  %v291 = vsub.f32 %v200, %v286
  %v292 = vsub.f32 %v203, %v286
  %v293 = vsub.f32 %v208, %v286
  %v294 = vsub.f32 %v211, %v286
  %v295 = vsub.f32 %v216, %v286
  %v296 = vsub.f32 %v219, %v286
  %v297 = vsub.f32 %v224, %v286
  %v298 = vsub.f32 %v227, %v286
  %v299 = vsub.f32 %v232, %v286
  %v300 = vsub.f32 %v235, %v286
  %v301 = vsub.f32 %v240, %v286
  %v302 = vsub.f32 %v243, %v286
  %v303 = vmul.f32 %v287, %v287
  %v304 = vmul.f32 %v288, %v288
  %v305 = vmul.f32 %v289, %v289
  %v306 = vmul.f32 %v290, %v290
  %v307 = vmul.f32 %v291, %v291
  %v308 = vmul.f32 %v292, %v292
  %v309 = vmul.f32 %v293, %v293
  %v310 = vmul.f32 %v294, %v294
  %v311 = vmul.f32 %v295, %v295
  %v312 = vmul.f32 %v296, %v296
  %v313 = vmul.f32 %v297, %v297
  %v314 = vmul.f32 %v298, %v298
  %v315 = vmul.f32 %v299, %v299
  %v316 = vmul.f32 %v300, %v300
  %v317 = vmul.f32 %v301, %v301
  %v318 = vmul.f32 %v302, %v302
  %v319 = vsel %vm248, %v303, 0.0
  %v320 = vsel %vm248, %v304, 0.0
  %v321 = vadd.f32 %v319, %v320
  %v322 = vsel %vm248, %v305, 0.0
  %v323 = vadd.f32 %v321, %v322
  %v324 = vsel %vm248, %v306, 0.0
  %v325 = vadd.f32 %v323, %v324
  %v326 = vsel %vm248, %v307, 0.0
  %v327 = vadd.f32 %v325, %v326
  %v328 = vsel %vm248, %v308, 0.0
  %v329 = vadd.f32 %v327, %v328
  %v330 = vsel %vm248, %v309, 0.0
  %v331 = vadd.f32 %v329, %v330
  %v332 = vsel %vm248, %v310, 0.0
  %v333 = vadd.f32 %v331, %v332
  %v334 = vsel %vm248, %v311, 0.0
  %v335 = vadd.f32 %v333, %v334
  %v336 = vsel %vm248, %v312, 0.0
  %v337 = vadd.f32 %v335, %v336
  %v338 = vsel %vm248, %v313, 0.0
  %v339 = vadd.f32 %v337, %v338
  %v340 = vsel %vm248, %v314, 0.0
  %v341 = vadd.f32 %v339, %v340
  %v342 = vsel %vm248, %v315, 0.0
  %v343 = vadd.f32 %v341, %v342
  %v344 = vsel %vm248, %v316, 0.0
  %v345 = vadd.f32 %v343, %v344
  %v346 = vsel %vm248, %v317, 0.0
  %v347 = vadd.f32 %v345, %v346
  %v348 = vsel %vm248, %v318, 0.0
  %v349 = vadd.f32 %v347, %v348
  %v350 = vrot.slane %v349, 4
  %v351 = vadd.f32 %v349, %v350
  %v352 = vrot.slane %v351, 2
  %v353 = vadd.f32 %v351, %v352
  %v354 = vrot.slane %v353, 1
  %v355 = vadd.f32 %v353, %v354
  %v356 = vmul.f32 %v355, 0.0078125
  %v357 = vadd.f32 %v356, 1e-05
  %v358 = vrsqrt.pop %v357
  %v359 = vmul.f32 %v358, %v246
  %v360 = vlaneseq
  %v361 = vshrl.u32 %v360, 7
  %v362 = vsub.s32 0, %v361
  %v363 = vrot.slane %v359, %v362
  %v364 = vmul.f32 %v287, %v363
  %v365 = vmul.f32 %v288, %v363
  %v366 = vmul.f32 %v289, %v363
  %v367 = vmul.f32 %v290, %v363
  %v368 = vmul.f32 %v291, %v363
  %v369 = vmul.f32 %v292, %v363
  %v370 = vmul.f32 %v293, %v363
  %v371 = vmul.f32 %v294, %v363
  %v372 = vmul.f32 %v295, %v363
  %v373 = vmul.f32 %v296, %v363
  %v374 = vmul.f32 %v297, %v363
  %v375 = vmul.f32 %v298, %v363
  %v376 = vmul.f32 %v299, %v363
  %v377 = vmul.f32 %v300, %v363
  %v378 = vmul.f32 %v301, %v363
  %v379 = vmul.f32 %v302, %v363
  %v381 = vlaneseq
  %v382 = vshrl.u32 %v381, 7
  %v383 = vsub.s32 0, %v382
  %v384 = vrot.slane %v247, %v383
  %v386 = vadd.f32 %v364, %v384
  %v387 = vadd.f32 %v365, %v384
  %v388 = vadd.f32 %v366, %v384
  %v389 = vadd.f32 %v367, %v384
  %v390 = vadd.f32 %v368, %v384
  %v391 = vadd.f32 %v369, %v384
  %v392 = vadd.f32 %v370, %v384
  %v393 = vadd.f32 %v371, %v384
  %v394 = vadd.f32 %v372, %v384
  %v395 = vadd.f32 %v373, %v384
  %v396 = vadd.f32 %v374, %v384
  %v397 = vadd.f32 %v375, %v384
  %v398 = vadd.f32 %v376, %v384
  %v399 = vadd.f32 %v377, %v384
  %v400 = vadd.f32 %v378, %v384
  %v401 = vadd.f32 %v379, %v384
  %vm402 = vcmp.ge.f32.partialorder %v386, 0.0
  %vm403 = vcmp.ge.f32.partialorder %v387, 0.0
  %vm404 = vcmp.ge.f32.partialorder %v388, 0.0
  %vm405 = vcmp.ge.f32.partialorder %v389, 0.0
  %vm406 = vcmp.ge.f32.partialorder %v390, 0.0
  %vm407 = vcmp.ge.f32.partialorder %v391, 0.0
  %vm408 = vcmp.ge.f32.partialorder %v392, 0.0
  %vm409 = vcmp.ge.f32.partialorder %v393, 0.0
  %vm410 = vcmp.ge.f32.partialorder %v394, 0.0
  %vm411 = vcmp.ge.f32.partialorder %v395, 0.0
  %vm412 = vcmp.ge.f32.partialorder %v396, 0.0
  %vm413 = vcmp.ge.f32.partialorder %v397, 0.0
  %vm414 = vcmp.ge.f32.partialorder %v398, 0.0
  %vm415 = vcmp.ge.f32.partialorder %v399, 0.0
  %vm416 = vcmp.ge.f32.partialorder %v400, 0.0
  %vm417 = vcmp.ge.f32.partialorder %v401, 0.0
  %v418 = vmul.f32 %v386, 0.01
  %v419 = vmul.f32 %v387, 0.01
  %v420 = vmul.f32 %v388, 0.01
  %v421 = vmul.f32 %v389, 0.01
  %v422 = vmul.f32 %v390, 0.01
  %v423 = vmul.f32 %v391, 0.01
  %v424 = vmul.f32 %v392, 0.01
  %v425 = vmul.f32 %v393, 0.01
  %v426 = vmul.f32 %v394, 0.01
  %v427 = vmul.f32 %v395, 0.01
  %v428 = vmul.f32 %v396, 0.01
  %v429 = vmul.f32 %v397, 0.01
  %v430 = vmul.f32 %v398, 0.01
  %v431 = vmul.f32 %v399, 0.01
  %v432 = vmul.f32 %v400, 0.01
  %v433 = vmul.f32 %v401, 0.01
  %v434 = vsel %vm402, %v386, %v418
  %v435 = vsel %vm403, %v387, %v419
  %v436 = vsel %vm404, %v388, %v420
  %v437 = vsel %vm405, %v389, %v421
  %v438 = vsel %vm406, %v390, %v422
  %v439 = vsel %vm407, %v391, %v423
  %v440 = vsel %vm408, %v392, %v424
  %v441 = vsel %vm409, %v393, %v425
  %v442 = vsel %vm410, %v394, %v426
  %v443 = vsel %vm411, %v395, %v427
  %v444 = vsel %vm412, %v396, %v428
  %v445 = vsel %vm413, %v397, %v429
  %v446 = vsel %vm414, %v398, %v430
  %v447 = vsel %vm415, %v399, %v431
  %v448 = vsel %vm416, %v400, %v432
  %v449 = vsel %vm417, %v401, %v433
  %v450 = vld [vmem:[%s4] sm:$0xf]
  %v451 = vld [vmem:[%s4 + $0x4] sm:$0xf]
  %v452 = vld [vmem:[%s4 + $0x8] sm:$0xf]
  %v453 = vld [vmem:[%s4 + $0xc] sm:$0xf]
  %v454 = vld [vmem:[%s4 + $0x10] sm:$0xf]
  %v455 = vld [vmem:[%s4 + $0x14] sm:$0xf]
  %v456 = vld [vmem:[%s4 + $0x18] sm:$0xf]
  %v457 = vld [vmem:[%s4 + $0x1c] sm:$0xf]
  %v458 = vld [vmem:[%s4 + $0x20] sm:$0xf]
  %v459 = vld [vmem:[%s4 + $0x24] sm:$0xf]
  %v460 = vld [vmem:[%s4 + $0x28] sm:$0xf]
  %v461 = vld [vmem:[%s4 + $0x2c] sm:$0xf]
  %v462 = vld [vmem:[%s4 + $0x30] sm:$0xf]
  %v463 = vld [vmem:[%s4 + $0x34] sm:$0xf]
  %v464 = vld [vmem:[%s4 + $0x38] sm:$0xf]
  %v465 = vld [vmem:[%s4 + $0x3c] sm:$0xf]
  %v466 = vld [vmem:[%s4 + $0x40] sm:$0xf]
  %v467 = vld [vmem:[%s4 + $0x44] sm:$0xf]
  %v468 = vld [vmem:[%s4 + $0x48] sm:$0xf]
  %v469 = vld [vmem:[%s4 + $0x4c] sm:$0xf]
  %v470 = vld [vmem:[%s4 + $0x50] sm:$0xf]
  %v471 = vld [vmem:[%s4 + $0x54] sm:$0xf]
  %v472 = vld [vmem:[%s4 + $0x58] sm:$0xf]
  %v473 = vld [vmem:[%s4 + $0x5c] sm:$0xf]
  %v474 = vld [vmem:[%s4 + $0x60] sm:$0xf]
  %v475 = vld [vmem:[%s4 + $0x64] sm:$0xf]
  %v476 = vld [vmem:[%s4 + $0x68] sm:$0xf]
  %v477 = vld [vmem:[%s4 + $0x6c] sm:$0xf]
  %v478 = vld [vmem:[%s4 + $0x70] sm:$0xf]
  %v479 = vld [vmem:[%s4 + $0x74] sm:$0xf]
  %v480 = vld [vmem:[%s4 + $0x78] sm:$0xf]
  %v481 = vld [vmem:[%s4 + $0x7c] sm:$0xf]
  %v482 = vpack.c.bf16 %v435, %v434
  %v483 = vpack.c.bf16 %v437, %v436
  %v484 = vpack.c.bf16 %v439, %v438
  %v485 = vpack.c.bf16 %v441, %v440
  %v494 = vunpack.c.l.b16 %v458
  %v495 = vunpack.c.l.b16 %v459
  %v496 = vunpack.c.l.b16 %v460
  %v497 = vunpack.c.l.b16 %v461
  %v498 = vunpack.c.l.b16 %v462
  %v499 = vunpack.c.l.b16 %v463
  %v500 = vunpack.c.l.b16 %v464
  %v501 = vunpack.c.l.b16 %v465
  %v502 = vpack.c.b16 %v495, %v494
  %v503 = vpack.c.b16 %v497, %v496
  %v504 = vpack.c.b16 %v499, %v498
  %v505 = vpack.c.b16 %v501, %v500
  %v511 = vsel %vm248, %v484, 0
  %v514 = vsel %vm248, %v485, 0
  %516 = vmatprep.subr.bf16.mxu0 0
  %517 = vmatpush1.bf16.msra.mxu0 %v502
  %518 = vmatprep.subr.bf16.mxu0 0
  %519 = vmatpush1.bf16.msra.mxu0 %v503
  %520 = vmatprep.subr.bf16.mxu0 0
  %521 = vmatpush1.bf16.msra.mxu0 %v504
  %522 = vmatprep.subr.bf16.mxu0 0
  %523 = vmatpush1.bf16.msra.mxu0 %v505
  %524 = vmatprep.subr.bf16.mxu0 0
  %525 = vmatpush1.bf16.msra.mxu0 0
  %526 = vmatprep.subr.bf16.mxu0 0
  %527 = vmatpush1.bf16.msra.mxu0 0
  %528 = vmatprep.subr.bf16.mxu0 0
  %529 = vmatpush1.bf16.msra.mxu0 0
  %530 = vmatprep.subr.bf16.mxu0 0
  %531 = vmatpush1.bf16.msra.mxu0 0
  %532 = vmatprep.subr.bf16.mxu0 0
  %533 = vmatpush1.bf16.msra.mxu0 0
  %534 = vmatprep.subr.bf16.mxu0 0
  %535 = vmatpush1.bf16.msra.mxu0 0
  %536 = vmatprep.subr.bf16.mxu0 0
  %537 = vmatpush1.bf16.msra.mxu0 0
  %538 = vmatprep.subr.bf16.mxu0 0
  %539 = vmatpush1.bf16.msra.mxu0 0
  %540 = vmatprep.subr.bf16.mxu0 0
  %541 = vmatpush1.bf16.msra.mxu0 0
  %542 = vmatprep.subr.bf16.mxu0 0
  %543 = vmatpush1.bf16.msra.mxu0 0
  %544 = vmatprep.subr.bf16.mxu0 0
  %545 = vmatpush1.bf16.msra.mxu0 0
  %546 = vmatprep.subr.bf16.mxu0 0
  %547 = vmatpush1.bf16.msra.mxu0 0
  %548 = vmatprep.mubr.bf16.mxu0 0
  %549 = vmatmul.mubr.bf16.gmra.mrb[0].mxu0 %v511
  %v550 = vpop.f32.mrb[0].mxu0
  %v551 = vadd.f32 0.0, %v550
  %v552 = vpop.f32.mrb[0].mxu0
  %v553 = vpop.f32.mrb[0].mxu0
  %v554 = vadd.f32 0.0, %v553
  %v555 = vpop.f32.mrb[0].mxu0
  %556 = vmatprep.mubr.bf16.mxu0 0
  %557 = vmatmul.mubr.bf16.gmra.mrb[0].mxu0 %v514
  %v558 = vpop.f32.mrb[0].mxu0
  %v559 = vadd.f32 0.0, %v558
  %v560 = vpop.f32.mrb[0].mxu0
  %v561 = vpop.f32.mrb[0].mxu0
  %v562 = vadd.f32 0.0, %v561
  %v563 = vpop.f32.mrb[0].mxu0
  %564 = vdwg.mxu0
  %v573 = vunpack.c.l.b16 %v450
  %v574 = vunpack.c.l.b16 %v451
  %v575 = vunpack.c.l.b16 %v452
  %v576 = vunpack.c.l.b16 %v453
  %v577 = vunpack.c.l.b16 %v454
  %v578 = vunpack.c.l.b16 %v455
  %v579 = vunpack.c.l.b16 %v456
  %v580 = vunpack.c.l.b16 %v457
  %v581 = vpack.c.b16 %v574, %v573
  %v582 = vpack.c.b16 %v576, %v575
  %v583 = vpack.c.b16 %v578, %v577
  %v584 = vpack.c.b16 %v580, %v579
  %v590 = vsel %vm248, %v482, 0
  %v593 = vsel %vm248, %v483, 0
  %595 = vmatprep.subr.bf16.mxu0 0
  %596 = vmatpush1.bf16.msra.mxu0 %v581
  %597 = vmatprep.subr.bf16.mxu0 0
  %598 = vmatpush1.bf16.msra.mxu0 %v582
  %599 = vmatprep.subr.bf16.mxu0 0
  %600 = vmatpush1.bf16.msra.mxu0 %v583
  %601 = vmatprep.subr.bf16.mxu0 0
  %602 = vmatpush1.bf16.msra.mxu0 %v584
  %603 = vmatprep.subr.bf16.mxu0 0
  %604 = vmatpush1.bf16.msra.mxu0 0
  %605 = vmatprep.subr.bf16.mxu0 0
  %606 = vmatpush1.bf16.msra.mxu0 0
  %607 = vmatprep.subr.bf16.mxu0 0
  %608 = vmatpush1.bf16.msra.mxu0 0
  %609 = vmatprep.subr.bf16.mxu0 0
  %610 = vmatpush1.bf16.msra.mxu0 0
  %611 = vmatprep.subr.bf16.mxu0 0
  %612 = vmatpush1.bf16.msra.mxu0 0
  %613 = vmatprep.subr.bf16.mxu0 0
  %614 = vmatpush1.bf16.msra.mxu0 0
  %615 = vmatprep.subr.bf16.mxu0 0
  %616 = vmatpush1.bf16.msra.mxu0 0
  %617 = vmatprep.subr.bf16.mxu0 0
  %618 = vmatpush1.bf16.msra.mxu0 0
  %619 = vmatprep.subr.bf16.mxu0 0
  %620 = vmatpush1.bf16.msra.mxu0 0
  %621 = vmatprep.subr.bf16.mxu0 0
  %622 = vmatpush1.bf16.msra.mxu0 0
  %623 = vmatprep.subr.bf16.mxu0 0
  %624 = vmatpush1.bf16.msra.mxu0 0
  %625 = vmatprep.subr.bf16.mxu0 0
  %626 = vmatpush1.bf16.msra.mxu0 0
  %627 = vmatprep.mubr.bf16.mxu0 0
  %628 = vmatmul.mubr.bf16.gmra.mrb[0].mxu0 %v590
  %v629 = vpop.f32.mrb[0].mxu0
  %v630 = vadd.f32 %v551, %v629
  %v631 = vpop.f32.mrb[0].mxu0
  %v632 = vpop.f32.mrb[0].mxu0
  %v633 = vadd.f32 %v554, %v632
  %v634 = vpop.f32.mrb[0].mxu0
  %635 = vmatprep.mubr.bf16.mxu0 0
  %636 = vmatmul.mubr.bf16.gmra.mrb[0].mxu0 %v593
  %v637 = vpop.f32.mrb[0].mxu0
  %v638 = vadd.f32 %v559, %v637
  %v639 = vpop.f32.mrb[0].mxu0
  %v640 = vpop.f32.mrb[0].mxu0
  %v641 = vadd.f32 %v562, %v640
  %v642 = vpop.f32.mrb[0].mxu0
  %643 = vdwg.mxu0
  %v644 = vpack.c.bf16 %v443, %v442
  %v645 = vpack.c.bf16 %v445, %v444
  %v654 = vunpack.c.l.b16 %v466
  %v655 = vunpack.c.l.b16 %v467
  %v656 = vunpack.c.l.b16 %v468
  %v657 = vunpack.c.l.b16 %v469
  %v658 = vunpack.c.l.b16 %v470
  %v659 = vunpack.c.l.b16 %v471
  %v660 = vunpack.c.l.b16 %v472
  %v661 = vunpack.c.l.b16 %v473
  %v662 = vpack.c.b16 %v655, %v654
  %v663 = vpack.c.b16 %v657, %v656
  %v664 = vpack.c.b16 %v659, %v658
  %v665 = vpack.c.b16 %v661, %v660
  %v671 = vsel %vm248, %v644, 0
  %v674 = vsel %vm248, %v645, 0
  %676 = vmatprep.subr.bf16.mxu0 0
  %677 = vmatpush1.bf16.msra.mxu0 %v662
  %678 = vmatprep.subr.bf16.mxu0 0
  %679 = vmatpush1.bf16.msra.mxu0 %v663
  %680 = vmatprep.subr.bf16.mxu0 0
  %681 = vmatpush1.bf16.msra.mxu0 %v664
  %682 = vmatprep.subr.bf16.mxu0 0
  %683 = vmatpush1.bf16.msra.mxu0 %v665
  %684 = vmatprep.subr.bf16.mxu0 0
  %685 = vmatpush1.bf16.msra.mxu0 0
  %686 = vmatprep.subr.bf16.mxu0 0
  %687 = vmatpush1.bf16.msra.mxu0 0
  %688 = vmatprep.subr.bf16.mxu0 0
  %689 = vmatpush1.bf16.msra.mxu0 0
  %690 = vmatprep.subr.bf16.mxu0 0
  %691 = vmatpush1.bf16.msra.mxu0 0
  %692 = vmatprep.subr.bf16.mxu0 0
  %693 = vmatpush1.bf16.msra.mxu0 0
  %694 = vmatprep.subr.bf16.mxu0 0
  %695 = vmatpush1.bf16.msra.mxu0 0
  %696 = vmatprep.subr.bf16.mxu0 0
  %697 = vmatpush1.bf16.msra.mxu0 0
  %698 = vmatprep.subr.bf16.mxu0 0
  %699 = vmatpush1.bf16.msra.mxu0 0
  %700 = vmatprep.subr.bf16.mxu0 0
  %701 = vmatpush1.bf16.msra.mxu0 0
  %702 = vmatprep.subr.bf16.mxu0 0
  %703 = vmatpush1.bf16.msra.mxu0 0
  %704 = vmatprep.subr.bf16.mxu0 0
  %705 = vmatpush1.bf16.msra.mxu0 0
  %706 = vmatprep.subr.bf16.mxu0 0
  %707 = vmatpush1.bf16.msra.mxu0 0
  %708 = vmatprep.mubr.bf16.mxu0 0
  %709 = vmatmul.mubr.bf16.gmra.mrb[0].mxu0 %v671
  %v710 = vpop.f32.mrb[0].mxu0
  %v711 = vadd.f32 0.0, %v710
  %v712 = vpop.f32.mrb[0].mxu0
  %v713 = vpop.f32.mrb[0].mxu0
  %v714 = vadd.f32 0.0, %v713
  %v715 = vpop.f32.mrb[0].mxu0
  %716 = vmatprep.mubr.bf16.mxu0 0
  %717 = vmatmul.mubr.bf16.gmra.mrb[0].mxu0 %v674
  %v718 = vpop.f32.mrb[0].mxu0
  %v719 = vadd.f32 0.0, %v718
  %v720 = vpop.f32.mrb[0].mxu0
  %v721 = vpop.f32.mrb[0].mxu0
  %v722 = vadd.f32 0.0, %v721
  %v723 = vpop.f32.mrb[0].mxu0
  %724 = vdwg.mxu0
  %v725 = vadd.f32 %v630, %v711
  %v726 = vadd.f32 %v633, %v714
  %v727 = vadd.f32 %v638, %v719
  %v728 = vadd.f32 %v641, %v722
  %v729 = vpack.c.bf16 %v447, %v446
  %v730 = vpack.c.bf16 %v449, %v448
  %v739 = vunpack.c.l.b16 %v474
  %v740 = vunpack.c.l.b16 %v475
  %v741 = vunpack.c.l.b16 %v476
  %v742 = vunpack.c.l.b16 %v477
  %v743 = vunpack.c.l.b16 %v478
  %v744 = vunpack.c.l.b16 %v479
  %v745 = vunpack.c.l.b16 %v480
  %v746 = vunpack.c.l.b16 %v481
  %v747 = vpack.c.b16 %v740, %v739
  %v748 = vpack.c.b16 %v742, %v741
  %v749 = vpack.c.b16 %v744, %v743
  %v750 = vpack.c.b16 %v746, %v745
  %v756 = vsel %vm248, %v729, 0
  %v759 = vsel %vm248, %v730, 0
  %761 = vmatprep.subr.bf16.mxu0 0
  %762 = vmatpush1.bf16.msra.mxu0 %v747
  %763 = vmatprep.subr.bf16.mxu0 0
  %764 = vmatpush1.bf16.msra.mxu0 %v748
  %765 = vmatprep.subr.bf16.mxu0 0
  %766 = vmatpush1.bf16.msra.mxu0 %v749
  %767 = vmatprep.subr.bf16.mxu0 0
  %768 = vmatpush1.bf16.msra.mxu0 %v750
  %769 = vmatprep.subr.bf16.mxu0 0
  %770 = vmatpush1.bf16.msra.mxu0 0
  %771 = vmatprep.subr.bf16.mxu0 0
  %772 = vmatpush1.bf16.msra.mxu0 0
  %773 = vmatprep.subr.bf16.mxu0 0
  %774 = vmatpush1.bf16.msra.mxu0 0
  %775 = vmatprep.subr.bf16.mxu0 0
  %776 = vmatpush1.bf16.msra.mxu0 0
  %777 = vmatprep.subr.bf16.mxu0 0
  %778 = vmatpush1.bf16.msra.mxu0 0
  %779 = vmatprep.subr.bf16.mxu0 0
  %780 = vmatpush1.bf16.msra.mxu0 0
  %781 = vmatprep.subr.bf16.mxu0 0
  %782 = vmatpush1.bf16.msra.mxu0 0
  %783 = vmatprep.subr.bf16.mxu0 0
  %784 = vmatpush1.bf16.msra.mxu0 0
  %785 = vmatprep.subr.bf16.mxu0 0
  %786 = vmatpush1.bf16.msra.mxu0 0
  %787 = vmatprep.subr.bf16.mxu0 0
  %788 = vmatpush1.bf16.msra.mxu0 0
  %789 = vmatprep.subr.bf16.mxu0 0
  %790 = vmatpush1.bf16.msra.mxu0 0
  %791 = vmatprep.subr.bf16.mxu0 0
  %792 = vmatpush1.bf16.msra.mxu0 0
  %793 = vmatprep.mubr.bf16.mxu0 0
  %794 = vmatmul.mubr.bf16.gmra.mrb[0].mxu0 %v756
  %v795 = vpop.f32.mrb[0].mxu0
  %v796 = vadd.f32 0.0, %v795
  %v797 = vpop.f32.mrb[0].mxu0
  %v798 = vpop.f32.mrb[0].mxu0
  %v799 = vadd.f32 0.0, %v798
  %v800 = vpop.f32.mrb[0].mxu0
  %801 = vmatprep.mubr.bf16.mxu0 0
  %802 = vmatmul.mubr.bf16.gmra.mrb[0].mxu0 %v759
  %v803 = vpop.f32.mrb[0].mxu0
  %v804 = vadd.f32 0.0, %v803
  %v805 = vpop.f32.mrb[0].mxu0
  %v806 = vpop.f32.mrb[0].mxu0
  %v807 = vadd.f32 0.0, %v806
  %v808 = vpop.f32.mrb[0].mxu0
  %809 = vdwg.mxu0
  %v810 = vadd.f32 %v725, %v796
  %v811 = vadd.f32 %v726, %v799
  %v812 = vadd.f32 %v727, %v804
  %v813 = vadd.f32 %v728, %v807
  %v814 = vld [vmem:[%s5] sm:$0x1]
  %v815 = vld [vmem:[%s6] sm:$0x1]
  %v816 = vadd.f32 %v810, %v811
  %v817 = vadd.f32 %v816, %v812
  %v818 = vadd.f32 %v817, %v813
  %v819 = vrot.slane %v818, 4
  %v820 = vadd.f32 %v818, %v819
  %v821 = vrot.slane %v820, 2
  %v822 = vadd.f32 %v820, %v821
  %v823 = vrot.slane %v822, 1
  %v824 = vadd.f32 %v822, %v823
  %v825 = vmul.f32 %v824, 0.03125
  %v826 = vsub.f32 %v810, %v825
  %v827 = vsub.f32 %v811, %v825
  %v828 = vsub.f32 %v812, %v825
  %v829 = vsub.f32 %v813, %v825
  %v830 = vmul.f32 %v826, %v826
  %v831 = vmul.f32 %v827, %v827
  %v832 = vmul.f32 %v828, %v828
  %v833 = vmul.f32 %v829, %v829
  %v834 = vadd.f32 %v830, %v831
  %v835 = vadd.f32 %v834, %v832
  %v836 = vadd.f32 %v835, %v833
  %v837 = vrot.slane %v836, 4
  %v838 = vadd.f32 %v836, %v837
  %v839 = vrot.slane %v838, 2
  %v840 = vadd.f32 %v838, %v839
  %v841 = vrot.slane %v840, 1
  %v842 = vadd.f32 %v840, %v841
  %v843 = vmul.f32 %v842, 0.03125
  %v844 = vadd.f32 %v843, 1e-05
  %v845 = vrsqrt.pop %v844
  %v846 = vmul.f32 %v845, %v814
  %v847 = vlaneseq
  %v848 = vshrl.u32 %v847, 7
  %v849 = vsub.s32 0, %v848
  %v850 = vrot.slane %v846, %v849
  %v851 = vmul.f32 %v826, %v850
  %v852 = vmul.f32 %v827, %v850
  %v853 = vmul.f32 %v828, %v850
  %v854 = vmul.f32 %v829, %v850
  %v856 = vlaneseq
  %v857 = vshrl.u32 %v856, 7
  %v858 = vsub.s32 0, %v857
  %v859 = vrot.slane %v815, %v858
  %v861 = vadd.f32 %v851, %v859
  %v862 = vadd.f32 %v852, %v859
  %v863 = vadd.f32 %v853, %v859
  %v864 = vadd.f32 %v854, %v859
  %vm865 = vcmp.ge.f32.partialorder %v861, 0.0
  %vm866 = vcmp.ge.f32.partialorder %v862, 0.0
  %vm867 = vcmp.ge.f32.partialorder %v863, 0.0
  %vm868 = vcmp.ge.f32.partialorder %v864, 0.0
  %v869 = vmul.f32 %v861, 0.01
  %v870 = vmul.f32 %v862, 0.01
  %v871 = vmul.f32 %v863, 0.01
  %v872 = vmul.f32 %v864, 0.01
  %v873 = vsel %vm865, %v861, %v869
  %v874 = vsel %vm866, %v862, %v870
  %v875 = vsel %vm867, %v863, %v871
  %v876 = vsel %vm868, %v864, %v872
  %v877 = vld [vmem:[%s7] sm:$0xff]
  %v878 = vld [vmem:[%s7 + $0x8] sm:$0xff]
  %v879 = vld [vmem:[%s7 + $0x10] sm:$0xff]
  %v880 = vld [vmem:[%s7 + $0x18] sm:$0xff]
  %v881 = vld [vmem:[%s7 + $0x20] sm:$0xff]
  %v882 = vld [vmem:[%s7 + $0x28] sm:$0xff]
  %v883 = vld [vmem:[%s7 + $0x30] sm:$0xff]
  %v884 = vld [vmem:[%s7 + $0x38] sm:$0xff]
  %v885 = vld [vmem:[%s7 + $0x40] sm:$0xff]
  %v886 = vld [vmem:[%s7 + $0x48] sm:$0xff]
  %v887 = vld [vmem:[%s7 + $0x50] sm:$0xff]
  %v888 = vld [vmem:[%s7 + $0x58] sm:$0xff]
  %v889 = vld [vmem:[%s7 + $0x60] sm:$0xff]
  %v890 = vld [vmem:[%s7 + $0x68] sm:$0xff]
  %v891 = vld [vmem:[%s7 + $0x70] sm:$0xff]
  %v892 = vld [vmem:[%s7 + $0x78] sm:$0xff]
  %v893 = vld [vmem:[%s7 + $0x80] sm:$0xff]
  %v894 = vld [vmem:[%s7 + $0x88] sm:$0xff]
  %v895 = vld [vmem:[%s7 + $0x90] sm:$0xff]
  %v896 = vld [vmem:[%s7 + $0x98] sm:$0xff]
  %v897 = vld [vmem:[%s7 + $0xa0] sm:$0xff]
  %v898 = vld [vmem:[%s7 + $0xa8] sm:$0xff]
  %v899 = vld [vmem:[%s7 + $0xb0] sm:$0xff]
  %v900 = vld [vmem:[%s7 + $0xb8] sm:$0xff]
  %v901 = vld [vmem:[%s7 + $0xc0] sm:$0xff]
  %v902 = vld [vmem:[%s7 + $0xc8] sm:$0xff]
  %v903 = vld [vmem:[%s7 + $0xd0] sm:$0xff]
  %v904 = vld [vmem:[%s7 + $0xd8] sm:$0xff]
  %v905 = vld [vmem:[%s7 + $0xe0] sm:$0xff]
  %v906 = vld [vmem:[%s7 + $0xe8] sm:$0xff]
  %v907 = vld [vmem:[%s7 + $0xf0] sm:$0xff]
  %v908 = vld [vmem:[%s7 + $0xf8] sm:$0xff]
  %v909 = vld [vmem:[%s7 + $0x100] sm:$0xff]
  %v910 = vld [vmem:[%s7 + $0x108] sm:$0xff]
  %v911 = vld [vmem:[%s7 + $0x110] sm:$0xff]
  %v912 = vld [vmem:[%s7 + $0x118] sm:$0xff]
  %v913 = vld [vmem:[%s7 + $0x120] sm:$0xff]
  %v914 = vld [vmem:[%s7 + $0x128] sm:$0xff]
  %v915 = vld [vmem:[%s7 + $0x130] sm:$0xff]
  %v916 = vld [vmem:[%s7 + $0x138] sm:$0xff]
  %v917 = vld [vmem:[%s7 + $0x140] sm:$0xff]
  %v918 = vld [vmem:[%s7 + $0x148] sm:$0xff]
  %v919 = vld [vmem:[%s7 + $0x150] sm:$0xff]
  %v920 = vld [vmem:[%s7 + $0x158] sm:$0xff]
  %v921 = vld [vmem:[%s7 + $0x160] sm:$0xff]
  %v922 = vld [vmem:[%s7 + $0x168] sm:$0xff]
  %v923 = vld [vmem:[%s7 + $0x170] sm:$0xff]
  %v924 = vld [vmem:[%s7 + $0x178] sm:$0xff]
  %v925 = vld [vmem:[%s7 + $0x180] sm:$0xff]
  %v926 = vld [vmem:[%s7 + $0x188] sm:$0xff]
  %v927 = vld [vmem:[%s7 + $0x190] sm:$0xff]
  %v928 = vld [vmem:[%s7 + $0x198] sm:$0xff]
  %v929 = vld [vmem:[%s7 + $0x1a0] sm:$0xff]
  %v930 = vld [vmem:[%s7 + $0x1a8] sm:$0xff]
  %v931 = vld [vmem:[%s7 + $0x1b0] sm:$0xff]
  %v932 = vld [vmem:[%s7 + $0x1b8] sm:$0xff]
  %v933 = vld [vmem:[%s7 + $0x1c0] sm:$0xff]
  %v934 = vld [vmem:[%s7 + $0x1c8] sm:$0xff]
  %v935 = vld [vmem:[%s7 + $0x1d0] sm:$0xff]
  %v936 = vld [vmem:[%s7 + $0x1d8] sm:$0xff]
  %v937 = vld [vmem:[%s7 + $0x1e0] sm:$0xff]
  %v938 = vld [vmem:[%s7 + $0x1e8] sm:$0xff]
  %v939 = vld [vmem:[%s7 + $0x1f0] sm:$0xff]
  %v940 = vld [vmem:[%s7 + $0x1f8] sm:$0xff]
  %v941 = vpack.c.bf16 %v873, %v873
  %v942 = vpack.c.bf16 %v874, %v874
  %v959 = vunpack.c.l.b16 %v893
  %v960 = vunpack.c.h.b16 %v893
  %v961 = vunpack.c.l.b16 %v894
  %v962 = vunpack.c.h.b16 %v894
  %v963 = vunpack.c.l.b16 %v895
  %v964 = vunpack.c.h.b16 %v895
  %v965 = vunpack.c.l.b16 %v896
  %v966 = vunpack.c.h.b16 %v896
  %v967 = vunpack.c.l.b16 %v897
  %v968 = vunpack.c.h.b16 %v897
  %v969 = vunpack.c.l.b16 %v898
  %v970 = vunpack.c.h.b16 %v898
  %v971 = vunpack.c.l.b16 %v899
  %v972 = vunpack.c.h.b16 %v899
  %v973 = vunpack.c.l.b16 %v900
  %v974 = vunpack.c.h.b16 %v900
  %v975 = vunpack.c.l.b16 %v901
  %v976 = vunpack.c.h.b16 %v901
  %v977 = vunpack.c.l.b16 %v902
  %v978 = vunpack.c.h.b16 %v902
  %v979 = vunpack.c.l.b16 %v903
  %v980 = vunpack.c.h.b16 %v903
  %v981 = vunpack.c.l.b16 %v904
  %v982 = vunpack.c.h.b16 %v904
  %v983 = vunpack.c.l.b16 %v905
  %v984 = vunpack.c.h.b16 %v905
  %v985 = vunpack.c.l.b16 %v906
  %v986 = vunpack.c.h.b16 %v906
  %v987 = vunpack.c.l.b16 %v907
  %v988 = vunpack.c.h.b16 %v907
  %v989 = vunpack.c.l.b16 %v908
  %v990 = vunpack.c.h.b16 %v908
  %v991 = vpack.c.b16 %v961, %v959
  %v992 = vpack.c.b16 %v962, %v960
  %v993 = vpack.c.b16 %v965, %v963
  %v994 = vpack.c.b16 %v966, %v964
  %v995 = vpack.c.b16 %v969, %v967
  %v996 = vpack.c.b16 %v970, %v968
  %v997 = vpack.c.b16 %v973, %v971
  %v998 = vpack.c.b16 %v974, %v972
  %v999 = vpack.c.b16 %v977, %v975
  %v1000 = vpack.c.b16 %v978, %v976
  %v1001 = vpack.c.b16 %v981, %v979
  %v1002 = vpack.c.b16 %v982, %v980
  %v1003 = vpack.c.b16 %v985, %v983
  %v1004 = vpack.c.b16 %v986, %v984
  %v1005 = vpack.c.b16 %v989, %v987
  %v1006 = vpack.c.b16 %v990, %v988
  %1023 = vmatprep.subr.bf16.mxu0 %v992
  %1024 = vmatpush1.bf16.msra.mxu0 %v991
  %1025 = vmatprep.subr.bf16.mxu0 %v994
  %1026 = vmatpush1.bf16.msra.mxu0 %v993
  %1027 = vmatprep.subr.bf16.mxu0 %v996
  %1028 = vmatpush1.bf16.msra.mxu0 %v995
  %1029 = vmatprep.subr.bf16.mxu0 %v998
  %1030 = vmatpush1.bf16.msra.mxu0 %v997
  %1031 = vmatprep.subr.bf16.mxu0 %v1000
  %1032 = vmatpush1.bf16.msra.mxu0 %v999
  %1033 = vmatprep.subr.bf16.mxu0 %v1002
  %1034 = vmatpush1.bf16.msra.mxu0 %v1001
  %1035 = vmatprep.subr.bf16.mxu0 %v1004
  %1036 = vmatpush1.bf16.msra.mxu0 %v1003
  %1037 = vmatprep.subr.bf16.mxu0 %v1006
  %1038 = vmatpush1.bf16.msra.mxu0 %v1005
  %1039 = vmatprep.subr.bf16.mxu0 0
  %1040 = vmatpush1.bf16.msra.mxu0 0
  %1041 = vmatprep.subr.bf16.mxu0 0
  %1042 = vmatpush1.bf16.msra.mxu0 0
  %1043 = vmatprep.subr.bf16.mxu0 0
  %1044 = vmatpush1.bf16.msra.mxu0 0
  %1045 = vmatprep.subr.bf16.mxu0 0
  %1046 = vmatpush1.bf16.msra.mxu0 0
  %1047 = vmatprep.subr.bf16.mxu0 0
  %1048 = vmatpush1.bf16.msra.mxu0 0
  %1049 = vmatprep.subr.bf16.mxu0 0
  %1050 = vmatpush1.bf16.msra.mxu0 0
  %1051 = vmatprep.subr.bf16.mxu0 0
  %1052 = vmatpush1.bf16.msra.mxu0 0
  %1053 = vmatprep.subr.bf16.mxu0 0
  %1054 = vmatpush1.bf16.msra.mxu0 0
  %1055 = vmatprep.mubr.bf16.mxu0 0
  %1056 = vmatmul.mubr.bf16.gmra.mrb[0].mxu0 %v942
  %v1057 = vpop.f32.mrb[0].mxu0
  %v1058 = vadd.f32 0.0, %v1057
  %v1059 = vpop.f32.mrb[0].mxu0
  %v1060 = vadd.f32 0.0, %v1059
  %v1061 = vpop.f32.mrb[0].mxu0
  %v1062 = vpop.f32.mrb[0].mxu0
  %1063 = vdwg.mxu0
  %v1080 = vunpack.c.l.b16 %v877
  %v1081 = vunpack.c.h.b16 %v877
  %v1082 = vunpack.c.l.b16 %v878
  %v1083 = vunpack.c.h.b16 %v878
  %v1084 = vunpack.c.l.b16 %v879
  %v1085 = vunpack.c.h.b16 %v879
  %v1086 = vunpack.c.l.b16 %v880
  %v1087 = vunpack.c.h.b16 %v880
  %v1088 = vunpack.c.l.b16 %v881
  %v1089 = vunpack.c.h.b16 %v881
  %v1090 = vunpack.c.l.b16 %v882
  %v1091 = vunpack.c.h.b16 %v882
  %v1092 = vunpack.c.l.b16 %v883
  %v1093 = vunpack.c.h.b16 %v883
  %v1094 = vunpack.c.l.b16 %v884
  %v1095 = vunpack.c.h.b16 %v884
  %v1096 = vunpack.c.l.b16 %v885
  %v1097 = vunpack.c.h.b16 %v885
  %v1098 = vunpack.c.l.b16 %v886
  %v1099 = vunpack.c.h.b16 %v886
  %v1100 = vunpack.c.l.b16 %v887
  %v1101 = vunpack.c.h.b16 %v887
  %v1102 = vunpack.c.l.b16 %v888
  %v1103 = vunpack.c.h.b16 %v888
  %v1104 = vunpack.c.l.b16 %v889
  %v1105 = vunpack.c.h.b16 %v889
  %v1106 = vunpack.c.l.b16 %v890
  %v1107 = vunpack.c.h.b16 %v890
  %v1108 = vunpack.c.l.b16 %v891
  %v1109 = vunpack.c.h.b16 %v891
  %v1110 = vunpack.c.l.b16 %v892
  %v1111 = vunpack.c.h.b16 %v892
  %v1112 = vpack.c.b16 %v1082, %v1080
  %v1113 = vpack.c.b16 %v1083, %v1081
  %v1114 = vpack.c.b16 %v1086, %v1084
  %v1115 = vpack.c.b16 %v1087, %v1085
  %v1116 = vpack.c.b16 %v1090, %v1088
  %v1117 = vpack.c.b16 %v1091, %v1089
  %v1118 = vpack.c.b16 %v1094, %v1092
  %v1119 = vpack.c.b16 %v1095, %v1093
  %v1120 = vpack.c.b16 %v1098, %v1096
  %v1121 = vpack.c.b16 %v1099, %v1097
  %v1122 = vpack.c.b16 %v1102, %v1100
  %v1123 = vpack.c.b16 %v1103, %v1101
  %v1124 = vpack.c.b16 %v1106, %v1104
  %v1125 = vpack.c.b16 %v1107, %v1105
  %v1126 = vpack.c.b16 %v1110, %v1108
  %v1127 = vpack.c.b16 %v1111, %v1109
  %1144 = vmatprep.subr.bf16.mxu0 %v1113
  %1145 = vmatpush1.bf16.msra.mxu0 %v1112
  %1146 = vmatprep.subr.bf16.mxu0 %v1115
  %1147 = vmatpush1.bf16.msra.mxu0 %v1114
  %1148 = vmatprep.subr.bf16.mxu0 %v1117
  %1149 = vmatpush1.bf16.msra.mxu0 %v1116
  %1150 = vmatprep.subr.bf16.mxu0 %v1119
  %1151 = vmatpush1.bf16.msra.mxu0 %v1118
  %1152 = vmatprep.subr.bf16.mxu0 %v1121
  %1153 = vmatpush1.bf16.msra.mxu0 %v1120
  %1154 = vmatprep.subr.bf16.mxu0 %v1123
  %1155 = vmatpush1.bf16.msra.mxu0 %v1122
  %1156 = vmatprep.subr.bf16.mxu0 %v1125
  %1157 = vmatpush1.bf16.msra.mxu0 %v1124
  %1158 = vmatprep.subr.bf16.mxu0 %v1127
  %1159 = vmatpush1.bf16.msra.mxu0 %v1126
  %1160 = vmatprep.subr.bf16.mxu0 0
  %1161 = vmatpush1.bf16.msra.mxu0 0
  %1162 = vmatprep.subr.bf16.mxu0 0
  %1163 = vmatpush1.bf16.msra.mxu0 0
  %1164 = vmatprep.subr.bf16.mxu0 0
  %1165 = vmatpush1.bf16.msra.mxu0 0
  %1166 = vmatprep.subr.bf16.mxu0 0
  %1167 = vmatpush1.bf16.msra.mxu0 0
  %1168 = vmatprep.subr.bf16.mxu0 0
  %1169 = vmatpush1.bf16.msra.mxu0 0
  %1170 = vmatprep.subr.bf16.mxu0 0
  %1171 = vmatpush1.bf16.msra.mxu0 0
  %1172 = vmatprep.subr.bf16.mxu0 0
  %1173 = vmatpush1.bf16.msra.mxu0 0
  %1174 = vmatprep.subr.bf16.mxu0 0
  %1175 = vmatpush1.bf16.msra.mxu0 0
  %1176 = vmatprep.mubr.bf16.mxu0 0
  %1177 = vmatmul.mubr.bf16.gmra.mrb[0].mxu0 %v941
  %v1178 = vpop.f32.mrb[0].mxu0
  %v1179 = vadd.f32 %v1058, %v1178
  %v1180 = vpop.f32.mrb[0].mxu0
  %v1181 = vadd.f32 %v1060, %v1180
  %v1182 = vpop.f32.mrb[0].mxu0
  %v1183 = vpop.f32.mrb[0].mxu0
  %1184 = vdwg.mxu0
  %v1185 = vpack.c.bf16 %v875, %v875
  %v1202 = vunpack.c.l.b16 %v909
  %v1203 = vunpack.c.h.b16 %v909
  %v1204 = vunpack.c.l.b16 %v910
  %v1205 = vunpack.c.h.b16 %v910
  %v1206 = vunpack.c.l.b16 %v911
  %v1207 = vunpack.c.h.b16 %v911
  %v1208 = vunpack.c.l.b16 %v912
  %v1209 = vunpack.c.h.b16 %v912
  %v1210 = vunpack.c.l.b16 %v913
  %v1211 = vunpack.c.h.b16 %v913
  %v1212 = vunpack.c.l.b16 %v914
  %v1213 = vunpack.c.h.b16 %v914
  %v1214 = vunpack.c.l.b16 %v915
  %v1215 = vunpack.c.h.b16 %v915
  %v1216 = vunpack.c.l.b16 %v916
  %v1217 = vunpack.c.h.b16 %v916
  %v1218 = vunpack.c.l.b16 %v917
  %v1219 = vunpack.c.h.b16 %v917
  %v1220 = vunpack.c.l.b16 %v918
  %v1221 = vunpack.c.h.b16 %v918
  %v1222 = vunpack.c.l.b16 %v919
  %v1223 = vunpack.c.h.b16 %v919
  %v1224 = vunpack.c.l.b16 %v920
  %v1225 = vunpack.c.h.b16 %v920
  %v1226 = vunpack.c.l.b16 %v921
  %v1227 = vunpack.c.h.b16 %v921
  %v1228 = vunpack.c.l.b16 %v922
  %v1229 = vunpack.c.h.b16 %v922
  %v1230 = vunpack.c.l.b16 %v923
  %v1231 = vunpack.c.h.b16 %v923
  %v1232 = vunpack.c.l.b16 %v924
  %v1233 = vunpack.c.h.b16 %v924
  %v1234 = vpack.c.b16 %v1204, %v1202
  %v1235 = vpack.c.b16 %v1205, %v1203
  %v1236 = vpack.c.b16 %v1208, %v1206
  %v1237 = vpack.c.b16 %v1209, %v1207
  %v1238 = vpack.c.b16 %v1212, %v1210
  %v1239 = vpack.c.b16 %v1213, %v1211
  %v1240 = vpack.c.b16 %v1216, %v1214
  %v1241 = vpack.c.b16 %v1217, %v1215
  %v1242 = vpack.c.b16 %v1220, %v1218
  %v1243 = vpack.c.b16 %v1221, %v1219
  %v1244 = vpack.c.b16 %v1224, %v1222
  %v1245 = vpack.c.b16 %v1225, %v1223
  %v1246 = vpack.c.b16 %v1228, %v1226
  %v1247 = vpack.c.b16 %v1229, %v1227
  %v1248 = vpack.c.b16 %v1232, %v1230
  %v1249 = vpack.c.b16 %v1233, %v1231
  %1266 = vmatprep.subr.bf16.mxu0 %v1235
  %1267 = vmatpush1.bf16.msra.mxu0 %v1234
  %1268 = vmatprep.subr.bf16.mxu0 %v1237
  %1269 = vmatpush1.bf16.msra.mxu0 %v1236
  %1270 = vmatprep.subr.bf16.mxu0 %v1239
  %1271 = vmatpush1.bf16.msra.mxu0 %v1238
  %1272 = vmatprep.subr.bf16.mxu0 %v1241
  %1273 = vmatpush1.bf16.msra.mxu0 %v1240
  %1274 = vmatprep.subr.bf16.mxu0 %v1243
  %1275 = vmatpush1.bf16.msra.mxu0 %v1242
  %1276 = vmatprep.subr.bf16.mxu0 %v1245
  %1277 = vmatpush1.bf16.msra.mxu0 %v1244
  %1278 = vmatprep.subr.bf16.mxu0 %v1247
  %1279 = vmatpush1.bf16.msra.mxu0 %v1246
  %1280 = vmatprep.subr.bf16.mxu0 %v1249
  %1281 = vmatpush1.bf16.msra.mxu0 %v1248
  %1282 = vmatprep.subr.bf16.mxu0 0
  %1283 = vmatpush1.bf16.msra.mxu0 0
  %1284 = vmatprep.subr.bf16.mxu0 0
  %1285 = vmatpush1.bf16.msra.mxu0 0
  %1286 = vmatprep.subr.bf16.mxu0 0
  %1287 = vmatpush1.bf16.msra.mxu0 0
  %1288 = vmatprep.subr.bf16.mxu0 0
  %1289 = vmatpush1.bf16.msra.mxu0 0
  %1290 = vmatprep.subr.bf16.mxu0 0
  %1291 = vmatpush1.bf16.msra.mxu0 0
  %1292 = vmatprep.subr.bf16.mxu0 0
  %1293 = vmatpush1.bf16.msra.mxu0 0
  %1294 = vmatprep.subr.bf16.mxu0 0
  %1295 = vmatpush1.bf16.msra.mxu0 0
  %1296 = vmatprep.subr.bf16.mxu0 0
  %1297 = vmatpush1.bf16.msra.mxu0 0
  %1298 = vmatprep.mubr.bf16.mxu0 0
  %1299 = vmatmul.mubr.bf16.gmra.mrb[0].mxu0 %v1185
  %v1300 = vpop.f32.mrb[0].mxu0
  %v1301 = vadd.f32 0.0, %v1300
  %v1302 = vpop.f32.mrb[0].mxu0
  %v1303 = vadd.f32 0.0, %v1302
  %v1304 = vpop.f32.mrb[0].mxu0
  %v1305 = vpop.f32.mrb[0].mxu0
  %1306 = vdwg.mxu0
  %v1307 = vadd.f32 %v1179, %v1301
  %v1308 = vadd.f32 %v1181, %v1303
  %v1309 = vpack.c.bf16 %v876, %v876
  %v1326 = vunpack.c.l.b16 %v925
  %v1327 = vunpack.c.h.b16 %v925
  %v1328 = vunpack.c.l.b16 %v926
  %v1329 = vunpack.c.h.b16 %v926
  %v1330 = vunpack.c.l.b16 %v927
  %v1331 = vunpack.c.h.b16 %v927
  %v1332 = vunpack.c.l.b16 %v928
  %v1333 = vunpack.c.h.b16 %v928
  %v1334 = vunpack.c.l.b16 %v929
  %v1335 = vunpack.c.h.b16 %v929
  %v1336 = vunpack.c.l.b16 %v930
  %v1337 = vunpack.c.h.b16 %v930
  %v1338 = vunpack.c.l.b16 %v931
  %v1339 = vunpack.c.h.b16 %v931
  %v1340 = vunpack.c.l.b16 %v932
  %v1341 = vunpack.c.h.b16 %v932
  %v1342 = vunpack.c.l.b16 %v933
  %v1343 = vunpack.c.h.b16 %v933
  %v1344 = vunpack.c.l.b16 %v934
  %v1345 = vunpack.c.h.b16 %v934
  %v1346 = vunpack.c.l.b16 %v935
  %v1347 = vunpack.c.h.b16 %v935
  %v1348 = vunpack.c.l.b16 %v936
  %v1349 = vunpack.c.h.b16 %v936
  %v1350 = vunpack.c.l.b16 %v937
  %v1351 = vunpack.c.h.b16 %v937
  %v1352 = vunpack.c.l.b16 %v938
  %v1353 = vunpack.c.h.b16 %v938
  %v1354 = vunpack.c.l.b16 %v939
  %v1355 = vunpack.c.h.b16 %v939
  %v1356 = vunpack.c.l.b16 %v940
  %v1357 = vunpack.c.h.b16 %v940
  %v1358 = vpack.c.b16 %v1328, %v1326
  %v1359 = vpack.c.b16 %v1329, %v1327
  %v1360 = vpack.c.b16 %v1332, %v1330
  %v1361 = vpack.c.b16 %v1333, %v1331
  %v1362 = vpack.c.b16 %v1336, %v1334
  %v1363 = vpack.c.b16 %v1337, %v1335
  %v1364 = vpack.c.b16 %v1340, %v1338
  %v1365 = vpack.c.b16 %v1341, %v1339
  %v1366 = vpack.c.b16 %v1344, %v1342
  %v1367 = vpack.c.b16 %v1345, %v1343
  %v1368 = vpack.c.b16 %v1348, %v1346
  %v1369 = vpack.c.b16 %v1349, %v1347
  %v1370 = vpack.c.b16 %v1352, %v1350
  %v1371 = vpack.c.b16 %v1353, %v1351
  %v1372 = vpack.c.b16 %v1356, %v1354
  %v1373 = vpack.c.b16 %v1357, %v1355
  %1390 = vmatprep.subr.bf16.mxu0 %v1359
  %1391 = vmatpush1.bf16.msra.mxu0 %v1358
  %1392 = vmatprep.subr.bf16.mxu0 %v1361
  %1393 = vmatpush1.bf16.msra.mxu0 %v1360
  %1394 = vmatprep.subr.bf16.mxu0 %v1363
  %1395 = vmatpush1.bf16.msra.mxu0 %v1362
  %1396 = vmatprep.subr.bf16.mxu0 %v1365
  %1397 = vmatpush1.bf16.msra.mxu0 %v1364
  %1398 = vmatprep.subr.bf16.mxu0 %v1367
  %1399 = vmatpush1.bf16.msra.mxu0 %v1366
  %1400 = vmatprep.subr.bf16.mxu0 %v1369
  %1401 = vmatpush1.bf16.msra.mxu0 %v1368
  %1402 = vmatprep.subr.bf16.mxu0 %v1371
  %1403 = vmatpush1.bf16.msra.mxu0 %v1370
  %1404 = vmatprep.subr.bf16.mxu0 %v1373
  %1405 = vmatpush1.bf16.msra.mxu0 %v1372
  %1406 = vmatprep.subr.bf16.mxu0 0
  %1407 = vmatpush1.bf16.msra.mxu0 0
  %1408 = vmatprep.subr.bf16.mxu0 0
  %1409 = vmatpush1.bf16.msra.mxu0 0
  %1410 = vmatprep.subr.bf16.mxu0 0
  %1411 = vmatpush1.bf16.msra.mxu0 0
  %1412 = vmatprep.subr.bf16.mxu0 0
  %1413 = vmatpush1.bf16.msra.mxu0 0
  %1414 = vmatprep.subr.bf16.mxu0 0
  %1415 = vmatpush1.bf16.msra.mxu0 0
  %1416 = vmatprep.subr.bf16.mxu0 0
  %1417 = vmatpush1.bf16.msra.mxu0 0
  %1418 = vmatprep.subr.bf16.mxu0 0
  %1419 = vmatpush1.bf16.msra.mxu0 0
  %1420 = vmatprep.subr.bf16.mxu0 0
  %1421 = vmatpush1.bf16.msra.mxu0 0
  %1422 = vmatprep.mubr.bf16.mxu0 0
  %1423 = vmatmul.mubr.bf16.gmra.mrb[0].mxu0 %v1309
  %v1424 = vpop.f32.mrb[0].mxu0
  %v1425 = vadd.f32 0.0, %v1424
  %v1426 = vpop.f32.mrb[0].mxu0
  %v1427 = vadd.f32 0.0, %v1426
  %v1428 = vpop.f32.mrb[0].mxu0
  %v1429 = vpop.f32.mrb[0].mxu0
  %1430 = vdwg.mxu0
  %v1431 = vadd.f32 %v1307, %v1425
  %v1432 = vadd.f32 %v1308, %v1427
  %v1433 = vld [vmem:[%s8] sm:$0x3]
  %v1434 = vld [vmem:[%s9] sm:$0x3]
  %v1435 = vrot.slane %v1431, 4
  %v1436 = vadd.f32 %v1431, %v1435
  %v1437 = vrot.slane %v1436, 2
  %v1438 = vadd.f32 %v1436, %v1437
  %v1439 = vrot.slane %v1438, 1
  %v1440 = vadd.f32 %v1438, %v1439
  %v1441 = vrot.slane %v1432, 4
  %v1442 = vadd.f32 %v1432, %v1441
  %v1443 = vrot.slane %v1442, 2
  %v1444 = vadd.f32 %v1442, %v1443
  %v1445 = vrot.slane %v1444, 1
  %v1446 = vadd.f32 %v1444, %v1445
  %v1447 = vmul.f32 %v1440, 0.125
  %v1448 = vmul.f32 %v1446, 0.125
  %v1449 = vsub.f32 %v1431, %v1447
  %v1450 = vsub.f32 %v1432, %v1448
  %v1451 = vmul.f32 %v1449, %v1449
  %v1452 = vmul.f32 %v1450, %v1450
  %v1453 = vrot.slane %v1451, 4
  %v1454 = vadd.f32 %v1451, %v1453
  %v1455 = vrot.slane %v1454, 2
  %v1456 = vadd.f32 %v1454, %v1455
  %v1457 = vrot.slane %v1456, 1
  %v1458 = vadd.f32 %v1456, %v1457
  %v1459 = vrot.slane %v1452, 4
  %v1460 = vadd.f32 %v1452, %v1459
  %v1461 = vrot.slane %v1460, 2
  %v1462 = vadd.f32 %v1460, %v1461
  %v1463 = vrot.slane %v1462, 1
  %v1464 = vadd.f32 %v1462, %v1463
  %v1465 = vmul.f32 %v1458, 0.125
  %v1466 = vmul.f32 %v1464, 0.125
  %v1467 = vadd.f32 %v1465, 1e-05
  %v1468 = vadd.f32 %v1466, 1e-05
  %v1469 = vrsqrt.pop %v1467
  %v1470 = vrsqrt.pop %v1468
  %v1472 = vlaneseq
  %v1473 = vshrl.u32 %v1472, 7
  %v1474 = vsub.s32 0, %v1473
  %v1475 = vrot.slane %v1433, %v1474
  %v1476 = vlaneseq
  %v1477 = vshrl.u32 %v1476, 7
  %v1478 = vsub.s32 1, %v1477
  %v1479 = vrot.slane %v1433, %v1478
  %v1482 = vmul.f32 %v1469, %v1475
  %v1483 = vmul.f32 %v1470, %v1479
  %v1484 = vlaneseq
  %v1485 = vshrl.u32 %v1484, 7
  %v1486 = vsub.s32 0, %v1485
  %v1487 = vrot.slane %v1482, %v1486
  %v1488 = vlaneseq
  %v1489 = vshrl.u32 %v1488, 7
  %v1490 = vsub.s32 0, %v1489
  %v1491 = vrot.slane %v1483, %v1490
  %v1492 = vmul.f32 %v1449, %v1487
  %v1493 = vmul.f32 %v1450, %v1491
  %v1495 = vlaneseq
  %v1496 = vshrl.u32 %v1495, 7
  %v1497 = vsub.s32 0, %v1496
  %v1498 = vrot.slane %v1434, %v1497
  %v1499 = vlaneseq
  %v1500 = vshrl.u32 %v1499, 7
  %v1501 = vsub.s32 1, %v1500
  %v1502 = vrot.slane %v1434, %v1501
  %v1505 = vadd.f32 %v1492, %v1498
  %v1506 = vadd.f32 %v1493, %v1502
  %vm1507 = vcmp.ge.f32.partialorder %v1505, 0.0
  %vm1508 = vcmp.ge.f32.partialorder %v1506, 0.0
  %v1509 = vmul.f32 %v1505, 0.01
  %v1510 = vmul.f32 %v1506, 0.01
  %v1511 = vsel %vm1507, %v1505, %v1509
  %v1512 = vsel %vm1508, %v1506, %v1510
  %v1513 = vpack.c.bf16 %v1511, %v1511
  %v1514 = vpack.c.bf16 %v1512, %v1512
  %v1515 = vld [vmem:[%s10] sm:$0xff]
  %v1516 = vld [vmem:[%s10 + $0x8] sm:$0xff]
  %v1517 = vld [vmem:[%s10 + $0x10] sm:$0xff]
  %v1518 = vld [vmem:[%s10 + $0x18] sm:$0xff]
  %v1519 = vld [vmem:[%s10 + $0x20] sm:$0xff]
  %v1520 = vld [vmem:[%s10 + $0x28] sm:$0xff]
  %v1521 = vld [vmem:[%s10 + $0x30] sm:$0xff]
  %v1522 = vld [vmem:[%s10 + $0x38] sm:$0xff]
  %v1523 = vld [vmem:[%s10 + $0x40] sm:$0xff]
  %v1524 = vld [vmem:[%s10 + $0x48] sm:$0xff]
  %v1525 = vld [vmem:[%s10 + $0x50] sm:$0xff]
  %v1526 = vld [vmem:[%s10 + $0x58] sm:$0xff]
  %v1527 = vld [vmem:[%s10 + $0x60] sm:$0xff]
  %v1528 = vld [vmem:[%s10 + $0x68] sm:$0xff]
  %v1529 = vld [vmem:[%s10 + $0x70] sm:$0xff]
  %v1530 = vld [vmem:[%s10 + $0x78] sm:$0xff]
  %v1531 = vld [vmem:[%s10 + $0x80] sm:$0xff]
  %v1532 = vld [vmem:[%s10 + $0x88] sm:$0xff]
  %v1533 = vld [vmem:[%s10 + $0x90] sm:$0xff]
  %v1534 = vld [vmem:[%s10 + $0x98] sm:$0xff]
  %v1535 = vld [vmem:[%s10 + $0xa0] sm:$0xff]
  %v1536 = vld [vmem:[%s10 + $0xa8] sm:$0xff]
  %v1537 = vld [vmem:[%s10 + $0xb0] sm:$0xff]
  %v1538 = vld [vmem:[%s10 + $0xb8] sm:$0xff]
  %v1539 = vld [vmem:[%s10 + $0xc0] sm:$0xff]
  %v1540 = vld [vmem:[%s10 + $0xc8] sm:$0xff]
  %v1541 = vld [vmem:[%s10 + $0xd0] sm:$0xff]
  %v1542 = vld [vmem:[%s10 + $0xd8] sm:$0xff]
  %v1543 = vld [vmem:[%s10 + $0xe0] sm:$0xff]
  %v1544 = vld [vmem:[%s10 + $0xe8] sm:$0xff]
  %v1545 = vld [vmem:[%s10 + $0xf0] sm:$0xff]
  %v1546 = vld [vmem:[%s10 + $0xf8] sm:$0xff]
  %v1547 = vld [vmem:[%s10 + $0x100] sm:$0xff]
  %v1548 = vld [vmem:[%s10 + $0x108] sm:$0xff]
  %v1549 = vld [vmem:[%s10 + $0x110] sm:$0xff]
  %v1550 = vld [vmem:[%s10 + $0x118] sm:$0xff]
  %v1551 = vld [vmem:[%s10 + $0x120] sm:$0xff]
  %v1552 = vld [vmem:[%s10 + $0x128] sm:$0xff]
  %v1553 = vld [vmem:[%s10 + $0x130] sm:$0xff]
  %v1554 = vld [vmem:[%s10 + $0x138] sm:$0xff]
  %v1555 = vld [vmem:[%s10 + $0x140] sm:$0xff]
  %v1556 = vld [vmem:[%s10 + $0x148] sm:$0xff]
  %v1557 = vld [vmem:[%s10 + $0x150] sm:$0xff]
  %v1558 = vld [vmem:[%s10 + $0x158] sm:$0xff]
  %v1559 = vld [vmem:[%s10 + $0x160] sm:$0xff]
  %v1560 = vld [vmem:[%s10 + $0x168] sm:$0xff]
  %v1561 = vld [vmem:[%s10 + $0x170] sm:$0xff]
  %v1562 = vld [vmem:[%s10 + $0x178] sm:$0xff]
  %v1563 = vld [vmem:[%s10 + $0x180] sm:$0xff]
  %v1564 = vld [vmem:[%s10 + $0x188] sm:$0xff]
  %v1565 = vld [vmem:[%s10 + $0x190] sm:$0xff]
  %v1566 = vld [vmem:[%s10 + $0x198] sm:$0xff]
  %v1567 = vld [vmem:[%s10 + $0x1a0] sm:$0xff]
  %v1568 = vld [vmem:[%s10 + $0x1a8] sm:$0xff]
  %v1569 = vld [vmem:[%s10 + $0x1b0] sm:$0xff]
  %v1570 = vld [vmem:[%s10 + $0x1b8] sm:$0xff]
  %v1571 = vld [vmem:[%s10 + $0x1c0] sm:$0xff]
  %v1572 = vld [vmem:[%s10 + $0x1c8] sm:$0xff]
  %v1573 = vld [vmem:[%s10 + $0x1d0] sm:$0xff]
  %v1574 = vld [vmem:[%s10 + $0x1d8] sm:$0xff]
  %v1575 = vld [vmem:[%s10 + $0x1e0] sm:$0xff]
  %v1576 = vld [vmem:[%s10 + $0x1e8] sm:$0xff]
  %v1577 = vld [vmem:[%s10 + $0x1f0] sm:$0xff]
  %v1578 = vld [vmem:[%s10 + $0x1f8] sm:$0xff]
  %v1643 = vunpack.c.l.b16 %v1515
  %v1644 = vunpack.c.h.b16 %v1515
  %v1645 = vunpack.c.l.b16 %v1516
  %v1646 = vunpack.c.h.b16 %v1516
  %v1647 = vunpack.c.l.b16 %v1517
  %v1648 = vunpack.c.h.b16 %v1517
  %v1649 = vunpack.c.l.b16 %v1518
  %v1650 = vunpack.c.h.b16 %v1518
  %v1651 = vunpack.c.l.b16 %v1519
  %v1652 = vunpack.c.h.b16 %v1519
  %v1653 = vunpack.c.l.b16 %v1520
  %v1654 = vunpack.c.h.b16 %v1520
  %v1655 = vunpack.c.l.b16 %v1521
  %v1656 = vunpack.c.h.b16 %v1521
  %v1657 = vunpack.c.l.b16 %v1522
  %v1658 = vunpack.c.h.b16 %v1522
  %v1659 = vunpack.c.l.b16 %v1523
  %v1660 = vunpack.c.h.b16 %v1523
  %v1661 = vunpack.c.l.b16 %v1524
  %v1662 = vunpack.c.h.b16 %v1524
  %v1663 = vunpack.c.l.b16 %v1525
  %v1664 = vunpack.c.h.b16 %v1525
  %v1665 = vunpack.c.l.b16 %v1526
  %v1666 = vunpack.c.h.b16 %v1526
  %v1667 = vunpack.c.l.b16 %v1527
  %v1668 = vunpack.c.h.b16 %v1527
  %v1669 = vunpack.c.l.b16 %v1528
  %v1670 = vunpack.c.h.b16 %v1528
  %v1671 = vunpack.c.l.b16 %v1529
  %v1672 = vunpack.c.h.b16 %v1529
  %v1673 = vunpack.c.l.b16 %v1530
  %v1674 = vunpack.c.h.b16 %v1530
  %v1675 = vunpack.c.l.b16 %v1531
  %v1676 = vunpack.c.h.b16 %v1531
  %v1677 = vunpack.c.l.b16 %v1532
  %v1678 = vunpack.c.h.b16 %v1532
  %v1679 = vunpack.c.l.b16 %v1533
  %v1680 = vunpack.c.h.b16 %v1533
  %v1681 = vunpack.c.l.b16 %v1534
  %v1682 = vunpack.c.h.b16 %v1534
  %v1683 = vunpack.c.l.b16 %v1535
  %v1684 = vunpack.c.h.b16 %v1535
  %v1685 = vunpack.c.l.b16 %v1536
  %v1686 = vunpack.c.h.b16 %v1536
  %v1687 = vunpack.c.l.b16 %v1537
  %v1688 = vunpack.c.h.b16 %v1537
  %v1689 = vunpack.c.l.b16 %v1538
  %v1690 = vunpack.c.h.b16 %v1538
  %v1691 = vunpack.c.l.b16 %v1539
  %v1692 = vunpack.c.h.b16 %v1539
  %v1693 = vunpack.c.l.b16 %v1540
  %v1694 = vunpack.c.h.b16 %v1540
  %v1695 = vunpack.c.l.b16 %v1541
  %v1696 = vunpack.c.h.b16 %v1541
  %v1697 = vunpack.c.l.b16 %v1542
  %v1698 = vunpack.c.h.b16 %v1542
  %v1699 = vunpack.c.l.b16 %v1543
  %v1700 = vunpack.c.h.b16 %v1543
  %v1701 = vunpack.c.l.b16 %v1544
  %v1702 = vunpack.c.h.b16 %v1544
  %v1703 = vunpack.c.l.b16 %v1545
  %v1704 = vunpack.c.h.b16 %v1545
  %v1705 = vunpack.c.l.b16 %v1546
  %v1706 = vunpack.c.h.b16 %v1546
  %v1707 = vunpack.c.l.b16 %v1547
  %v1708 = vunpack.c.h.b16 %v1547
  %v1709 = vunpack.c.l.b16 %v1548
  %v1710 = vunpack.c.h.b16 %v1548
  %v1711 = vunpack.c.l.b16 %v1549
  %v1712 = vunpack.c.h.b16 %v1549
  %v1713 = vunpack.c.l.b16 %v1550
  %v1714 = vunpack.c.h.b16 %v1550
  %v1715 = vunpack.c.l.b16 %v1551
  %v1716 = vunpack.c.h.b16 %v1551
  %v1717 = vunpack.c.l.b16 %v1552
  %v1718 = vunpack.c.h.b16 %v1552
  %v1719 = vunpack.c.l.b16 %v1553
  %v1720 = vunpack.c.h.b16 %v1553
  %v1721 = vunpack.c.l.b16 %v1554
  %v1722 = vunpack.c.h.b16 %v1554
  %v1723 = vunpack.c.l.b16 %v1555
  %v1724 = vunpack.c.h.b16 %v1555
  %v1725 = vunpack.c.l.b16 %v1556
  %v1726 = vunpack.c.h.b16 %v1556
  %v1727 = vunpack.c.l.b16 %v1557
  %v1728 = vunpack.c.h.b16 %v1557
  %v1729 = vunpack.c.l.b16 %v1558
  %v1730 = vunpack.c.h.b16 %v1558
  %v1731 = vunpack.c.l.b16 %v1559
  %v1732 = vunpack.c.h.b16 %v1559
  %v1733 = vunpack.c.l.b16 %v1560
  %v1734 = vunpack.c.h.b16 %v1560
  %v1735 = vunpack.c.l.b16 %v1561
  %v1736 = vunpack.c.h.b16 %v1561
  %v1737 = vunpack.c.l.b16 %v1562
  %v1738 = vunpack.c.h.b16 %v1562
  %v1739 = vunpack.c.l.b16 %v1563
  %v1740 = vunpack.c.h.b16 %v1563
  %v1741 = vunpack.c.l.b16 %v1564
  %v1742 = vunpack.c.h.b16 %v1564
  %v1743 = vunpack.c.l.b16 %v1565
  %v1744 = vunpack.c.h.b16 %v1565
  %v1745 = vunpack.c.l.b16 %v1566
  %v1746 = vunpack.c.h.b16 %v1566
  %v1747 = vunpack.c.l.b16 %v1567
  %v1748 = vunpack.c.h.b16 %v1567
  %v1749 = vunpack.c.l.b16 %v1568
  %v1750 = vunpack.c.h.b16 %v1568
  %v1751 = vunpack.c.l.b16 %v1569
  %v1752 = vunpack.c.h.b16 %v1569
  %v1753 = vunpack.c.l.b16 %v1570
  %v1754 = vunpack.c.h.b16 %v1570
  %v1755 = vunpack.c.l.b16 %v1571
  %v1756 = vunpack.c.h.b16 %v1571
  %v1757 = vunpack.c.l.b16 %v1572
  %v1758 = vunpack.c.h.b16 %v1572
  %v1759 = vunpack.c.l.b16 %v1573
  %v1760 = vunpack.c.h.b16 %v1573
  %v1761 = vunpack.c.l.b16 %v1574
  %v1762 = vunpack.c.h.b16 %v1574
  %v1763 = vunpack.c.l.b16 %v1575
  %v1764 = vunpack.c.h.b16 %v1575
  %v1765 = vunpack.c.l.b16 %v1576
  %v1766 = vunpack.c.h.b16 %v1576
  %v1767 = vunpack.c.l.b16 %v1577
  %v1768 = vunpack.c.h.b16 %v1577
  %v1769 = vunpack.c.l.b16 %v1578
  %v1770 = vunpack.c.h.b16 %v1578
  %v1771 = vpack.c.b16 %v1647, %v1643
  %v1772 = vpack.c.b16 %v1648, %v1644
  %v1773 = vpack.c.b16 %v1649, %v1645
  %v1774 = vpack.c.b16 %v1650, %v1646
  %v1775 = vpack.c.b16 %v1655, %v1651
  %v1776 = vpack.c.b16 %v1656, %v1652
  %v1777 = vpack.c.b16 %v1657, %v1653
  %v1778 = vpack.c.b16 %v1658, %v1654
  %v1779 = vpack.c.b16 %v1663, %v1659
  %v1780 = vpack.c.b16 %v1664, %v1660
  %v1781 = vpack.c.b16 %v1665, %v1661
  %v1782 = vpack.c.b16 %v1666, %v1662
  %v1783 = vpack.c.b16 %v1671, %v1667
  %v1784 = vpack.c.b16 %v1672, %v1668
  %v1785 = vpack.c.b16 %v1673, %v1669
  %v1786 = vpack.c.b16 %v1674, %v1670
  %v1787 = vpack.c.b16 %v1679, %v1675
  %v1788 = vpack.c.b16 %v1680, %v1676
  %v1789 = vpack.c.b16 %v1681, %v1677
  %v1790 = vpack.c.b16 %v1682, %v1678
  %v1791 = vpack.c.b16 %v1687, %v1683
  %v1792 = vpack.c.b16 %v1688, %v1684
  %v1793 = vpack.c.b16 %v1689, %v1685
  %v1794 = vpack.c.b16 %v1690, %v1686
  %v1795 = vpack.c.b16 %v1695, %v1691
  %v1796 = vpack.c.b16 %v1696, %v1692
  %v1797 = vpack.c.b16 %v1697, %v1693
  %v1798 = vpack.c.b16 %v1698, %v1694
  %v1799 = vpack.c.b16 %v1703, %v1699
  %v1800 = vpack.c.b16 %v1704, %v1700
  %v1801 = vpack.c.b16 %v1705, %v1701
  %v1802 = vpack.c.b16 %v1706, %v1702
  %v1803 = vpack.c.b16 %v1711, %v1707
  %v1804 = vpack.c.b16 %v1712, %v1708
  %v1805 = vpack.c.b16 %v1713, %v1709
  %v1806 = vpack.c.b16 %v1714, %v1710
  %v1807 = vpack.c.b16 %v1719, %v1715
  %v1808 = vpack.c.b16 %v1720, %v1716
  %v1809 = vpack.c.b16 %v1721, %v1717
  %v1810 = vpack.c.b16 %v1722, %v1718
  %v1811 = vpack.c.b16 %v1727, %v1723
  %v1812 = vpack.c.b16 %v1728, %v1724
  %v1813 = vpack.c.b16 %v1729, %v1725
  %v1814 = vpack.c.b16 %v1730, %v1726
  %v1815 = vpack.c.b16 %v1735, %v1731
  %v1816 = vpack.c.b16 %v1736, %v1732
  %v1817 = vpack.c.b16 %v1737, %v1733
  %v1818 = vpack.c.b16 %v1738, %v1734
  %v1819 = vpack.c.b16 %v1743, %v1739
  %v1820 = vpack.c.b16 %v1744, %v1740
  %v1821 = vpack.c.b16 %v1745, %v1741
  %v1822 = vpack.c.b16 %v1746, %v1742
  %v1823 = vpack.c.b16 %v1751, %v1747
  %v1824 = vpack.c.b16 %v1752, %v1748
  %v1825 = vpack.c.b16 %v1753, %v1749
  %v1826 = vpack.c.b16 %v1754, %v1750
  %v1827 = vpack.c.b16 %v1759, %v1755
  %v1828 = vpack.c.b16 %v1760, %v1756
  %v1829 = vpack.c.b16 %v1761, %v1757
  %v1830 = vpack.c.b16 %v1762, %v1758
  %v1831 = vpack.c.b16 %v1767, %v1763
  %v1832 = vpack.c.b16 %v1768, %v1764
  %v1833 = vpack.c.b16 %v1769, %v1765
  %v1834 = vpack.c.b16 %v1770, %v1766
  %1899 = vmatprep.subr.bf16.mxu0 %v1772
  %1900 = vmatpush1.bf16.msra.mxu0 %v1771
  %1901 = vmatprep.subr.bf16.mxu0 %v1776
  %1902 = vmatpush1.bf16.msra.mxu0 %v1775
  %1903 = vmatprep.subr.bf16.mxu0 %v1780
  %1904 = vmatpush1.bf16.msra.mxu0 %v1779
  %1905 = vmatprep.subr.bf16.mxu0 %v1784
  %1906 = vmatpush1.bf16.msra.mxu0 %v1783
  %1907 = vmatprep.subr.bf16.mxu0 %v1788
  %1908 = vmatpush1.bf16.msra.mxu0 %v1787
  %1909 = vmatprep.subr.bf16.mxu0 %v1792
  %1910 = vmatpush1.bf16.msra.mxu0 %v1791
  %1911 = vmatprep.subr.bf16.mxu0 %v1796
  %1912 = vmatpush1.bf16.msra.mxu0 %v1795
  %1913 = vmatprep.subr.bf16.mxu0 %v1800
  %1914 = vmatpush1.bf16.msra.mxu0 %v1799
  %1915 = vmatprep.subr.bf16.mxu0 %v1804
  %1916 = vmatpush1.bf16.msra.mxu0 %v1803
  %1917 = vmatprep.subr.bf16.mxu0 %v1808
  %1918 = vmatpush1.bf16.msra.mxu0 %v1807
  %1919 = vmatprep.subr.bf16.mxu0 %v1812
  %1920 = vmatpush1.bf16.msra.mxu0 %v1811
  %1921 = vmatprep.subr.bf16.mxu0 %v1816
  %1922 = vmatpush1.bf16.msra.mxu0 %v1815
  %1923 = vmatprep.subr.bf16.mxu0 %v1820
  %1924 = vmatpush1.bf16.msra.mxu0 %v1819
  %1925 = vmatprep.subr.bf16.mxu0 %v1824
  %1926 = vmatpush1.bf16.msra.mxu0 %v1823
  %1927 = vmatprep.subr.bf16.mxu0 %v1828
  %1928 = vmatpush1.bf16.msra.mxu0 %v1827
  %1929 = vmatprep.subr.bf16.mxu0 %v1832
  %1930 = vmatpush1.bf16.msra.mxu0 %v1831
  %1931 = vmatprep.mubr.bf16.mxu0 %v1514
  %1932 = vmatmul.mubr.bf16.gmra.mrb[0].mxu0 %v1513
  %v1933 = vpop.f32.mrb[0].mxu0
  %v1934 = vadd.f32 0.0, %v1933
  %v1935 = vpop.f32.mrb[0].mxu0
  %v1936 = vadd.f32 0.0, %v1935
  %v1937 = vpop.f32.mrb[0].mxu0
  %v1938 = vpop.f32.mrb[0].mxu0
  %1939 = vdwg.mxu0
  %1940 = vmatprep.subr.bf16.mxu0 %v1774
  %1941 = vmatpush1.bf16.msra.mxu0 %v1773
  %1942 = vmatprep.subr.bf16.mxu0 %v1778
  %1943 = vmatpush1.bf16.msra.mxu0 %v1777
  %1944 = vmatprep.subr.bf16.mxu0 %v1782
  %1945 = vmatpush1.bf16.msra.mxu0 %v1781
  %1946 = vmatprep.subr.bf16.mxu0 %v1786
  %1947 = vmatpush1.bf16.msra.mxu0 %v1785
  %1948 = vmatprep.subr.bf16.mxu0 %v1790
  %1949 = vmatpush1.bf16.msra.mxu0 %v1789
  %1950 = vmatprep.subr.bf16.mxu0 %v1794
  %1951 = vmatpush1.bf16.msra.mxu0 %v1793
  %1952 = vmatprep.subr.bf16.mxu0 %v1798
  %1953 = vmatpush1.bf16.msra.mxu0 %v1797
  %1954 = vmatprep.subr.bf16.mxu0 %v1802
  %1955 = vmatpush1.bf16.msra.mxu0 %v1801
  %1956 = vmatprep.subr.bf16.mxu0 %v1806
  %1957 = vmatpush1.bf16.msra.mxu0 %v1805
  %1958 = vmatprep.subr.bf16.mxu0 %v1810
  %1959 = vmatpush1.bf16.msra.mxu0 %v1809
  %1960 = vmatprep.subr.bf16.mxu0 %v1814
  %1961 = vmatpush1.bf16.msra.mxu0 %v1813
  %1962 = vmatprep.subr.bf16.mxu0 %v1818
  %1963 = vmatpush1.bf16.msra.mxu0 %v1817
  %1964 = vmatprep.subr.bf16.mxu0 %v1822
  %1965 = vmatpush1.bf16.msra.mxu0 %v1821
  %1966 = vmatprep.subr.bf16.mxu0 %v1826
  %1967 = vmatpush1.bf16.msra.mxu0 %v1825
  %1968 = vmatprep.subr.bf16.mxu0 %v1830
  %1969 = vmatpush1.bf16.msra.mxu0 %v1829
  %1970 = vmatprep.subr.bf16.mxu0 %v1834
  %1971 = vmatpush1.bf16.msra.mxu0 %v1833
  %1972 = vmatprep.mubr.bf16.mxu0 %v1514
  %1973 = vmatmul.mubr.bf16.gmra.mrb[0].mxu0 %v1513
  %v1974 = vpop.f32.mrb[0].mxu0
  %v1975 = vadd.f32 0.0, %v1974
  %v1976 = vpop.f32.mrb[0].mxu0
  %v1977 = vadd.f32 0.0, %v1976
  %v1978 = vpop.f32.mrb[0].mxu0
  %v1979 = vpop.f32.mrb[0].mxu0
  %1980 = vdwg.mxu0
  %v1981 = vld [vmem:[%s11] sm:$0x1]
  %v1982 = vld [vmem:[%s12] sm:$0x1]
  %v1983 = vrot.slane %v1934, 4
  %v1984 = vadd.f32 %v1934, %v1983
  %v1985 = vrot.slane %v1984, 2
  %v1986 = vadd.f32 %v1984, %v1985
  %v1987 = vrot.slane %v1986, 1
  %v1988 = vadd.f32 %v1986, %v1987
  %v1989 = vrot.slane %v1936, 4
  %v1990 = vadd.f32 %v1936, %v1989
  %v1991 = vrot.slane %v1990, 2
  %v1992 = vadd.f32 %v1990, %v1991
  %v1993 = vrot.slane %v1992, 1
  %v1994 = vadd.f32 %v1992, %v1993
  %v1995 = vrot.slane %v1975, 4
  %v1996 = vadd.f32 %v1975, %v1995
  %v1997 = vrot.slane %v1996, 2
  %v1998 = vadd.f32 %v1996, %v1997
  %v1999 = vrot.slane %v1998, 1
  %v2000 = vadd.f32 %v1998, %v1999
  %v2001 = vrot.slane %v1977, 4
  %v2002 = vadd.f32 %v1977, %v2001
  %v2003 = vrot.slane %v2002, 2
  %v2004 = vadd.f32 %v2002, %v2003
  %v2005 = vrot.slane %v2004, 1
  %v2006 = vadd.f32 %v2004, %v2005
  %v2007 = vadd.f32 %v1988, %v1994
  %v2008 = vadd.f32 %v2007, %v2000
  %v2009 = vadd.f32 %v2008, %v2006
  %v2010 = vmul.f32 %v2009, 0.03125
  %v2011 = vlaneseq
  %v2012 = vshrl.u32 %v2011, 7
  %v2013 = vsub.s32 0, %v2012
  %v2014 = vrot.slane %v2010, %v2013
  %v2015 = vsub.f32 %v1934, %v2014
  %v2016 = vsub.f32 %v1936, %v2014
  %v2017 = vsub.f32 %v1975, %v2014
  %v2018 = vsub.f32 %v1977, %v2014
  %v2019 = vmul.f32 %v2015, %v2015
  %v2020 = vmul.f32 %v2016, %v2016
  %v2021 = vmul.f32 %v2017, %v2017
  %v2022 = vmul.f32 %v2018, %v2018
  %v2023 = vrot.slane %v2019, 4
  %v2024 = vadd.f32 %v2019, %v2023
  %v2025 = vrot.slane %v2024, 2
  %v2026 = vadd.f32 %v2024, %v2025
  %v2027 = vrot.slane %v2026, 1
  %v2028 = vadd.f32 %v2026, %v2027
  %v2029 = vrot.slane %v2020, 4
  %v2030 = vadd.f32 %v2020, %v2029
  %v2031 = vrot.slane %v2030, 2
  %v2032 = vadd.f32 %v2030, %v2031
  %v2033 = vrot.slane %v2032, 1
  %v2034 = vadd.f32 %v2032, %v2033
  %v2035 = vrot.slane %v2021, 4
  %v2036 = vadd.f32 %v2021, %v2035
  %v2037 = vrot.slane %v2036, 2
  %v2038 = vadd.f32 %v2036, %v2037
  %v2039 = vrot.slane %v2038, 1
  %v2040 = vadd.f32 %v2038, %v2039
  %v2041 = vrot.slane %v2022, 4
  %v2042 = vadd.f32 %v2022, %v2041
  %v2043 = vrot.slane %v2042, 2
  %v2044 = vadd.f32 %v2042, %v2043
  %v2045 = vrot.slane %v2044, 1
  %v2046 = vadd.f32 %v2044, %v2045
  %v2047 = vadd.f32 %v2028, %v2034
  %v2048 = vadd.f32 %v2047, %v2040
  %v2049 = vadd.f32 %v2048, %v2046
  %v2050 = vmul.f32 %v2049, 0.03125
  %v2051 = vadd.f32 %v2050, 1e-05
  %v2052 = vrsqrt.pop %v2051
  %v2053 = vmul.f32 %v2052, %v1981
  %v2054 = vlaneseq
  %v2055 = vshrl.u32 %v2054, 7
  %v2056 = vsub.s32 0, %v2055
  %v2057 = vrot.slane %v2053, %v2056
  %v2058 = vmul.f32 %v2015, %v2057
  %v2059 = vmul.f32 %v2016, %v2057
  %v2060 = vmul.f32 %v2017, %v2057
  %v2061 = vmul.f32 %v2018, %v2057
  %v2062 = vlaneseq
  %v2063 = vshrl.u32 %v2062, 7
  %v2064 = vsub.s32 0, %v2063
  %v2065 = vrot.slane %v1982, %v2064
  %v2066 = vadd.f32 %v2058, %v2065
  %v2067 = vadd.f32 %v2059, %v2065
  %v2068 = vadd.f32 %v2060, %v2065
  %v2069 = vadd.f32 %v2061, %v2065
  %vm2070 = vcmp.ge.f32.partialorder %v2066, 0.0
  %vm2071 = vcmp.ge.f32.partialorder %v2067, 0.0
  %vm2072 = vcmp.ge.f32.partialorder %v2068, 0.0
  %vm2073 = vcmp.ge.f32.partialorder %v2069, 0.0
  %v2074 = vmul.f32 %v2066, 0.01
  %v2075 = vmul.f32 %v2067, 0.01
  %v2076 = vmul.f32 %v2068, 0.01
  %v2077 = vmul.f32 %v2069, 0.01
  %v2078 = vsel %vm2070, %v2066, %v2074
  %v2079 = vsel %vm2071, %v2067, %v2075
  %v2080 = vsel %vm2072, %v2068, %v2076
  %v2081 = vsel %vm2073, %v2069, %v2077
  %v2082 = vld [vmem:[%s13] sm:$0xff]
  %v2083 = vld [vmem:[%s13 + $0x8] sm:$0xff]
  %v2084 = vld [vmem:[%s13 + $0x10] sm:$0xff]
  %v2085 = vld [vmem:[%s13 + $0x18] sm:$0xff]
  %v2086 = vld [vmem:[%s13 + $0x20] sm:$0xff]
  %v2087 = vld [vmem:[%s13 + $0x28] sm:$0xff]
  %v2088 = vld [vmem:[%s13 + $0x30] sm:$0xff]
  %v2089 = vld [vmem:[%s13 + $0x38] sm:$0xff]
  %v2090 = vld [vmem:[%s13 + $0x40] sm:$0xff]
  %v2091 = vld [vmem:[%s13 + $0x48] sm:$0xff]
  %v2092 = vld [vmem:[%s13 + $0x50] sm:$0xff]
  %v2093 = vld [vmem:[%s13 + $0x58] sm:$0xff]
  %v2094 = vld [vmem:[%s13 + $0x60] sm:$0xff]
  %v2095 = vld [vmem:[%s13 + $0x68] sm:$0xff]
  %v2096 = vld [vmem:[%s13 + $0x70] sm:$0xff]
  %v2097 = vld [vmem:[%s13 + $0x78] sm:$0xff]
  %v2098 = vpack.c.bf16 %v2078, %v2078
  %v2115 = vunpack.c.l.b16 %v2082
  %v2116 = vunpack.c.h.b16 %v2082
  %v2117 = vunpack.c.l.b16 %v2083
  %v2118 = vunpack.c.h.b16 %v2083
  %v2119 = vunpack.c.l.b16 %v2084
  %v2120 = vunpack.c.h.b16 %v2084
  %v2121 = vunpack.c.l.b16 %v2085
  %v2122 = vunpack.c.h.b16 %v2085
  %v2123 = vunpack.c.l.b16 %v2086
  %v2124 = vunpack.c.h.b16 %v2086
  %v2125 = vunpack.c.l.b16 %v2087
  %v2126 = vunpack.c.h.b16 %v2087
  %v2127 = vunpack.c.l.b16 %v2088
  %v2128 = vunpack.c.h.b16 %v2088
  %v2129 = vunpack.c.l.b16 %v2089
  %v2130 = vunpack.c.h.b16 %v2089
  %v2131 = vunpack.c.l.b16 %v2090
  %v2132 = vunpack.c.h.b16 %v2090
  %v2133 = vunpack.c.l.b16 %v2091
  %v2134 = vunpack.c.h.b16 %v2091
  %v2135 = vunpack.c.l.b16 %v2092
  %v2136 = vunpack.c.h.b16 %v2092
  %v2137 = vunpack.c.l.b16 %v2093
  %v2138 = vunpack.c.h.b16 %v2093
  %v2139 = vunpack.c.l.b16 %v2094
  %v2140 = vunpack.c.h.b16 %v2094
  %v2141 = vunpack.c.l.b16 %v2095
  %v2142 = vunpack.c.h.b16 %v2095
  %v2143 = vunpack.c.l.b16 %v2096
  %v2144 = vunpack.c.h.b16 %v2096
  %v2145 = vunpack.c.l.b16 %v2097
  %v2146 = vunpack.c.h.b16 %v2097
  %v2147 = vpack.c.b16 %v2117, %v2115
  %v2148 = vpack.c.b16 %v2118, %v2116
  %v2149 = vpack.c.b16 %v2121, %v2119
  %v2150 = vpack.c.b16 %v2122, %v2120
  %v2151 = vpack.c.b16 %v2125, %v2123
  %v2152 = vpack.c.b16 %v2126, %v2124
  %v2153 = vpack.c.b16 %v2129, %v2127
  %v2154 = vpack.c.b16 %v2130, %v2128
  %v2155 = vpack.c.b16 %v2133, %v2131
  %v2156 = vpack.c.b16 %v2134, %v2132
  %v2157 = vpack.c.b16 %v2137, %v2135
  %v2158 = vpack.c.b16 %v2138, %v2136
  %v2159 = vpack.c.b16 %v2141, %v2139
  %v2160 = vpack.c.b16 %v2142, %v2140
  %v2161 = vpack.c.b16 %v2145, %v2143
  %v2162 = vpack.c.b16 %v2146, %v2144
  %2179 = vmatprep.subr.bf16.mxu0 %v2148
  %2180 = vmatpush1.bf16.msra.mxu0 %v2147
  %2181 = vmatprep.subr.bf16.mxu0 %v2150
  %2182 = vmatpush1.bf16.msra.mxu0 %v2149
  %2183 = vmatprep.subr.bf16.mxu0 %v2152
  %2184 = vmatpush1.bf16.msra.mxu0 %v2151
  %2185 = vmatprep.subr.bf16.mxu0 %v2154
  %2186 = vmatpush1.bf16.msra.mxu0 %v2153
  %2187 = vmatprep.subr.bf16.mxu0 %v2156
  %2188 = vmatpush1.bf16.msra.mxu0 %v2155
  %2189 = vmatprep.subr.bf16.mxu0 %v2158
  %2190 = vmatpush1.bf16.msra.mxu0 %v2157
  %2191 = vmatprep.subr.bf16.mxu0 %v2160
  %2192 = vmatpush1.bf16.msra.mxu0 %v2159
  %2193 = vmatprep.subr.bf16.mxu0 %v2162
  %2194 = vmatpush1.bf16.msra.mxu0 %v2161
  %2195 = vmatprep.subr.bf16.mxu0 0
  %2196 = vmatpush1.bf16.msra.mxu0 0
  %2197 = vmatprep.subr.bf16.mxu0 0
  %2198 = vmatpush1.bf16.msra.mxu0 0
  %2199 = vmatprep.subr.bf16.mxu0 0
  %2200 = vmatpush1.bf16.msra.mxu0 0
  %2201 = vmatprep.subr.bf16.mxu0 0
  %2202 = vmatpush1.bf16.msra.mxu0 0
  %2203 = vmatprep.subr.bf16.mxu0 0
  %2204 = vmatpush1.bf16.msra.mxu0 0
  %2205 = vmatprep.subr.bf16.mxu0 0
  %2206 = vmatpush1.bf16.msra.mxu0 0
  %2207 = vmatprep.subr.bf16.mxu0 0
  %2208 = vmatpush1.bf16.msra.mxu0 0
  %2209 = vmatprep.subr.bf16.mxu0 0
  %2210 = vmatpush1.bf16.msra.mxu0 0
  %2211 = vmatprep.mubr.bf16.mxu0 0
  %2212 = vmatmul.mubr.bf16.gmra.mrb[0].mxu0 %v2098
  %v2213 = vpop.f32.mrb[0].mxu0
  %v2214 = vadd.f32 0.0, %v2213
  %v2215 = vpop.f32.mrb[0].mxu0
  %v2216 = vadd.f32 0.0, %v2215
  %v2217 = vpop.f32.mrb[0].mxu0
  %v2218 = vpop.f32.mrb[0].mxu0
  %2219 = vdwg.mxu0
  %v2220 = vpack.c.bf16 %v2079, %v2079
  %2221 = vmatprep.subr.bf16.mxu0 %v2148
  %2222 = vmatpush1.bf16.msra.mxu0 %v2147
  %2223 = vmatprep.subr.bf16.mxu0 %v2150
  %2224 = vmatpush1.bf16.msra.mxu0 %v2149
  %2225 = vmatprep.subr.bf16.mxu0 %v2152
  %2226 = vmatpush1.bf16.msra.mxu0 %v2151
  %2227 = vmatprep.subr.bf16.mxu0 %v2154
  %2228 = vmatpush1.bf16.msra.mxu0 %v2153
  %2229 = vmatprep.subr.bf16.mxu0 %v2156
  %2230 = vmatpush1.bf16.msra.mxu0 %v2155
  %2231 = vmatprep.subr.bf16.mxu0 %v2158
  %2232 = vmatpush1.bf16.msra.mxu0 %v2157
  %2233 = vmatprep.subr.bf16.mxu0 %v2160
  %2234 = vmatpush1.bf16.msra.mxu0 %v2159
  %2235 = vmatprep.subr.bf16.mxu0 %v2162
  %2236 = vmatpush1.bf16.msra.mxu0 %v2161
  %2237 = vmatprep.subr.bf16.mxu0 0
  %2238 = vmatpush1.bf16.msra.mxu0 0
  %2239 = vmatprep.subr.bf16.mxu0 0
  %2240 = vmatpush1.bf16.msra.mxu0 0
  %2241 = vmatprep.subr.bf16.mxu0 0
  %2242 = vmatpush1.bf16.msra.mxu0 0
  %2243 = vmatprep.subr.bf16.mxu0 0
  %2244 = vmatpush1.bf16.msra.mxu0 0
  %2245 = vmatprep.subr.bf16.mxu0 0
  %2246 = vmatpush1.bf16.msra.mxu0 0
  %2247 = vmatprep.subr.bf16.mxu0 0
  %2248 = vmatpush1.bf16.msra.mxu0 0
  %2249 = vmatprep.subr.bf16.mxu0 0
  %2250 = vmatpush1.bf16.msra.mxu0 0
  %2251 = vmatprep.subr.bf16.mxu0 0
  %2252 = vmatpush1.bf16.msra.mxu0 0
  %2253 = vmatprep.mubr.bf16.mxu0 0
  %2254 = vmatmul.mubr.bf16.gmra.mrb[0].mxu0 %v2220
  %v2255 = vpop.f32.mrb[0].mxu0
  %v2256 = vadd.f32 0.0, %v2255
  %v2257 = vpop.f32.mrb[0].mxu0
  %v2258 = vadd.f32 0.0, %v2257
  %v2259 = vpop.f32.mrb[0].mxu0
  %v2260 = vpop.f32.mrb[0].mxu0
  %2261 = vdwg.mxu0
  %v2262 = vpack.c.bf16 %v2080, %v2080
  %2263 = vmatprep.subr.bf16.mxu0 %v2148
  %2264 = vmatpush1.bf16.msra.mxu0 %v2147
  %2265 = vmatprep.subr.bf16.mxu0 %v2150
  %2266 = vmatpush1.bf16.msra.mxu0 %v2149
  %2267 = vmatprep.subr.bf16.mxu0 %v2152
  %2268 = vmatpush1.bf16.msra.mxu0 %v2151
  %2269 = vmatprep.subr.bf16.mxu0 %v2154
  %2270 = vmatpush1.bf16.msra.mxu0 %v2153
  %2271 = vmatprep.subr.bf16.mxu0 %v2156
  %2272 = vmatpush1.bf16.msra.mxu0 %v2155
  %2273 = vmatprep.subr.bf16.mxu0 %v2158
  %2274 = vmatpush1.bf16.msra.mxu0 %v2157
  %2275 = vmatprep.subr.bf16.mxu0 %v2160
  %2276 = vmatpush1.bf16.msra.mxu0 %v2159
  %2277 = vmatprep.subr.bf16.mxu0 %v2162
  %2278 = vmatpush1.bf16.msra.mxu0 %v2161
  %2279 = vmatprep.subr.bf16.mxu0 0
  %2280 = vmatpush1.bf16.msra.mxu0 0
  %2281 = vmatprep.subr.bf16.mxu0 0
  %2282 = vmatpush1.bf16.msra.mxu0 0
  %2283 = vmatprep.subr.bf16.mxu0 0
  %2284 = vmatpush1.bf16.msra.mxu0 0
  %2285 = vmatprep.subr.bf16.mxu0 0
  %2286 = vmatpush1.bf16.msra.mxu0 0
  %2287 = vmatprep.subr.bf16.mxu0 0
  %2288 = vmatpush1.bf16.msra.mxu0 0
  %2289 = vmatprep.subr.bf16.mxu0 0
  %2290 = vmatpush1.bf16.msra.mxu0 0
  %2291 = vmatprep.subr.bf16.mxu0 0
  %2292 = vmatpush1.bf16.msra.mxu0 0
  %2293 = vmatprep.subr.bf16.mxu0 0
  %2294 = vmatpush1.bf16.msra.mxu0 0
  %2295 = vmatprep.mubr.bf16.mxu0 0
  %2296 = vmatmul.mubr.bf16.gmra.mrb[0].mxu0 %v2262
  %v2297 = vpop.f32.mrb[0].mxu0
  %v2298 = vadd.f32 0.0, %v2297
  %v2299 = vpop.f32.mrb[0].mxu0
  %v2300 = vadd.f32 0.0, %v2299
  %v2301 = vpop.f32.mrb[0].mxu0
  %v2302 = vpop.f32.mrb[0].mxu0
  %2303 = vdwg.mxu0
  %v2304 = vpack.c.bf16 %v2081, %v2081
  %2305 = vmatprep.subr.bf16.mxu0 %v2148
  %2306 = vmatpush1.bf16.msra.mxu0 %v2147
  %2307 = vmatprep.subr.bf16.mxu0 %v2150
  %2308 = vmatpush1.bf16.msra.mxu0 %v2149
  %2309 = vmatprep.subr.bf16.mxu0 %v2152
  %2310 = vmatpush1.bf16.msra.mxu0 %v2151
  %2311 = vmatprep.subr.bf16.mxu0 %v2154
  %2312 = vmatpush1.bf16.msra.mxu0 %v2153
  %2313 = vmatprep.subr.bf16.mxu0 %v2156
  %2314 = vmatpush1.bf16.msra.mxu0 %v2155
  %2315 = vmatprep.subr.bf16.mxu0 %v2158
  %2316 = vmatpush1.bf16.msra.mxu0 %v2157
  %2317 = vmatprep.subr.bf16.mxu0 %v2160
  %2318 = vmatpush1.bf16.msra.mxu0 %v2159
  %2319 = vmatprep.subr.bf16.mxu0 %v2162
  %2320 = vmatpush1.bf16.msra.mxu0 %v2161
  %2321 = vmatprep.subr.bf16.mxu0 0
  %2322 = vmatpush1.bf16.msra.mxu0 0
  %2323 = vmatprep.subr.bf16.mxu0 0
  %2324 = vmatpush1.bf16.msra.mxu0 0
  %2325 = vmatprep.subr.bf16.mxu0 0
  %2326 = vmatpush1.bf16.msra.mxu0 0
  %2327 = vmatprep.subr.bf16.mxu0 0
  %2328 = vmatpush1.bf16.msra.mxu0 0
  %2329 = vmatprep.subr.bf16.mxu0 0
  %2330 = vmatpush1.bf16.msra.mxu0 0
  %2331 = vmatprep.subr.bf16.mxu0 0
  %2332 = vmatpush1.bf16.msra.mxu0 0
  %2333 = vmatprep.subr.bf16.mxu0 0
  %2334 = vmatpush1.bf16.msra.mxu0 0
  %2335 = vmatprep.subr.bf16.mxu0 0
  %2336 = vmatpush1.bf16.msra.mxu0 0
  %2337 = vmatprep.mubr.bf16.mxu0 0
  %2338 = vmatmul.mubr.bf16.gmra.mrb[0].mxu0 %v2304
  %v2339 = vpop.f32.mrb[0].mxu0
  %v2340 = vadd.f32 0.0, %v2339
  %v2341 = vpop.f32.mrb[0].mxu0
  %v2342 = vadd.f32 0.0, %v2341
  %v2343 = vpop.f32.mrb[0].mxu0
  %v2344 = vpop.f32.mrb[0].mxu0
  %2345 = vdwg.mxu0
  %v2346 = vld [vmem:[%s14] sm:$0x1]
  %v2347 = vld [vmem:[%s15] sm:$0x1]
  %v2348 = vrot.slane %v2214, 4
  %v2349 = vadd.f32 %v2214, %v2348
  %v2350 = vrot.slane %v2349, 2
  %v2351 = vadd.f32 %v2349, %v2350
  %v2352 = vrot.slane %v2351, 1
  %v2353 = vadd.f32 %v2351, %v2352
  %v2354 = vrot.slane %v2216, 4
  %v2355 = vadd.f32 %v2216, %v2354
  %v2356 = vrot.slane %v2355, 2
  %v2357 = vadd.f32 %v2355, %v2356
  %v2358 = vrot.slane %v2357, 1
  %v2359 = vadd.f32 %v2357, %v2358
  %v2360 = vrot.slane %v2256, 4
  %v2361 = vadd.f32 %v2256, %v2360
  %v2362 = vrot.slane %v2361, 2
  %v2363 = vadd.f32 %v2361, %v2362
  %v2364 = vrot.slane %v2363, 1
  %v2365 = vadd.f32 %v2363, %v2364
  %v2366 = vrot.slane %v2258, 4
  %v2367 = vadd.f32 %v2258, %v2366
  %v2368 = vrot.slane %v2367, 2
  %v2369 = vadd.f32 %v2367, %v2368
  %v2370 = vrot.slane %v2369, 1
  %v2371 = vadd.f32 %v2369, %v2370
  %v2372 = vadd.f32 %v2353, %v2365
  %v2373 = vadd.f32 %v2359, %v2371
  %v2374 = vrot.slane %v2298, 4
  %v2375 = vadd.f32 %v2298, %v2374
  %v2376 = vrot.slane %v2375, 2
  %v2377 = vadd.f32 %v2375, %v2376
  %v2378 = vrot.slane %v2377, 1
  %v2379 = vadd.f32 %v2377, %v2378
  %v2380 = vrot.slane %v2300, 4
  %v2381 = vadd.f32 %v2300, %v2380
  %v2382 = vrot.slane %v2381, 2
  %v2383 = vadd.f32 %v2381, %v2382
  %v2384 = vrot.slane %v2383, 1
  %v2385 = vadd.f32 %v2383, %v2384
  %v2386 = vadd.f32 %v2372, %v2379
  %v2387 = vadd.f32 %v2373, %v2385
  %v2388 = vrot.slane %v2340, 4
  %v2389 = vadd.f32 %v2340, %v2388
  %v2390 = vrot.slane %v2389, 2
  %v2391 = vadd.f32 %v2389, %v2390
  %v2392 = vrot.slane %v2391, 1
  %v2393 = vadd.f32 %v2391, %v2392
  %v2394 = vrot.slane %v2342, 4
  %v2395 = vadd.f32 %v2342, %v2394
  %v2396 = vrot.slane %v2395, 2
  %v2397 = vadd.f32 %v2395, %v2396
  %v2398 = vrot.slane %v2397, 1
  %v2399 = vadd.f32 %v2397, %v2398
  %v2400 = vadd.f32 %v2386, %v2393
  %v2401 = vadd.f32 %v2387, %v2399
  %2403 = vrot.lane.b32.xlu0 %v2400, 64
  %v2404 = vpop.permute.xlu0 %2403
  %v2406 = vadd.f32 %v2400, %v2404
  %v2407 = vadd.f32 %v2406, %v2401
  %2409 = vrot.lane.b32.xlu0 %v2401, 64
  %v2410 = vpop.permute.xlu0 %2409
  %v2412 = vadd.f32 %v2407, %v2410
  %v2413 = vmul.f32 %v2412, 0.0078125
  %2415 = vrot.lane.b32.xlu0 %v2413, 64
  %v2416 = vpop.permute.xlu0 %2415
  %v2418 = vsel %vm248, %v2413, %v2416
  %v2419 = vlaneseq
  %v2420 = vshrl.u32 %v2419, 7
  %v2421 = vsub.s32 0, %v2420
  %v2422 = vrot.slane %v2418, %v2421
  %v2423 = vsub.f32 %v2214, %v2422
  %v2424 = vsub.f32 %v2216, %v2422
  %v2425 = vsub.f32 %v2256, %v2422
  %v2426 = vsub.f32 %v2258, %v2422
  %v2427 = vsub.f32 %v2298, %v2422
  %v2428 = vsub.f32 %v2300, %v2422
  %v2429 = vsub.f32 %v2340, %v2422
  %v2430 = vsub.f32 %v2342, %v2422
  %v2431 = vmul.f32 %v2423, %v2423
  %v2432 = vmul.f32 %v2424, %v2424
  %v2433 = vrot.slane %v2431, 4
  %v2434 = vadd.f32 %v2431, %v2433
  %v2435 = vrot.slane %v2434, 2
  %v2436 = vadd.f32 %v2434, %v2435
  %v2437 = vrot.slane %v2436, 1
  %v2438 = vadd.f32 %v2436, %v2437
  %v2439 = vrot.slane %v2432, 4
  %v2440 = vadd.f32 %v2432, %v2439
  %v2441 = vrot.slane %v2440, 2
  %v2442 = vadd.f32 %v2440, %v2441
  %v2443 = vrot.slane %v2442, 1
  %v2444 = vadd.f32 %v2442, %v2443
  %v2445 = vmul.f32 %v2425, %v2425
  %v2446 = vmul.f32 %v2426, %v2426
  %v2447 = vrot.slane %v2445, 4
  %v2448 = vadd.f32 %v2445, %v2447
  %v2449 = vrot.slane %v2448, 2
  %v2450 = vadd.f32 %v2448, %v2449
  %v2451 = vrot.slane %v2450, 1
  %v2452 = vadd.f32 %v2450, %v2451
  %v2453 = vrot.slane %v2446, 4
  %v2454 = vadd.f32 %v2446, %v2453
  %v2455 = vrot.slane %v2454, 2
  %v2456 = vadd.f32 %v2454, %v2455
  %v2457 = vrot.slane %v2456, 1
  %v2458 = vadd.f32 %v2456, %v2457
  %v2459 = vadd.f32 %v2438, %v2452
  %v2460 = vadd.f32 %v2444, %v2458
  %v2461 = vmul.f32 %v2427, %v2427
  %v2462 = vmul.f32 %v2428, %v2428
  %v2463 = vrot.slane %v2461, 4
  %v2464 = vadd.f32 %v2461, %v2463
  %v2465 = vrot.slane %v2464, 2
  %v2466 = vadd.f32 %v2464, %v2465
  %v2467 = vrot.slane %v2466, 1
  %v2468 = vadd.f32 %v2466, %v2467
  %v2469 = vrot.slane %v2462, 4
  %v2470 = vadd.f32 %v2462, %v2469
  %v2471 = vrot.slane %v2470, 2
  %v2472 = vadd.f32 %v2470, %v2471
  %v2473 = vrot.slane %v2472, 1
  %v2474 = vadd.f32 %v2472, %v2473
  %v2475 = vadd.f32 %v2459, %v2468
  %v2476 = vadd.f32 %v2460, %v2474
  %v2477 = vmul.f32 %v2429, %v2429
  %v2478 = vmul.f32 %v2430, %v2430
  %v2479 = vrot.slane %v2477, 4
  %v2480 = vadd.f32 %v2477, %v2479
  %v2481 = vrot.slane %v2480, 2
  %v2482 = vadd.f32 %v2480, %v2481
  %v2483 = vrot.slane %v2482, 1
  %v2484 = vadd.f32 %v2482, %v2483
  %v2485 = vrot.slane %v2478, 4
  %v2486 = vadd.f32 %v2478, %v2485
  %v2487 = vrot.slane %v2486, 2
  %v2488 = vadd.f32 %v2486, %v2487
  %v2489 = vrot.slane %v2488, 1
  %v2490 = vadd.f32 %v2488, %v2489
  %v2491 = vadd.f32 %v2475, %v2484
  %v2492 = vadd.f32 %v2476, %v2490
  %2494 = vrot.lane.b32.xlu0 %v2491, 64
  %v2495 = vpop.permute.xlu0 %2494
  %v2497 = vadd.f32 %v2491, %v2495
  %v2498 = vadd.f32 %v2497, %v2492
  %2500 = vrot.lane.b32.xlu0 %v2492, 64
  %v2501 = vpop.permute.xlu0 %2500
  %v2503 = vadd.f32 %v2498, %v2501
  %v2504 = vmul.f32 %v2503, 0.0078125
  %v2505 = vadd.f32 %v2504, 1e-05
  %v2506 = vrsqrt.pop %v2505
  %v2507 = vmul.f32 %v2506, %v2346
  %2509 = vrot.lane.b32.xlu0 %v2507, 64
  %v2510 = vpop.permute.xlu0 %2509
  %v2512 = vsel %vm248, %v2507, %v2510
  %v2514 = vlaneseq
  %v2515 = vshrl.u32 %v2514, 7
  %v2516 = vsub.s32 0, %v2515
  %v2517 = vrot.slane %v2347, %v2516
  %2518 = vrot.lane.b32.xlu0 %v2517, 64
  %v2519 = vpop.permute.xlu0 %2518
  %v2521 = vsel %vm248, %v2347, %v2519
  %v2522 = vlaneseq
  %v2523 = vshrl.u32 %v2522, 7
  %v2524 = vsub.s32 0, %v2523
  %v2525 = vrot.slane %v2512, %v2524
  %v2526 = vmul.f32 %v2423, %v2525
  %v2527 = vmul.f32 %v2424, %v2525
  %v2528 = vlaneseq
  %v2529 = vshrl.u32 %v2528, 7
  %v2530 = vsub.s32 0, %v2529
  %v2531 = vrot.slane %v2521, %v2530
  %v2532 = vadd.f32 %v2526, %v2531
  %v2533 = vadd.f32 %v2527, %v2531
  %vm2534 = vcmp.ge.f32.partialorder %v2532, 0.0
  %vm2535 = vcmp.ge.f32.partialorder %v2533, 0.0
  %v2536 = vmul.f32 %v2532, 0.01
  %v2537 = vmul.f32 %v2533, 0.01
  %v2538 = vsel %vm2534, %v2532, %v2536
  %v2539 = vsel %vm2535, %v2533, %v2537
  %v2540 = vmul.f32 %v2425, %v2525
  %v2541 = vmul.f32 %v2426, %v2525
  %v2542 = vadd.f32 %v2540, %v2531
  %v2543 = vadd.f32 %v2541, %v2531
  %vm2544 = vcmp.ge.f32.partialorder %v2542, 0.0
  %vm2545 = vcmp.ge.f32.partialorder %v2543, 0.0
  %v2546 = vmul.f32 %v2542, 0.01
  %v2547 = vmul.f32 %v2543, 0.01
  %v2548 = vsel %vm2544, %v2542, %v2546
  %v2549 = vsel %vm2545, %v2543, %v2547
  %v2550 = vmul.f32 %v2427, %v2525
  %v2551 = vmul.f32 %v2428, %v2525
  %v2552 = vadd.f32 %v2550, %v2531
  %v2553 = vadd.f32 %v2551, %v2531
  %vm2554 = vcmp.ge.f32.partialorder %v2552, 0.0
  %vm2555 = vcmp.ge.f32.partialorder %v2553, 0.0
  %v2556 = vmul.f32 %v2552, 0.01
  %v2557 = vmul.f32 %v2553, 0.01
  %v2558 = vsel %vm2554, %v2552, %v2556
  %v2559 = vsel %vm2555, %v2553, %v2557
  %v2560 = vmul.f32 %v2429, %v2525
  %v2561 = vmul.f32 %v2430, %v2525
  %v2562 = vadd.f32 %v2560, %v2531
  %v2563 = vadd.f32 %v2561, %v2531
  %vm2564 = vcmp.ge.f32.partialorder %v2562, 0.0
  %vm2565 = vcmp.ge.f32.partialorder %v2563, 0.0
  %v2566 = vmul.f32 %v2562, 0.01
  %v2567 = vmul.f32 %v2563, 0.01
  %v2568 = vsel %vm2564, %v2562, %v2566
  %v2569 = vsel %vm2565, %v2563, %v2567
  %v2570 = vld [vmem:[%s16] sm:$0xf]
  %v2571 = vld [vmem:[%s16 + $0x4] sm:$0xf]
  %v2572 = vld [vmem:[%s16 + $0x8] sm:$0xf]
  %v2573 = vld [vmem:[%s16 + $0xc] sm:$0xf]
  %v2574 = vld [vmem:[%s16 + $0x10] sm:$0xf]
  %v2575 = vld [vmem:[%s16 + $0x14] sm:$0xf]
  %v2576 = vld [vmem:[%s16 + $0x18] sm:$0xf]
  %v2577 = vld [vmem:[%s16 + $0x1c] sm:$0xf]
  %v2578 = vld [vmem:[%s17] sm:$0x1]
  %v2579 = vpack.c.bf16 %v2538, %v2538
  %v2581 = vlaneseq
  %v2582 = vshrl.u32 %v2581, 7
  %v2583 = vsub.s32 0, %v2582
  %v2584 = vrot.slane %v2578, %v2583
  %v2594 = vunpack.c.l.b16 %v2570
  %v2595 = vunpack.c.l.b16 %v2571
  %v2596 = vunpack.c.l.b16 %v2572
  %v2597 = vunpack.c.l.b16 %v2573
  %v2598 = vunpack.c.l.b16 %v2574
  %v2599 = vunpack.c.l.b16 %v2575
  %v2600 = vunpack.c.l.b16 %v2576
  %v2601 = vunpack.c.l.b16 %v2577
  %v2602 = vpack.c.b16 %v2595, %v2594
  %v2603 = vpack.c.b16 %v2597, %v2596
  %v2604 = vpack.c.b16 %v2599, %v2598
  %v2605 = vpack.c.b16 %v2601, %v2600
  %v2611 = vsel %vm248, %v2579, 0
  %2613 = vmatprep.subr.bf16.mxu0 0
  %2614 = vmatpush1.bf16.msra.mxu0 %v2602
  %2615 = vmatprep.subr.bf16.mxu0 0
  %2616 = vmatpush1.bf16.msra.mxu0 %v2603
  %2617 = vmatprep.subr.bf16.mxu0 0
  %2618 = vmatpush1.bf16.msra.mxu0 %v2604
  %2619 = vmatprep.subr.bf16.mxu0 0
  %2620 = vmatpush1.bf16.msra.mxu0 %v2605
  %2621 = vmatprep.subr.bf16.mxu0 0
  %2622 = vmatpush1.bf16.msra.mxu0 0
  %2623 = vmatprep.subr.bf16.mxu0 0
  %2624 = vmatpush1.bf16.msra.mxu0 0
  %2625 = vmatprep.subr.bf16.mxu0 0
  %2626 = vmatpush1.bf16.msra.mxu0 0
  %2627 = vmatprep.subr.bf16.mxu0 0
  %2628 = vmatpush1.bf16.msra.mxu0 0
  %2629 = vmatprep.subr.bf16.mxu0 0
  %2630 = vmatpush1.bf16.msra.mxu0 0
  %2631 = vmatprep.subr.bf16.mxu0 0
  %2632 = vmatpush1.bf16.msra.mxu0 0
  %2633 = vmatprep.subr.bf16.mxu0 0
  %2634 = vmatpush1.bf16.msra.mxu0 0
  %2635 = vmatprep.subr.bf16.mxu0 0
  %2636 = vmatpush1.bf16.msra.mxu0 0
  %2637 = vmatprep.subr.bf16.mxu0 0
  %2638 = vmatpush1.bf16.msra.mxu0 0
  %2639 = vmatprep.subr.bf16.mxu0 0
  %2640 = vmatpush1.bf16.msra.mxu0 0
  %2641 = vmatprep.subr.bf16.mxu0 0
  %2642 = vmatpush1.bf16.msra.mxu0 0
  %2643 = vmatprep.subr.bf16.mxu0 0
  %2644 = vmatpush1.bf16.msra.mxu0 0
  %2645 = vmatprep.mubr.bf16.mxu0 0
  %2646 = vmatmul.mubr.bf16.gmra.mrb[0].mxu0 %v2611
  %v2647 = vpop.f32.mrb[0].mxu0
  %v2648 = vadd.f32 %v2584, %v2647
  %v2649 = vpop.f32.mrb[0].mxu0
  %v2650 = vpop.f32.mrb[0].mxu0
  %v2651 = vpop.f32.mrb[0].mxu0
  %2652 = vdwg.mxu0
  %v2653 = vxor.u32 %v2648, 2147483648
  %v2654 = vmul.f32 %v2653, 1.442695
  %v2655 = vpow.pop %v2654
  %v2656 = vadd.f32 %v2655, 1.0
  %v2657 = vrcp.pop %v2656
  %v2658 = vmul.f32 1.0, %v2657
  %2659 = vst [vmem:[%s18] sm:$0xff] %v2658
  %v2660 = vpack.c.bf16 %v2548, %v2548
  %v2662 = vsel %vm248, %v2660, 0
  %2664 = vmatprep.subr.bf16.mxu0 0
  %2665 = vmatpush1.bf16.msra.mxu0 %v2602
  %2666 = vmatprep.subr.bf16.mxu0 0
  %2667 = vmatpush1.bf16.msra.mxu0 %v2603
  %2668 = vmatprep.subr.bf16.mxu0 0
  %2669 = vmatpush1.bf16.msra.mxu0 %v2604
  %2670 = vmatprep.subr.bf16.mxu0 0
  %2671 = vmatpush1.bf16.msra.mxu0 %v2605
  %2672 = vmatprep.subr.bf16.mxu0 0
  %2673 = vmatpush1.bf16.msra.mxu0 0
  %2674 = vmatprep.subr.bf16.mxu0 0
  %2675 = vmatpush1.bf16.msra.mxu0 0
  %2676 = vmatprep.subr.bf16.mxu0 0
  %2677 = vmatpush1.bf16.msra.mxu0 0
  %2678 = vmatprep.subr.bf16.mxu0 0
  %2679 = vmatpush1.bf16.msra.mxu0 0
  %2680 = vmatprep.subr.bf16.mxu0 0
  %2681 = vmatpush1.bf16.msra.mxu0 0
  %2682 = vmatprep.subr.bf16.mxu0 0
  %2683 = vmatpush1.bf16.msra.mxu0 0
  %2684 = vmatprep.subr.bf16.mxu0 0
  %2685 = vmatpush1.bf16.msra.mxu0 0
  %2686 = vmatprep.subr.bf16.mxu0 0
  %2687 = vmatpush1.bf16.msra.mxu0 0
  %2688 = vmatprep.subr.bf16.mxu0 0
  %2689 = vmatpush1.bf16.msra.mxu0 0
  %2690 = vmatprep.subr.bf16.mxu0 0
  %2691 = vmatpush1.bf16.msra.mxu0 0
  %2692 = vmatprep.subr.bf16.mxu0 0
  %2693 = vmatpush1.bf16.msra.mxu0 0
  %2694 = vmatprep.subr.bf16.mxu0 0
  %2695 = vmatpush1.bf16.msra.mxu0 0
  %2696 = vmatprep.mubr.bf16.mxu0 0
  %2697 = vmatmul.mubr.bf16.gmra.mrb[0].mxu0 %v2662
  %v2698 = vpop.f32.mrb[0].mxu0
  %v2699 = vadd.f32 %v2584, %v2698
  %v2700 = vpop.f32.mrb[0].mxu0
  %v2701 = vpop.f32.mrb[0].mxu0
  %v2702 = vpop.f32.mrb[0].mxu0
  %2703 = vdwg.mxu0
  %v2704 = vxor.u32 %v2699, 2147483648
  %v2705 = vmul.f32 %v2704, 1.442695
  %v2706 = vpow.pop %v2705
  %v2707 = vadd.f32 %v2706, 1.0
  %v2708 = vrcp.pop %v2707
  %v2709 = vmul.f32 1.0, %v2708
  %2710 = vst [vmem:[%s18 + $0x8] sm:$0xff] %v2709
  %v2711 = vpack.c.bf16 %v2558, %v2558
  %v2713 = vsel %vm248, %v2711, 0
  %2715 = vmatprep.subr.bf16.mxu0 0
  %2716 = vmatpush1.bf16.msra.mxu0 %v2602
  %2717 = vmatprep.subr.bf16.mxu0 0
  %2718 = vmatpush1.bf16.msra.mxu0 %v2603
  %2719 = vmatprep.subr.bf16.mxu0 0
  %2720 = vmatpush1.bf16.msra.mxu0 %v2604
  %2721 = vmatprep.subr.bf16.mxu0 0
  %2722 = vmatpush1.bf16.msra.mxu0 %v2605
  %2723 = vmatprep.subr.bf16.mxu0 0
  %2724 = vmatpush1.bf16.msra.mxu0 0
  %2725 = vmatprep.subr.bf16.mxu0 0
  %2726 = vmatpush1.bf16.msra.mxu0 0
  %2727 = vmatprep.subr.bf16.mxu0 0
  %2728 = vmatpush1.bf16.msra.mxu0 0
  %2729 = vmatprep.subr.bf16.mxu0 0
  %2730 = vmatpush1.bf16.msra.mxu0 0
  %2731 = vmatprep.subr.bf16.mxu0 0
  %2732 = vmatpush1.bf16.msra.mxu0 0
  %2733 = vmatprep.subr.bf16.mxu0 0
  %2734 = vmatpush1.bf16.msra.mxu0 0
  %2735 = vmatprep.subr.bf16.mxu0 0
  %2736 = vmatpush1.bf16.msra.mxu0 0
  %2737 = vmatprep.subr.bf16.mxu0 0
  %2738 = vmatpush1.bf16.msra.mxu0 0
  %2739 = vmatprep.subr.bf16.mxu0 0
  %2740 = vmatpush1.bf16.msra.mxu0 0
  %2741 = vmatprep.subr.bf16.mxu0 0
  %2742 = vmatpush1.bf16.msra.mxu0 0
  %2743 = vmatprep.subr.bf16.mxu0 0
  %2744 = vmatpush1.bf16.msra.mxu0 0
  %2745 = vmatprep.subr.bf16.mxu0 0
  %2746 = vmatpush1.bf16.msra.mxu0 0
  %2747 = vmatprep.mubr.bf16.mxu0 0
  %2748 = vmatmul.mubr.bf16.gmra.mrb[0].mxu0 %v2713
  %v2749 = vpop.f32.mrb[0].mxu0
  %v2750 = vadd.f32 %v2584, %v2749
  %v2751 = vpop.f32.mrb[0].mxu0
  %v2752 = vpop.f32.mrb[0].mxu0
  %v2753 = vpop.f32.mrb[0].mxu0
  %2754 = vdwg.mxu0
  %v2755 = vxor.u32 %v2750, 2147483648
  %v2756 = vmul.f32 %v2755, 1.442695
  %v2757 = vpow.pop %v2756
  %v2758 = vadd.f32 %v2757, 1.0
  %v2759 = vrcp.pop %v2758
  %v2760 = vmul.f32 1.0, %v2759
  %2761 = vst [vmem:[%s18 + $0x10] sm:$0xff] %v2760
  %v2762 = vpack.c.bf16 %v2568, %v2568
  %v2764 = vsel %vm248, %v2762, 0
  %2766 = vmatprep.subr.bf16.mxu0 0
  %2767 = vmatpush1.bf16.msra.mxu0 %v2602
  %2768 = vmatprep.subr.bf16.mxu0 0
  %2769 = vmatpush1.bf16.msra.mxu0 %v2603
  %2770 = vmatprep.subr.bf16.mxu0 0
  %2771 = vmatpush1.bf16.msra.mxu0 %v2604
  %2772 = vmatprep.subr.bf16.mxu0 0
  %2773 = vmatpush1.bf16.msra.mxu0 %v2605
  %2774 = vmatprep.subr.bf16.mxu0 0
  %2775 = vmatpush1.bf16.msra.mxu0 0
  %2776 = vmatprep.subr.bf16.mxu0 0
  %2777 = vmatpush1.bf16.msra.mxu0 0
  %2778 = vmatprep.subr.bf16.mxu0 0
  %2779 = vmatpush1.bf16.msra.mxu0 0
  %2780 = vmatprep.subr.bf16.mxu0 0
  %2781 = vmatpush1.bf16.msra.mxu0 0
  %2782 = vmatprep.subr.bf16.mxu0 0
  %2783 = vmatpush1.bf16.msra.mxu0 0
  %2784 = vmatprep.subr.bf16.mxu0 0
  %2785 = vmatpush1.bf16.msra.mxu0 0
  %2786 = vmatprep.subr.bf16.mxu0 0
  %2787 = vmatpush1.bf16.msra.mxu0 0
  %2788 = vmatprep.subr.bf16.mxu0 0
  %2789 = vmatpush1.bf16.msra.mxu0 0
  %2790 = vmatprep.subr.bf16.mxu0 0
  %2791 = vmatpush1.bf16.msra.mxu0 0
  %2792 = vmatprep.subr.bf16.mxu0 0
  %2793 = vmatpush1.bf16.msra.mxu0 0
  %2794 = vmatprep.subr.bf16.mxu0 0
  %2795 = vmatpush1.bf16.msra.mxu0 0
  %2796 = vmatprep.subr.bf16.mxu0 0
  %2797 = vmatpush1.bf16.msra.mxu0 0
  %2798 = vmatprep.mubr.bf16.mxu0 0
  %2799 = vmatmul.mubr.bf16.gmra.mrb[0].mxu0 %v2764
  %v2800 = vpop.f32.mrb[0].mxu0
  %v2801 = vadd.f32 %v2584, %v2800
  %v2802 = vpop.f32.mrb[0].mxu0
  %v2803 = vpop.f32.mrb[0].mxu0
  %v2804 = vpop.f32.mrb[0].mxu0
  %2805 = vdwg.mxu0
  %v2806 = vxor.u32 %v2801, 2147483648
  %v2807 = vmul.f32 %v2806, 1.442695
  %v2808 = vpow.pop %v2807
  %v2809 = vadd.f32 %v2808, 1.0
  %v2810 = vrcp.pop %v2809
  %v2811 = vmul.f32 1.0, %v2810
  %2812 = vst [vmem:[%s18 + $0x18] sm:$0xff] %v2811
  %2814 = vrot.lane.b32.xlu0 %v2579, 64
  %v2815 = vpop.permute.xlu0 %2814
  %v2817 = vsel %vm248, %v2815, 0
  %2819 = vmatprep.subr.bf16.mxu0 0
  %2820 = vmatpush1.bf16.msra.mxu0 %v2602
  %2821 = vmatprep.subr.bf16.mxu0 0
  %2822 = vmatpush1.bf16.msra.mxu0 %v2603
  %2823 = vmatprep.subr.bf16.mxu0 0
  %2824 = vmatpush1.bf16.msra.mxu0 %v2604
  %2825 = vmatprep.subr.bf16.mxu0 0
  %2826 = vmatpush1.bf16.msra.mxu0 %v2605
  %2827 = vmatprep.subr.bf16.mxu0 0
  %2828 = vmatpush1.bf16.msra.mxu0 0
  %2829 = vmatprep.subr.bf16.mxu0 0
  %2830 = vmatpush1.bf16.msra.mxu0 0
  %2831 = vmatprep.subr.bf16.mxu0 0
  %2832 = vmatpush1.bf16.msra.mxu0 0
  %2833 = vmatprep.subr.bf16.mxu0 0
  %2834 = vmatpush1.bf16.msra.mxu0 0
  %2835 = vmatprep.subr.bf16.mxu0 0
  %2836 = vmatpush1.bf16.msra.mxu0 0
  %2837 = vmatprep.subr.bf16.mxu0 0
  %2838 = vmatpush1.bf16.msra.mxu0 0
  %2839 = vmatprep.subr.bf16.mxu0 0
  %2840 = vmatpush1.bf16.msra.mxu0 0
  %2841 = vmatprep.subr.bf16.mxu0 0
  %2842 = vmatpush1.bf16.msra.mxu0 0
  %2843 = vmatprep.subr.bf16.mxu0 0
  %2844 = vmatpush1.bf16.msra.mxu0 0
  %2845 = vmatprep.subr.bf16.mxu0 0
  %2846 = vmatpush1.bf16.msra.mxu0 0
  %2847 = vmatprep.subr.bf16.mxu0 0
  %2848 = vmatpush1.bf16.msra.mxu0 0
  %2849 = vmatprep.subr.bf16.mxu0 0
  %2850 = vmatpush1.bf16.msra.mxu0 0
  %2851 = vmatprep.mubr.bf16.mxu0 0
  %2852 = vmatmul.mubr.bf16.gmra.mrb[0].mxu0 %v2817
  %v2853 = vpop.f32.mrb[0].mxu0
  %v2854 = vadd.f32 %v2584, %v2853
  %v2855 = vpop.f32.mrb[0].mxu0
  %v2856 = vpop.f32.mrb[0].mxu0
  %v2857 = vpop.f32.mrb[0].mxu0
  %2858 = vdwg.mxu0
  %v2859 = vxor.u32 %v2854, 2147483648
  %v2860 = vmul.f32 %v2859, 1.442695
  %v2861 = vpow.pop %v2860
  %v2862 = vadd.f32 %v2861, 1.0
  %v2863 = vrcp.pop %v2862
  %v2864 = vmul.f32 1.0, %v2863
  %2865 = vst [vmem:[%s18 + $0x20] sm:$0xff] %v2864
  %2867 = vrot.lane.b32.xlu0 %v2660, 64
  %v2868 = vpop.permute.xlu0 %2867
  %v2870 = vsel %vm248, %v2868, 0
  %2872 = vmatprep.subr.bf16.mxu0 0
  %2873 = vmatpush1.bf16.msra.mxu0 %v2602
  %2874 = vmatprep.subr.bf16.mxu0 0
  %2875 = vmatpush1.bf16.msra.mxu0 %v2603
  %2876 = vmatprep.subr.bf16.mxu0 0
  %2877 = vmatpush1.bf16.msra.mxu0 %v2604
  %2878 = vmatprep.subr.bf16.mxu0 0
  %2879 = vmatpush1.bf16.msra.mxu0 %v2605
  %2880 = vmatprep.subr.bf16.mxu0 0
  %2881 = vmatpush1.bf16.msra.mxu0 0
  %2882 = vmatprep.subr.bf16.mxu0 0
  %2883 = vmatpush1.bf16.msra.mxu0 0
  %2884 = vmatprep.subr.bf16.mxu0 0
  %2885 = vmatpush1.bf16.msra.mxu0 0
  %2886 = vmatprep.subr.bf16.mxu0 0
  %2887 = vmatpush1.bf16.msra.mxu0 0
  %2888 = vmatprep.subr.bf16.mxu0 0
  %2889 = vmatpush1.bf16.msra.mxu0 0
  %2890 = vmatprep.subr.bf16.mxu0 0
  %2891 = vmatpush1.bf16.msra.mxu0 0
  %2892 = vmatprep.subr.bf16.mxu0 0
  %2893 = vmatpush1.bf16.msra.mxu0 0
  %2894 = vmatprep.subr.bf16.mxu0 0
  %2895 = vmatpush1.bf16.msra.mxu0 0
  %2896 = vmatprep.subr.bf16.mxu0 0
  %2897 = vmatpush1.bf16.msra.mxu0 0
  %2898 = vmatprep.subr.bf16.mxu0 0
  %2899 = vmatpush1.bf16.msra.mxu0 0
  %2900 = vmatprep.subr.bf16.mxu0 0
  %2901 = vmatpush1.bf16.msra.mxu0 0
  %2902 = vmatprep.subr.bf16.mxu0 0
  %2903 = vmatpush1.bf16.msra.mxu0 0
  %2904 = vmatprep.mubr.bf16.mxu0 0
  %2905 = vmatmul.mubr.bf16.gmra.mrb[0].mxu0 %v2870
  %v2906 = vpop.f32.mrb[0].mxu0
  %v2907 = vadd.f32 %v2584, %v2906
  %v2908 = vpop.f32.mrb[0].mxu0
  %v2909 = vpop.f32.mrb[0].mxu0
  %v2910 = vpop.f32.mrb[0].mxu0
  %2911 = vdwg.mxu0
  %v2912 = vxor.u32 %v2907, 2147483648
  %v2913 = vmul.f32 %v2912, 1.442695
  %v2914 = vpow.pop %v2913
  %v2915 = vadd.f32 %v2914, 1.0
  %v2916 = vrcp.pop %v2915
  %v2917 = vmul.f32 1.0, %v2916
  %2918 = vst [vmem:[%s18 + $0x28] sm:$0xff] %v2917
  %2920 = vrot.lane.b32.xlu0 %v2711, 64
  %v2921 = vpop.permute.xlu0 %2920
  %v2923 = vsel %vm248, %v2921, 0
  %2925 = vmatprep.subr.bf16.mxu0 0
  %2926 = vmatpush1.bf16.msra.mxu0 %v2602
  %2927 = vmatprep.subr.bf16.mxu0 0
  %2928 = vmatpush1.bf16.msra.mxu0 %v2603
  %2929 = vmatprep.subr.bf16.mxu0 0
  %2930 = vmatpush1.bf16.msra.mxu0 %v2604
  %2931 = vmatprep.subr.bf16.mxu0 0
  %2932 = vmatpush1.bf16.msra.mxu0 %v2605
  %2933 = vmatprep.subr.bf16.mxu0 0
  %2934 = vmatpush1.bf16.msra.mxu0 0
  %2935 = vmatprep.subr.bf16.mxu0 0
  %2936 = vmatpush1.bf16.msra.mxu0 0
  %2937 = vmatprep.subr.bf16.mxu0 0
  %2938 = vmatpush1.bf16.msra.mxu0 0
  %2939 = vmatprep.subr.bf16.mxu0 0
  %2940 = vmatpush1.bf16.msra.mxu0 0
  %2941 = vmatprep.subr.bf16.mxu0 0
  %2942 = vmatpush1.bf16.msra.mxu0 0
  %2943 = vmatprep.subr.bf16.mxu0 0
  %2944 = vmatpush1.bf16.msra.mxu0 0
  %2945 = vmatprep.subr.bf16.mxu0 0
  %2946 = vmatpush1.bf16.msra.mxu0 0
  %2947 = vmatprep.subr.bf16.mxu0 0
  %2948 = vmatpush1.bf16.msra.mxu0 0
  %2949 = vmatprep.subr.bf16.mxu0 0
  %2950 = vmatpush1.bf16.msra.mxu0 0
  %2951 = vmatprep.subr.bf16.mxu0 0
  %2952 = vmatpush1.bf16.msra.mxu0 0
  %2953 = vmatprep.subr.bf16.mxu0 0
  %2954 = vmatpush1.bf16.msra.mxu0 0
  %2955 = vmatprep.subr.bf16.mxu0 0
  %2956 = vmatpush1.bf16.msra.mxu0 0
  %2957 = vmatprep.mubr.bf16.mxu0 0
  %2958 = vmatmul.mubr.bf16.gmra.mrb[0].mxu0 %v2923
  %v2959 = vpop.f32.mrb[0].mxu0
  %v2960 = vadd.f32 %v2584, %v2959
  %v2961 = vpop.f32.mrb[0].mxu0
  %v2962 = vpop.f32.mrb[0].mxu0
  %v2963 = vpop.f32.mrb[0].mxu0
  %2964 = vdwg.mxu0
  %v2965 = vxor.u32 %v2960, 2147483648
  %v2966 = vmul.f32 %v2965, 1.442695
  %v2967 = vpow.pop %v2966
  %v2968 = vadd.f32 %v2967, 1.0
  %v2969 = vrcp.pop %v2968
  %v2970 = vmul.f32 1.0, %v2969
  %2971 = vst [vmem:[%s18 + $0x30] sm:$0xff] %v2970
  %2973 = vrot.lane.b32.xlu0 %v2762, 64
  %v2974 = vpop.permute.xlu0 %2973
  %v2976 = vsel %vm248, %v2974, 0
  %2978 = vmatprep.subr.bf16.mxu0 0
  %2979 = vmatpush1.bf16.msra.mxu0 %v2602
  %2980 = vmatprep.subr.bf16.mxu0 0
  %2981 = vmatpush1.bf16.msra.mxu0 %v2603
  %2982 = vmatprep.subr.bf16.mxu0 0
  %2983 = vmatpush1.bf16.msra.mxu0 %v2604
  %2984 = vmatprep.subr.bf16.mxu0 0
  %2985 = vmatpush1.bf16.msra.mxu0 %v2605
  %2986 = vmatprep.subr.bf16.mxu0 0
  %2987 = vmatpush1.bf16.msra.mxu0 0
  %2988 = vmatprep.subr.bf16.mxu0 0
  %2989 = vmatpush1.bf16.msra.mxu0 0
  %2990 = vmatprep.subr.bf16.mxu0 0
  %2991 = vmatpush1.bf16.msra.mxu0 0
  %2992 = vmatprep.subr.bf16.mxu0 0
  %2993 = vmatpush1.bf16.msra.mxu0 0
  %2994 = vmatprep.subr.bf16.mxu0 0
  %2995 = vmatpush1.bf16.msra.mxu0 0
  %2996 = vmatprep.subr.bf16.mxu0 0
  %2997 = vmatpush1.bf16.msra.mxu0 0
  %2998 = vmatprep.subr.bf16.mxu0 0
  %2999 = vmatpush1.bf16.msra.mxu0 0
  %3000 = vmatprep.subr.bf16.mxu0 0
  %3001 = vmatpush1.bf16.msra.mxu0 0
  %3002 = vmatprep.subr.bf16.mxu0 0
  %3003 = vmatpush1.bf16.msra.mxu0 0
  %3004 = vmatprep.subr.bf16.mxu0 0
  %3005 = vmatpush1.bf16.msra.mxu0 0
  %3006 = vmatprep.subr.bf16.mxu0 0
  %3007 = vmatpush1.bf16.msra.mxu0 0
  %3008 = vmatprep.subr.bf16.mxu0 0
  %3009 = vmatpush1.bf16.msra.mxu0 0
  %3010 = vmatprep.mubr.bf16.mxu0 0
  %3011 = vmatmul.mubr.bf16.gmra.mrb[0].mxu0 %v2976
  %v3012 = vpop.f32.mrb[0].mxu0
  %v3013 = vadd.f32 %v2584, %v3012
  %v3014 = vpop.f32.mrb[0].mxu0
  %v3015 = vpop.f32.mrb[0].mxu0
  %v3016 = vpop.f32.mrb[0].mxu0
  %3017 = vdwg.mxu0
  %v3018 = vxor.u32 %v3013, 2147483648
  %v3019 = vmul.f32 %v3018, 1.442695
  %v3020 = vpow.pop %v3019
  %v3021 = vadd.f32 %v3020, 1.0
  %v3022 = vrcp.pop %v3021
  %v3023 = vmul.f32 1.0, %v3022
  %3024 = vst [vmem:[%s18 + $0x38] sm:$0xff] %v3023
  %v3025 = vpack.c.bf16 %v2539, %v2539
  %v3027 = vsel %vm248, %v3025, 0
  %3029 = vmatprep.subr.bf16.mxu0 0
  %3030 = vmatpush1.bf16.msra.mxu0 %v2602
  %3031 = vmatprep.subr.bf16.mxu0 0
  %3032 = vmatpush1.bf16.msra.mxu0 %v2603
  %3033 = vmatprep.subr.bf16.mxu0 0
  %3034 = vmatpush1.bf16.msra.mxu0 %v2604
  %3035 = vmatprep.subr.bf16.mxu0 0
  %3036 = vmatpush1.bf16.msra.mxu0 %v2605
  %3037 = vmatprep.subr.bf16.mxu0 0
  %3038 = vmatpush1.bf16.msra.mxu0 0
  %3039 = vmatprep.subr.bf16.mxu0 0
  %3040 = vmatpush1.bf16.msra.mxu0 0
  %3041 = vmatprep.subr.bf16.mxu0 0
  %3042 = vmatpush1.bf16.msra.mxu0 0
  %3043 = vmatprep.subr.bf16.mxu0 0
  %3044 = vmatpush1.bf16.msra.mxu0 0
  %3045 = vmatprep.subr.bf16.mxu0 0
  %3046 = vmatpush1.bf16.msra.mxu0 0
  %3047 = vmatprep.subr.bf16.mxu0 0
  %3048 = vmatpush1.bf16.msra.mxu0 0
  %3049 = vmatprep.subr.bf16.mxu0 0
  %3050 = vmatpush1.bf16.msra.mxu0 0
  %3051 = vmatprep.subr.bf16.mxu0 0
  %3052 = vmatpush1.bf16.msra.mxu0 0
  %3053 = vmatprep.subr.bf16.mxu0 0
  %3054 = vmatpush1.bf16.msra.mxu0 0
  %3055 = vmatprep.subr.bf16.mxu0 0
  %3056 = vmatpush1.bf16.msra.mxu0 0
  %3057 = vmatprep.subr.bf16.mxu0 0
  %3058 = vmatpush1.bf16.msra.mxu0 0
  %3059 = vmatprep.subr.bf16.mxu0 0
  %3060 = vmatpush1.bf16.msra.mxu0 0
  %3061 = vmatprep.mubr.bf16.mxu0 0
  %3062 = vmatmul.mubr.bf16.gmra.mrb[0].mxu0 %v3027
  %v3063 = vpop.f32.mrb[0].mxu0
  %v3064 = vadd.f32 %v2584, %v3063
  %v3065 = vpop.f32.mrb[0].mxu0
  %v3066 = vpop.f32.mrb[0].mxu0
  %v3067 = vpop.f32.mrb[0].mxu0
  %3068 = vdwg.mxu0
  %v3069 = vxor.u32 %v3064, 2147483648
  %v3070 = vmul.f32 %v3069, 1.442695
  %v3071 = vpow.pop %v3070
  %v3072 = vadd.f32 %v3071, 1.0
  %v3073 = vrcp.pop %v3072
  %v3074 = vmul.f32 1.0, %v3073
  %3075 = vst [vmem:[%s18 + $0x40] sm:$0xff] %v3074
  %v3076 = vpack.c.bf16 %v2549, %v2549
  %v3078 = vsel %vm248, %v3076, 0
  %3080 = vmatprep.subr.bf16.mxu0 0
  %3081 = vmatpush1.bf16.msra.mxu0 %v2602
  %3082 = vmatprep.subr.bf16.mxu0 0
  %3083 = vmatpush1.bf16.msra.mxu0 %v2603
  %3084 = vmatprep.subr.bf16.mxu0 0
  %3085 = vmatpush1.bf16.msra.mxu0 %v2604
  %3086 = vmatprep.subr.bf16.mxu0 0
  %3087 = vmatpush1.bf16.msra.mxu0 %v2605
  %3088 = vmatprep.subr.bf16.mxu0 0
  %3089 = vmatpush1.bf16.msra.mxu0 0
  %3090 = vmatprep.subr.bf16.mxu0 0
  %3091 = vmatpush1.bf16.msra.mxu0 0
  %3092 = vmatprep.subr.bf16.mxu0 0
  %3093 = vmatpush1.bf16.msra.mxu0 0
  %3094 = vmatprep.subr.bf16.mxu0 0
  %3095 = vmatpush1.bf16.msra.mxu0 0
  %3096 = vmatprep.subr.bf16.mxu0 0
  %3097 = vmatpush1.bf16.msra.mxu0 0
  %3098 = vmatprep.subr.bf16.mxu0 0
  %3099 = vmatpush1.bf16.msra.mxu0 0
  %3100 = vmatprep.subr.bf16.mxu0 0
  %3101 = vmatpush1.bf16.msra.mxu0 0
  %3102 = vmatprep.subr.bf16.mxu0 0
  %3103 = vmatpush1.bf16.msra.mxu0 0
  %3104 = vmatprep.subr.bf16.mxu0 0
  %3105 = vmatpush1.bf16.msra.mxu0 0
  %3106 = vmatprep.subr.bf16.mxu0 0
  %3107 = vmatpush1.bf16.msra.mxu0 0
  %3108 = vmatprep.subr.bf16.mxu0 0
  %3109 = vmatpush1.bf16.msra.mxu0 0
  %3110 = vmatprep.subr.bf16.mxu0 0
  %3111 = vmatpush1.bf16.msra.mxu0 0
  %3112 = vmatprep.mubr.bf16.mxu0 0
  %3113 = vmatmul.mubr.bf16.gmra.mrb[0].mxu0 %v3078
  %v3114 = vpop.f32.mrb[0].mxu0
  %v3115 = vadd.f32 %v2584, %v3114
  %v3116 = vpop.f32.mrb[0].mxu0
  %v3117 = vpop.f32.mrb[0].mxu0
  %v3118 = vpop.f32.mrb[0].mxu0
  %3119 = vdwg.mxu0
  %v3120 = vxor.u32 %v3115, 2147483648
  %v3121 = vmul.f32 %v3120, 1.442695
  %v3122 = vpow.pop %v3121
  %v3123 = vadd.f32 %v3122, 1.0
  %v3124 = vrcp.pop %v3123
  %v3125 = vmul.f32 1.0, %v3124
  %3126 = vst [vmem:[%s18 + $0x48] sm:$0xff] %v3125
  %v3127 = vpack.c.bf16 %v2559, %v2559
  %v3129 = vsel %vm248, %v3127, 0
  %3131 = vmatprep.subr.bf16.mxu0 0
  %3132 = vmatpush1.bf16.msra.mxu0 %v2602
  %3133 = vmatprep.subr.bf16.mxu0 0
  %3134 = vmatpush1.bf16.msra.mxu0 %v2603
  %3135 = vmatprep.subr.bf16.mxu0 0
  %3136 = vmatpush1.bf16.msra.mxu0 %v2604
  %3137 = vmatprep.subr.bf16.mxu0 0
  %3138 = vmatpush1.bf16.msra.mxu0 %v2605
  %3139 = vmatprep.subr.bf16.mxu0 0
  %3140 = vmatpush1.bf16.msra.mxu0 0
  %3141 = vmatprep.subr.bf16.mxu0 0
  %3142 = vmatpush1.bf16.msra.mxu0 0
  %3143 = vmatprep.subr.bf16.mxu0 0
  %3144 = vmatpush1.bf16.msra.mxu0 0
  %3145 = vmatprep.subr.bf16.mxu0 0
  %3146 = vmatpush1.bf16.msra.mxu0 0
  %3147 = vmatprep.subr.bf16.mxu0 0
  %3148 = vmatpush1.bf16.msra.mxu0 0
  %3149 = vmatprep.subr.bf16.mxu0 0
  %3150 = vmatpush1.bf16.msra.mxu0 0
  %3151 = vmatprep.subr.bf16.mxu0 0
  %3152 = vmatpush1.bf16.msra.mxu0 0
  %3153 = vmatprep.subr.bf16.mxu0 0
  %3154 = vmatpush1.bf16.msra.mxu0 0
  %3155 = vmatprep.subr.bf16.mxu0 0
  %3156 = vmatpush1.bf16.msra.mxu0 0
  %3157 = vmatprep.subr.bf16.mxu0 0
  %3158 = vmatpush1.bf16.msra.mxu0 0
  %3159 = vmatprep.subr.bf16.mxu0 0
  %3160 = vmatpush1.bf16.msra.mxu0 0
  %3161 = vmatprep.subr.bf16.mxu0 0
  %3162 = vmatpush1.bf16.msra.mxu0 0
  %3163 = vmatprep.mubr.bf16.mxu0 0
  %3164 = vmatmul.mubr.bf16.gmra.mrb[0].mxu0 %v3129
  %v3165 = vpop.f32.mrb[0].mxu0
  %v3166 = vadd.f32 %v2584, %v3165
  %v3167 = vpop.f32.mrb[0].mxu0
  %v3168 = vpop.f32.mrb[0].mxu0
  %v3169 = vpop.f32.mrb[0].mxu0
  %3170 = vdwg.mxu0
  %v3171 = vxor.u32 %v3166, 2147483648
  %v3172 = vmul.f32 %v3171, 1.442695
  %v3173 = vpow.pop %v3172
  %v3174 = vadd.f32 %v3173, 1.0
  %v3175 = vrcp.pop %v3174
  %v3176 = vmul.f32 1.0, %v3175
  %3177 = vst [vmem:[%s18 + $0x50] sm:$0xff] %v3176
  %v3178 = vpack.c.bf16 %v2569, %v2569
  %v3180 = vsel %vm248, %v3178, 0
  %3182 = vmatprep.subr.bf16.mxu0 0
  %3183 = vmatpush1.bf16.msra.mxu0 %v2602
  %3184 = vmatprep.subr.bf16.mxu0 0
  %3185 = vmatpush1.bf16.msra.mxu0 %v2603
  %3186 = vmatprep.subr.bf16.mxu0 0
  %3187 = vmatpush1.bf16.msra.mxu0 %v2604
  %3188 = vmatprep.subr.bf16.mxu0 0
  %3189 = vmatpush1.bf16.msra.mxu0 %v2605
  %3190 = vmatprep.subr.bf16.mxu0 0
  %3191 = vmatpush1.bf16.msra.mxu0 0
  %3192 = vmatprep.subr.bf16.mxu0 0
  %3193 = vmatpush1.bf16.msra.mxu0 0
  %3194 = vmatprep.subr.bf16.mxu0 0
  %3195 = vmatpush1.bf16.msra.mxu0 0
  %3196 = vmatprep.subr.bf16.mxu0 0
  %3197 = vmatpush1.bf16.msra.mxu0 0
  %3198 = vmatprep.subr.bf16.mxu0 0
  %3199 = vmatpush1.bf16.msra.mxu0 0
  %3200 = vmatprep.subr.bf16.mxu0 0
  %3201 = vmatpush1.bf16.msra.mxu0 0
  %3202 = vmatprep.subr.bf16.mxu0 0
  %3203 = vmatpush1.bf16.msra.mxu0 0
  %3204 = vmatprep.subr.bf16.mxu0 0
  %3205 = vmatpush1.bf16.msra.mxu0 0
  %3206 = vmatprep.subr.bf16.mxu0 0
  %3207 = vmatpush1.bf16.msra.mxu0 0
  %3208 = vmatprep.subr.bf16.mxu0 0
  %3209 = vmatpush1.bf16.msra.mxu0 0
  %3210 = vmatprep.subr.bf16.mxu0 0
  %3211 = vmatpush1.bf16.msra.mxu0 0
  %3212 = vmatprep.subr.bf16.mxu0 0
  %3213 = vmatpush1.bf16.msra.mxu0 0
  %3214 = vmatprep.mubr.bf16.mxu0 0
  %3215 = vmatmul.mubr.bf16.gmra.mrb[0].mxu0 %v3180
  %v3216 = vpop.f32.mrb[0].mxu0
  %v3217 = vadd.f32 %v2584, %v3216
  %v3218 = vpop.f32.mrb[0].mxu0
  %v3219 = vpop.f32.mrb[0].mxu0
  %v3220 = vpop.f32.mrb[0].mxu0
  %3221 = vdwg.mxu0
  %v3222 = vxor.u32 %v3217, 2147483648
  %v3223 = vmul.f32 %v3222, 1.442695
  %v3224 = vpow.pop %v3223
  %v3225 = vadd.f32 %v3224, 1.0
  %v3226 = vrcp.pop %v3225
  %v3227 = vmul.f32 1.0, %v3226
  %3228 = vst [vmem:[%s18 + $0x58] sm:$0xff] %v3227
  %3230 = vrot.lane.b32.xlu0 %v3025, 64
  %v3231 = vpop.permute.xlu0 %3230
  %v3233 = vsel %vm248, %v3231, 0
  %3235 = vmatprep.subr.bf16.mxu0 0
  %3236 = vmatpush1.bf16.msra.mxu0 %v2602
  %3237 = vmatprep.subr.bf16.mxu0 0
  %3238 = vmatpush1.bf16.msra.mxu0 %v2603
  %3239 = vmatprep.subr.bf16.mxu0 0
  %3240 = vmatpush1.bf16.msra.mxu0 %v2604
  %3241 = vmatprep.subr.bf16.mxu0 0
  %3242 = vmatpush1.bf16.msra.mxu0 %v2605
  %3243 = vmatprep.subr.bf16.mxu0 0
  %3244 = vmatpush1.bf16.msra.mxu0 0
  %3245 = vmatprep.subr.bf16.mxu0 0
  %3246 = vmatpush1.bf16.msra.mxu0 0
  %3247 = vmatprep.subr.bf16.mxu0 0
  %3248 = vmatpush1.bf16.msra.mxu0 0
  %3249 = vmatprep.subr.bf16.mxu0 0
  %3250 = vmatpush1.bf16.msra.mxu0 0
  %3251 = vmatprep.subr.bf16.mxu0 0
  %3252 = vmatpush1.bf16.msra.mxu0 0
  %3253 = vmatprep.subr.bf16.mxu0 0
  %3254 = vmatpush1.bf16.msra.mxu0 0
  %3255 = vmatprep.subr.bf16.mxu0 0
  %3256 = vmatpush1.bf16.msra.mxu0 0
  %3257 = vmatprep.subr.bf16.mxu0 0
  %3258 = vmatpush1.bf16.msra.mxu0 0
  %3259 = vmatprep.subr.bf16.mxu0 0
  %3260 = vmatpush1.bf16.msra.mxu0 0
  %3261 = vmatprep.subr.bf16.mxu0 0
  %3262 = vmatpush1.bf16.msra.mxu0 0
  %3263 = vmatprep.subr.bf16.mxu0 0
  %3264 = vmatpush1.bf16.msra.mxu0 0
  %3265 = vmatprep.subr.bf16.mxu0 0
  %3266 = vmatpush1.bf16.msra.mxu0 0
  %3267 = vmatprep.mubr.bf16.mxu0 0
  %3268 = vmatmul.mubr.bf16.gmra.mrb[0].mxu0 %v3233
  %v3269 = vpop.f32.mrb[0].mxu0
  %v3270 = vadd.f32 %v2584, %v3269
  %v3271 = vpop.f32.mrb[0].mxu0
  %v3272 = vpop.f32.mrb[0].mxu0
  %v3273 = vpop.f32.mrb[0].mxu0
  %3274 = vdwg.mxu0
  %v3275 = vxor.u32 %v3270, 2147483648
  %v3276 = vmul.f32 %v3275, 1.442695
  %v3277 = vpow.pop %v3276
  %v3278 = vadd.f32 %v3277, 1.0
  %v3279 = vrcp.pop %v3278
  %v3280 = vmul.f32 1.0, %v3279
  %3281 = vst [vmem:[%s18 + $0x60] sm:$0xff] %v3280
  %3283 = vrot.lane.b32.xlu0 %v3076, 64
  %v3284 = vpop.permute.xlu0 %3283
  %v3286 = vsel %vm248, %v3284, 0
  %3288 = vmatprep.subr.bf16.mxu0 0
  %3289 = vmatpush1.bf16.msra.mxu0 %v2602
  %3290 = vmatprep.subr.bf16.mxu0 0
  %3291 = vmatpush1.bf16.msra.mxu0 %v2603
  %3292 = vmatprep.subr.bf16.mxu0 0
  %3293 = vmatpush1.bf16.msra.mxu0 %v2604
  %3294 = vmatprep.subr.bf16.mxu0 0
  %3295 = vmatpush1.bf16.msra.mxu0 %v2605
  %3296 = vmatprep.subr.bf16.mxu0 0
  %3297 = vmatpush1.bf16.msra.mxu0 0
  %3298 = vmatprep.subr.bf16.mxu0 0
  %3299 = vmatpush1.bf16.msra.mxu0 0
  %3300 = vmatprep.subr.bf16.mxu0 0
  %3301 = vmatpush1.bf16.msra.mxu0 0
  %3302 = vmatprep.subr.bf16.mxu0 0
  %3303 = vmatpush1.bf16.msra.mxu0 0
  %3304 = vmatprep.subr.bf16.mxu0 0
  %3305 = vmatpush1.bf16.msra.mxu0 0
  %3306 = vmatprep.subr.bf16.mxu0 0
  %3307 = vmatpush1.bf16.msra.mxu0 0
  %3308 = vmatprep.subr.bf16.mxu0 0
  %3309 = vmatpush1.bf16.msra.mxu0 0
  %3310 = vmatprep.subr.bf16.mxu0 0
  %3311 = vmatpush1.bf16.msra.mxu0 0
  %3312 = vmatprep.subr.bf16.mxu0 0
  %3313 = vmatpush1.bf16.msra.mxu0 0
  %3314 = vmatprep.subr.bf16.mxu0 0
  %3315 = vmatpush1.bf16.msra.mxu0 0
  %3316 = vmatprep.subr.bf16.mxu0 0
  %3317 = vmatpush1.bf16.msra.mxu0 0
  %3318 = vmatprep.subr.bf16.mxu0 0
  %3319 = vmatpush1.bf16.msra.mxu0 0
  %3320 = vmatprep.mubr.bf16.mxu0 0
  %3321 = vmatmul.mubr.bf16.gmra.mrb[0].mxu0 %v3286
  %v3322 = vpop.f32.mrb[0].mxu0
  %v3323 = vadd.f32 %v2584, %v3322
  %v3324 = vpop.f32.mrb[0].mxu0
  %v3325 = vpop.f32.mrb[0].mxu0
  %v3326 = vpop.f32.mrb[0].mxu0
  %3327 = vdwg.mxu0
  %v3328 = vxor.u32 %v3323, 2147483648
  %v3329 = vmul.f32 %v3328, 1.442695
  %v3330 = vpow.pop %v3329
  %v3331 = vadd.f32 %v3330, 1.0
  %v3332 = vrcp.pop %v3331
  %v3333 = vmul.f32 1.0, %v3332
  %3334 = vst [vmem:[%s18 + $0x68] sm:$0xff] %v3333
  %3336 = vrot.lane.b32.xlu0 %v3127, 64
  %v3337 = vpop.permute.xlu0 %3336
  %v3339 = vsel %vm248, %v3337, 0
  %3341 = vmatprep.subr.bf16.mxu0 0
  %3342 = vmatpush1.bf16.msra.mxu0 %v2602
  %3343 = vmatprep.subr.bf16.mxu0 0
  %3344 = vmatpush1.bf16.msra.mxu0 %v2603
  %3345 = vmatprep.subr.bf16.mxu0 0
  %3346 = vmatpush1.bf16.msra.mxu0 %v2604
  %3347 = vmatprep.subr.bf16.mxu0 0
  %3348 = vmatpush1.bf16.msra.mxu0 %v2605
  %3349 = vmatprep.subr.bf16.mxu0 0
  %3350 = vmatpush1.bf16.msra.mxu0 0
  %3351 = vmatprep.subr.bf16.mxu0 0
  %3352 = vmatpush1.bf16.msra.mxu0 0
  %3353 = vmatprep.subr.bf16.mxu0 0
  %3354 = vmatpush1.bf16.msra.mxu0 0
  %3355 = vmatprep.subr.bf16.mxu0 0
  %3356 = vmatpush1.bf16.msra.mxu0 0
  %3357 = vmatprep.subr.bf16.mxu0 0
  %3358 = vmatpush1.bf16.msra.mxu0 0
  %3359 = vmatprep.subr.bf16.mxu0 0
  %3360 = vmatpush1.bf16.msra.mxu0 0
  %3361 = vmatprep.subr.bf16.mxu0 0
  %3362 = vmatpush1.bf16.msra.mxu0 0
  %3363 = vmatprep.subr.bf16.mxu0 0
  %3364 = vmatpush1.bf16.msra.mxu0 0
  %3365 = vmatprep.subr.bf16.mxu0 0
  %3366 = vmatpush1.bf16.msra.mxu0 0
  %3367 = vmatprep.subr.bf16.mxu0 0
  %3368 = vmatpush1.bf16.msra.mxu0 0
  %3369 = vmatprep.subr.bf16.mxu0 0
  %3370 = vmatpush1.bf16.msra.mxu0 0
  %3371 = vmatprep.subr.bf16.mxu0 0
  %3372 = vmatpush1.bf16.msra.mxu0 0
  %3373 = vmatprep.mubr.bf16.mxu0 0
  %3374 = vmatmul.mubr.bf16.gmra.mrb[0].mxu0 %v3339
  %v3375 = vpop.f32.mrb[0].mxu0
  %v3376 = vadd.f32 %v2584, %v3375
  %v3377 = vpop.f32.mrb[0].mxu0
  %v3378 = vpop.f32.mrb[0].mxu0
  %v3379 = vpop.f32.mrb[0].mxu0
  %3380 = vdwg.mxu0
  %v3381 = vxor.u32 %v3376, 2147483648
  %v3382 = vmul.f32 %v3381, 1.442695
  %v3383 = vpow.pop %v3382
  %v3384 = vadd.f32 %v3383, 1.0
  %v3385 = vrcp.pop %v3384
  %v3386 = vmul.f32 1.0, %v3385
  %3387 = vst [vmem:[%s18 + $0x70] sm:$0xff] %v3386
  %3389 = vrot.lane.b32.xlu0 %v3178, 64
  %v3390 = vpop.permute.xlu0 %3389
  %v3392 = vsel %vm248, %v3390, 0
  %3394 = vmatprep.subr.bf16.mxu0 0
  %3395 = vmatpush1.bf16.msra.mxu0 %v2602
  %3396 = vmatprep.subr.bf16.mxu0 0
  %3397 = vmatpush1.bf16.msra.mxu0 %v2603
  %3398 = vmatprep.subr.bf16.mxu0 0
  %3399 = vmatpush1.bf16.msra.mxu0 %v2604
  %3400 = vmatprep.subr.bf16.mxu0 0
  %3401 = vmatpush1.bf16.msra.mxu0 %v2605
  %3402 = vmatprep.subr.bf16.mxu0 0
  %3403 = vmatpush1.bf16.msra.mxu0 0
  %3404 = vmatprep.subr.bf16.mxu0 0
  %3405 = vmatpush1.bf16.msra.mxu0 0
  %3406 = vmatprep.subr.bf16.mxu0 0
  %3407 = vmatpush1.bf16.msra.mxu0 0
  %3408 = vmatprep.subr.bf16.mxu0 0
  %3409 = vmatpush1.bf16.msra.mxu0 0
  %3410 = vmatprep.subr.bf16.mxu0 0
  %3411 = vmatpush1.bf16.msra.mxu0 0
  %3412 = vmatprep.subr.bf16.mxu0 0
  %3413 = vmatpush1.bf16.msra.mxu0 0
  %3414 = vmatprep.subr.bf16.mxu0 0
  %3415 = vmatpush1.bf16.msra.mxu0 0
  %3416 = vmatprep.subr.bf16.mxu0 0
  %3417 = vmatpush1.bf16.msra.mxu0 0
  %3418 = vmatprep.subr.bf16.mxu0 0
  %3419 = vmatpush1.bf16.msra.mxu0 0
  %3420 = vmatprep.subr.bf16.mxu0 0
  %3421 = vmatpush1.bf16.msra.mxu0 0
  %3422 = vmatprep.subr.bf16.mxu0 0
  %3423 = vmatpush1.bf16.msra.mxu0 0
  %3424 = vmatprep.subr.bf16.mxu0 0
  %3425 = vmatpush1.bf16.msra.mxu0 0
  %3426 = vmatprep.mubr.bf16.mxu0 0
  %3427 = vmatmul.mubr.bf16.gmra.mrb[0].mxu0 %v3392
  %v3428 = vpop.f32.mrb[0].mxu0
  %v3429 = vadd.f32 %v2584, %v3428
  %v3430 = vpop.f32.mrb[0].mxu0
  %v3431 = vpop.f32.mrb[0].mxu0
  %v3432 = vpop.f32.mrb[0].mxu0
  %3433 = vdwg.mxu0
  %v3434 = vxor.u32 %v3429, 2147483648
  %v3435 = vmul.f32 %v3434, 1.442695
  %v3436 = vpow.pop %v3435
  %v3437 = vadd.f32 %v3436, 1.0
  %v3438 = vrcp.pop %v3437
  %v3439 = vmul.f32 1.0, %v3438
  %3440 = vst [vmem:[%s18 + $0x78] sm:$0xff] %v3439
  // Predicated region
  $region74: #{large_generator_forward.1} parent=0 // pred_check
    _
  $region75: #{large_generator_forward.1} parent=0 // pred_check_branch
    %3442 = sbr.rel (0) target = $region77
  $region76: #{large_generator_forward.1} parent=0 // pred_region
    _
  $region77: #{large_generator_forward.1} parent=0 // pred_fallthru
    _
  // Predicated region
  $region78: #{large_generator_forward.1} parent=0 // pred_check
    _
  $region79: #{large_generator_forward.1} parent=0 // pred_check_branch
    %3444 = sbr.rel (0) target = $region81
  $region80: #{large_generator_forward.1} parent=0 // pred_region
    _
  $region81: #{large_generator_forward.1} parent=0 // pred_fallthru
    _

</llo_original>
